<compile_context>
chip_gen: v7x
topology: tpu7x:2x2x1
jax: 0.10.0
libtpu: 0.0.40
codegen_flags: <defaults>
</compile_context>

<pallas_src>
from collections import namedtuple

import numpy as np
import jax
import jax.numpy as jnp
from jax.experimental import pallas as pl
from jax.experimental.pallas import tpu as pltpu

Sample = namedtuple("Sample", "trajectories values chains")

# ----------------------------- small config -----------------------------
BATCH = 2
HORIZON = 8
OBS_DIM = 4
ACTION_DIM = 2
N_TIMESTEPS = 16
N_TASKS = 4
T_EMB = 8
TASK_EMB = 8
HIDDEN = 32
GUIDANCE = 1.6


# ----------------------------- beta schedule -----------------------------
def vp_beta_schedule(timesteps):
    t = np.arange(1, timesteps + 1, dtype=np.float64)
    T = timesteps
    b_max, b_min = 10.0, 0.1
    alpha = np.exp(-b_min / T - 0.5 * (b_max - b_min) * (2 * t - 1) / T ** 2)
    return (1.0 - alpha).astype(np.float32)


# ----------------------------- fused Pallas kernel -----------------------------
def _make_diffusion_kernel(n_timesteps, sr, srm1, c1, c2, sigp):
    """Build the fused reverse-diffusion kernel with the (numpy-derived) per-step
    schedule constants baked in as Python f32 immediates.

    sr[t]   : sqrt_recip_alphas_cumprod[t]
    srm1[t] : sqrt_recipm1_alphas_cumprod[t]
    c1[t]   : posterior_mean_coef1[t]
    c2[t]   : posterior_mean_coef2[t]
    sigp[t] : 0.5 * (t != 0) * exp(0.5 * posterior_log_variance_clipped[t])
    """
    T = int(n_timesteps)

    def kernel(g_ref, x0_ref, z_ref, hsc_ref, hsu_ref, w1x_ref, w2_ref, b2_ref,
               out_ref):
        """
        g_ref   : SMEM [1, 1]            guidance scale (only traced scalar)
        x0_ref  : VMEM [M, D]            x_T ~ N(0, I), M = B*H
        z_ref   : VMEM [T, M, D]         per-step Gaussian noise
        hsc_ref : VMEM [T, M, HIDDEN]    cond-branch hidden contrib  (+ time emb)
        hsu_ref : VMEM [T, M, HIDDEN]    uncond-branch hidden contrib (+ time emb)
        w1x_ref : VMEM [D, HIDDEN]       first-layer weights acting on x
        w2_ref  : VMEM [HIDDEN, D]       output-layer weights
        b2_ref  : VMEM [1, D]            output-layer bias
        out_ref : VMEM [M, D]            x_0
        """
        M, D = x0_ref.shape
        HID = w2_ref.shape[0]

        gs = g_ref[0, 0]
        w2 = w2_ref[...]
        b2 = jnp.broadcast_to(b2_ref[...], (M, D))
        # Hoisted, pre-broadcast first-layer rows: the K = D contraction runs on
        # the VPU instead of paying an MXU round-trip on the serial chain.
        w1x_rows = [jnp.broadcast_to(w1x_ref[k:k + 1, :], (M, HID)) for k in range(D)]

        x = x0_ref[...]
        for t in reversed(range(T)):        # fully unrolled; constants are static
            # ---- denoiser stand-in (2-layer MLP); shared x-dependent first layer
            hx = x[:, 0:1] * w1x_rows[0]
            for k in range(1, D):
                hx = hx + x[:, k:k + 1] * w1x_rows[k]
            h_c = jnp.maximum(hx + hsc_ref[t], 0.0)        # conditional branch
            h_u = jnp.maximum(hx + hsu_ref[t], 0.0)        # unconditional branch
            # CFG mix commuted through the affine head:
            #   eps_u + gs*(eps_c - eps_u) == (h_u + gs*(h_c - h_u)) @ w2 + b2
            h_mix = h_u + gs * (h_c - h_u)
            eps = jnp.dot(h_mix, w2, preferred_element_type=jnp.float32) + b2

            # ---- p_sample update (predict_epsilon=True, clip_denoised=True) ----
            x_recon = jnp.clip(sr[t] * x - srm1[t] * eps, -1.0, 1.0)
            x_new = c1[t] * x_recon + c2[t] * x
            if sigp[t] != 0.0:               # t == 0 step has no noise term
                x_new = x_new + sigp[t] * z_ref[t]
            x = x_new

        out_ref[...] = x

    return kernel


# ----------------------------- synthetic denoiser params -----------------------------
def time_embedding(t, dim):
    half = dim // 2
    freqs = jnp.exp(-jnp.log(10000.0) * jnp.arange(half, dtype=jnp.float32)
                    / max(half - 1, 1))
    args = t.astype(jnp.float32)[:, None] * freqs[None, :]
    return jnp.concatenate([jnp.sin(args), jnp.cos(args)], axis=-1)


def init_denoiser_params(key):
    # feature order consumed by w1: [x, cond, t_emb, task_emb, value]
    din = OBS_DIM + OBS_DIM + T_EMB + TASK_EMB + 1
    k1, k2, k3 = jax.random.split(key, 3)
    return {
        "task_emb": 0.1 * jax.random.normal(k1, (N_TASKS, TASK_EMB), jnp.float32),
        "w1": 0.1 * jax.random.normal(k2, (din, HIDDEN), jnp.float32),
        "b1": jnp.zeros((1, HIDDEN), jnp.float32),
        "w2": 0.1 * jax.random.normal(k3, (HIDDEN, OBS_DIM), jnp.float32),
        "b2": jnp.zeros((1, OBS_DIM), jnp.float32),
    }


# ----------------------------- diffusion wrapper -----------------------------
class GaussianInvDiffusionPallas:
    def __init__(self, horizon, observation_dim, action_dim, n_timesteps,
                 clip_denoised=True, predict_epsilon=True):
        assert clip_denoised and predict_epsilon, "only the reference default path"
        self.horizon = horizon
        self.observation_dim = observation_dim
        self.action_dim = action_dim
        self.transition_dim = observation_dim + 1
        self.n_timesteps = int(n_timesteps)

        betas = vp_beta_schedule(n_timesteps).astype(np.float64)
        alphas = 1.0 - betas
        ac = np.cumprod(alphas, axis=0)
        ac_prev = np.concatenate([np.ones(1), ac[:-1]])
        post_var = betas * (1.0 - ac_prev) / (1.0 - ac)
        post_logvar = np.log(np.clip(post_var, 1e-20, None))
        nzm = (np.arange(n_timesteps) != 0).astype(np.float64)

        # f32-rounded schedule constants, baked into the kernel as immediates
        as_list = lambda a: [float(v) for v in np.asarray(a, np.float32)]
        self._sr = as_list(np.sqrt(1.0 / ac))
        self._srm1 = as_list(np.sqrt(1.0 / ac - 1.0))
        self._c1 = as_list(betas * np.sqrt(ac_prev) / (1.0 - ac))
        self._c2 = as_list((1.0 - ac_prev) * np.sqrt(alphas) / (1.0 - ac))
        self._sigp = as_list(0.5 * nzm * np.exp(0.5 * post_logvar))

        self._kernel = _make_diffusion_kernel(
            self.n_timesteps, self._sr, self._srm1, self._c1, self._c2, self._sigp)
        self._sample_jit = jax.jit(self._sample)

    # ---- host-side (traced) precompute shared by kernel path and reference ----
    def _precompute(self, params, cond, task, value):
        H, D, T = self.horizon, self.observation_dim, self.n_timesteps
        w1 = params["w1"]
        w1x = w1[:D]                                       # acts on x
        w1c = w1[D:2 * D]                                  # acts on cond
        w1t = w1[2 * D:2 * D + T_EMB]                      # acts on time embedding
        w1g = w1[2 * D + T_EMB:2 * D + T_EMB + TASK_EMB]   # acts on task embedding
        w1v = w1[2 * D + T_EMB + TASK_EMB:]                # acts on value, [1, HIDDEN]

        base = cond @ w1c + value[:, None] * w1v + params["b1"]        # [B, HIDDEN]
        task_e = params["task_emb"][task]                              # [B, TASK_EMB]
        hstat_c = base + task_e @ w1g      # context_mask == 0 (conditional branch)
        hstat_u = base                     # context_mask == 1 (task embedding dropped)
        hsc = jnp.repeat(hstat_c, H, axis=0)                           # [B*H, HIDDEN]
        hsu = jnp.repeat(hstat_u, H, axis=0)                           # [B*H, HIDDEN]

        htime = time_embedding(jnp.arange(T, dtype=jnp.int32), T_EMB) @ w1t  # [T, HIDDEN]
        # fold time-embedding contribution into the per-step hidden slabs
        hsc_t = hsc[None, :, :] + htime[:, None, :]                    # [T, B*H, HIDDEN]
        hsu_t = hsu[None, :, :] + htime[:, None, :]
        return hsc_t, hsu_t, w1x, params["w2"], params["b2"]

    # ---- single gridless pallas_call (whole batch folded into M = B*H rows) ----
    def _sample(self, params, cond, task, value, guidance, x0, z):
        B = cond.shape[0]
        H, D, T = self.horizon, self.observation_dim, self.n_timesteps
        M = B * H
        hsc_t, hsu_t, w1x, w2, b2 = self._precompute(params, cond, task, value)

        g = jnp.reshape(guidance, (1, 1)).astype(jnp.float32)
        x0_2d = x0.reshape(M, D)
        z3 = jnp.transpose(z, (1, 0, 2, 3)).reshape(T, M, D)   # timestep-major

        vmem = pltpu.MemorySpace.VMEM
        x_final = pl.pallas_call(
            self._kernel,
            out_shape=jax.ShapeDtypeStruct((M, D), jnp.float32),
            in_specs=[
                pl.BlockSpec(memory_space=pltpu.MemorySpace.SMEM),  # guidance scalar
                pl.BlockSpec(memory_space=vmem),                    # x_T        [M, D]
                pl.BlockSpec(memory_space=vmem),                    # noise      [T, M, D]
                pl.BlockSpec(memory_space=vmem),                    # hsc_t      [T, M, HIDDEN]
                pl.BlockSpec(memory_space=vmem),                    # hsu_t      [T, M, HIDDEN]
                pl.BlockSpec(memory_space=vmem),                    # w1x        [D, HIDDEN]
                pl.BlockSpec(memory_space=vmem),                    # w2         [HIDDEN, D]
                pl.BlockSpec(memory_space=vmem),                    # b2         [1, D]
            ],
            out_specs=pl.BlockSpec(memory_space=vmem),
        )(g, x0_2d, z3, hsc_t, hsu_t, w1x, w2, b2)
        return x_final.reshape(B, H, D)

    # ---- pure-XLA twin of the kernel math, used only as a consistency check ----
    def _reference(self, params, cond, task, value, guidance, x0, z):
        B = cond.shape[0]
        H, D, T = self.horizon, self.observation_dim, self.n_timesteps
        M = B * H
        hsc_t, hsu_t, w1x, w2, b2 = self._precompute(params, cond, task, value)
        x = x0.reshape(M, D)
        for t in reversed(range(T)):
            hx = x @ w1x
            h_c = jnp.maximum(hx + hsc_t[t], 0.0)
            h_u = jnp.maximum(hx + hsu_t[t], 0.0)
            eps = (h_u + guidance * (h_c - h_u)) @ w2 + b2
            x_recon = jnp.clip(self._sr[t] * x - self._srm1[t] * eps, -1.0, 1.0)
            mean = self._c1[t] * x_recon + self._c2[t] * x
            x = mean + self._sigp[t] * z[:, t].reshape(M, D)
        return x.reshape(B, H, D)

    # equivalent of forward() -> conditional_sample() -> p_sample_loop()
    def forward(self, params, cond, task, value, guidance, key):
        B = cond.shape[0]
        H, D, T = self.horizon, self.observation_dim, self.n_timesteps
        kx, kz = jax.random.split(key)
        x0 = jax.random.normal(kx, (B, H, D), jnp.float32)     # x_T ~ N(0, I)
        z = jax.random.normal(kz, (B, T, H, D), jnp.float32)   # all loop noise, one draw
        x = self._sample_jit(params, cond, task, value,
                             jnp.float32(guidance), x0, z)
        values = jnp.zeros((B,), jnp.float32)                  # reference returns zeros
        return Sample(x, values, None)


# ----------------------------- main -----------------------------
if __name__ == "__main__":
    key = jax.random.PRNGKey(0)
    kp, kc, kv, ks = jax.random.split(key, 4)

    params = init_denoiser_params(kp)
    diffusion = GaussianInvDiffusionPallas(
        horizon=HORIZON, observation_dim=OBS_DIM, action_dim=ACTION_DIM,
        n_timesteps=N_TIMESTEPS)

    cond = jax.random.normal(kc, (BATCH, OBS_DIM), jnp.float32)   # conditioning state
    task = jnp.array([1, 3], dtype=jnp.int32)                     # task ids [B]
    value = jax.random.uniform(kv, (BATCH,), jnp.float32)         # returns [B]

    sample = diffusion.forward(params, cond, task, value, GUIDANCE, ks)
    traj = jax.block_until_ready(sample.trajectories)
    vals = jax.block_until_ready(sample.values)

    assert traj.shape == (BATCH, HORIZON, OBS_DIM)
    assert vals.shape == (BATCH,)
    assert bool(jnp.all(jnp.isfinite(traj)))

    # consistency check: fused Pallas kernel vs pure-XLA twin on identical inputs
    kx, kz = jax.random.split(ks)
    x0 = jax.random.normal(kx, (BATCH, HORIZON, OBS_DIM), jnp.float32)
    z = jax.random.normal(kz, (BATCH, N_TIMESTEPS, HORIZON, OBS_DIM), jnp.float32)
    got = diffusion._sample_jit(params, cond, task, value, jnp.float32(GUIDANCE), x0, z)
    ref = diffusion._reference(params, cond, task, value, jnp.float32(GUIDANCE), x0, z)
    got = jax.block_until_ready(got)
    assert bool(jnp.allclose(got, ref, atol=2e-3, rtol=2e-3)), \
        float(jnp.max(jnp.abs(got - ref)))

    print("KERNEL_OK")
</pallas_src>

<mosaic_0001>
module attributes {stable_mosaic.version = 11 : i64} {
  func.func @kernel(%arg0: memref<1x1xf32, #tpu.memory_space<smem>>, %arg1: memref<16x4xf32, #tpu.memory_space<vmem>>, %arg2: memref<16x16x4xf32, #tpu.memory_space<vmem>>, %arg3: memref<16x16x32xf32, #tpu.memory_space<vmem>>, %arg4: memref<16x16x32xf32, #tpu.memory_space<vmem>>, %arg5: memref<4x32xf32, #tpu.memory_space<vmem>>, %arg6: memref<32x4xf32, #tpu.memory_space<vmem>>, %arg7: memref<1x4xf32, #tpu.memory_space<vmem>>, %arg8: memref<16x4xf32, #tpu.memory_space<vmem>>) attributes {dimension_semantics = [], scalar_prefetch = 0 : i64, scratch_operands = 0 : i64, tpu.core_type = #tpu.core_type<tc>} {
    %c0 = arith.constant 0 : index
    %c0_0 = arith.constant 0 : index
    %0 = memref.load %arg0[%c0, %c0_0] : memref<1x1xf32, #tpu.memory_space<smem>>
    %c0_1 = arith.constant 0 : index
    %c0_2 = arith.constant 0 : index
    %1 = vector.load %arg6[%c0_1, %c0_2] : memref<32x4xf32, #tpu.memory_space<vmem>>, vector<32x4xf32>
    %c0_3 = arith.constant 0 : index
    %c0_4 = arith.constant 0 : index
    %2 = vector.load %arg7[%c0_3, %c0_4] : memref<1x4xf32, #tpu.memory_space<vmem>>, vector<1x4xf32>
    %3 = vector.shape_cast %2 : vector<1x4xf32> to vector<1x4xf32>
    %4 = vector.broadcast %3 : vector<1x4xf32> to vector<16x4xf32>
    %c0_5 = arith.constant 0 : index
    %c0_6 = arith.constant 0 : index
    %5 = vector.load %arg5[%c0_5, %c0_6] : memref<4x32xf32, #tpu.memory_space<vmem>>, vector<1x32xf32>
    %6 = vector.shape_cast %5 : vector<1x32xf32> to vector<1x32xf32>
    %7 = vector.broadcast %6 : vector<1x32xf32> to vector<16x32xf32>
    %c1 = arith.constant 1 : index
    %c0_7 = arith.constant 0 : index
    %8 = vector.load %arg5[%c1, %c0_7] : memref<4x32xf32, #tpu.memory_space<vmem>>, vector<1x32xf32>
    %9 = vector.shape_cast %8 : vector<1x32xf32> to vector<1x32xf32>
    %10 = vector.broadcast %9 : vector<1x32xf32> to vector<16x32xf32>
    %c2 = arith.constant 2 : index
    %c0_8 = arith.constant 0 : index
    %11 = vector.load %arg5[%c2, %c0_8] : memref<4x32xf32, #tpu.memory_space<vmem>>, vector<1x32xf32>
    %12 = vector.shape_cast %11 : vector<1x32xf32> to vector<1x32xf32>
    %13 = vector.broadcast %12 : vector<1x32xf32> to vector<16x32xf32>
    %c3 = arith.constant 3 : index
    %c0_9 = arith.constant 0 : index
    %14 = vector.load %arg5[%c3, %c0_9] : memref<4x32xf32, #tpu.memory_space<vmem>>, vector<1x32xf32>
    %15 = vector.shape_cast %14 : vector<1x32xf32> to vector<1x32xf32>
    %16 = vector.broadcast %15 : vector<1x32xf32> to vector<16x32xf32>
    %c0_10 = arith.constant 0 : index
    %c0_11 = arith.constant 0 : index
    %17 = vector.load %arg1[%c0_10, %c0_11] : memref<16x4xf32, #tpu.memory_space<vmem>>, vector<16x4xf32>
    %18 = vector.extract_strided_slice %17 {offsets = [0, 0], sizes = [16, 1], strides = [1, 1]} : vector<16x4xf32> to vector<16x1xf32>
    %19 = vector.broadcast %18 : vector<16x1xf32> to vector<16x32xf32>
    %20 = arith.mulf %19, %7 : vector<16x32xf32>
    %21 = vector.extract_strided_slice %17 {offsets = [0, 1], sizes = [16, 1], strides = [1, 1]} : vector<16x4xf32> to vector<16x1xf32>
    %22 = vector.broadcast %21 : vector<16x1xf32> to vector<16x32xf32>
    %23 = arith.mulf %22, %10 : vector<16x32xf32>
    %24 = arith.addf %20, %23 : vector<16x32xf32>
    %25 = vector.extract_strided_slice %17 {offsets = [0, 2], sizes = [16, 1], strides = [1, 1]} : vector<16x4xf32> to vector<16x1xf32>
    %26 = vector.broadcast %25 : vector<16x1xf32> to vector<16x32xf32>
    %27 = arith.mulf %26, %13 : vector<16x32xf32>
    %28 = arith.addf %24, %27 : vector<16x32xf32>
    %29 = vector.extract_strided_slice %17 {offsets = [0, 3], sizes = [16, 1], strides = [1, 1]} : vector<16x4xf32> to vector<16x1xf32>
    %30 = vector.broadcast %29 : vector<16x1xf32> to vector<16x32xf32>
    %31 = arith.mulf %30, %16 : vector<16x32xf32>
    %32 = arith.addf %28, %31 : vector<16x32xf32>
    %c15 = arith.constant 15 : index
    %c0_12 = arith.constant 0 : index
    %c0_13 = arith.constant 0 : index
    %33 = vector.load %arg3[%c15, %c0_12, %c0_13] : memref<16x16x32xf32, #tpu.memory_space<vmem>>, vector<1x16x32xf32>
    %34 = vector.shape_cast %33 : vector<1x16x32xf32> to vector<16x32xf32>
    %35 = arith.addf %32, %34 : vector<16x32xf32>
    %cst = arith.constant 0.000000e+00 : f32
    %36 = vector.broadcast %cst : f32 to vector<16x32xf32>
    %37 = arith.maximumf %35, %36 : vector<16x32xf32>
    %c15_14 = arith.constant 15 : index
    %c0_15 = arith.constant 0 : index
    %c0_16 = arith.constant 0 : index
    %38 = vector.load %arg4[%c15_14, %c0_15, %c0_16] : memref<16x16x32xf32, #tpu.memory_space<vmem>>, vector<1x16x32xf32>
    %39 = vector.shape_cast %38 : vector<1x16x32xf32> to vector<16x32xf32>
    %40 = arith.addf %32, %39 : vector<16x32xf32>
    %cst_17 = arith.constant 0.000000e+00 : f32
    %41 = vector.broadcast %cst_17 : f32 to vector<16x32xf32>
    %42 = arith.maximumf %40, %41 : vector<16x32xf32>
    %43 = arith.subf %37, %42 : vector<16x32xf32>
    %44 = vector.broadcast %0 : f32 to vector<16x32xf32>
    %45 = arith.mulf %44, %43 : vector<16x32xf32>
    %46 = arith.addf %42, %45 : vector<16x32xf32>
    %cst_18 = arith.constant dense<0.000000e+00> : vector<16x4xf32>
    %47 = tpu.matmul %46, %1, %cst_18 {dimension_numbers = #tpu.dot_dimension_numbers<[1], [0], [0], [1], [0, 0, 1, 1], [], []>} : vector<16x32xf32>, vector<32x4xf32>, vector<16x4xf32> -> vector<16x4xf32>
    %48 = arith.addf %47, %4 : vector<16x4xf32>
    %cst_19 = arith.constant 12.4908953 : f32
    %49 = vector.broadcast %cst_19 : f32 to vector<16x4xf32>
    %50 = arith.mulf %49, %17 : vector<16x4xf32>
    %cst_20 = arith.constant 12.4508018 : f32
    %51 = vector.broadcast %cst_20 : f32 to vector<16x4xf32>
    %52 = arith.mulf %51, %48 : vector<16x4xf32>
    %53 = arith.subf %50, %52 : vector<16x4xf32>
    %cst_21 = arith.constant -1.000000e+00 : f32
    %cst_22 = arith.constant 1.000000e+00 : f32
    %54 = vector.broadcast %cst_21 : f32 to vector<16x4xf32>
    %55 = arith.maximumf %54, %53 : vector<16x4xf32>
    %56 = vector.broadcast %cst_22 : f32 to vector<16x4xf32>
    %57 = arith.minimumf %56, %55 : vector<16x4xf32>
    %cst_23 = arith.constant 0.0495505594 : f32
    %58 = vector.broadcast %cst_23 : f32 to vector<16x4xf32>
    %59 = arith.mulf %58, %57 : vector<16x4xf32>
    %cst_24 = arith.constant 0.734756231 : f32
    %60 = vector.broadcast %cst_24 : f32 to vector<16x4xf32>
    %61 = arith.mulf %60, %17 : vector<16x4xf32>
    %62 = arith.addf %59, %61 : vector<16x4xf32>
    %c15_25 = arith.constant 15 : index
    %c0_26 = arith.constant 0 : index
    %c0_27 = arith.constant 0 : index
    %63 = vector.load %arg2[%c15_25, %c0_26, %c0_27] : memref<16x16x4xf32, #tpu.memory_space<vmem>>, vector<1x16x4xf32>
    %64 = vector.shape_cast %63 : vector<1x16x4xf32> to vector<16x4xf32>
    %cst_28 = arith.constant 0.336098403 : f32
    %65 = vector.broadcast %cst_28 : f32 to vector<16x4xf32>
    %66 = arith.mulf %65, %64 : vector<16x4xf32>
    %67 = arith.addf %62, %66 : vector<16x4xf32>
    %68 = vector.extract_strided_slice %67 {offsets = [0, 0], sizes = [16, 1], strides = [1, 1]} : vector<16x4xf32> to vector<16x1xf32>
    %69 = vector.broadcast %68 : vector<16x1xf32> to vector<16x32xf32>
    %70 = arith.mulf %69, %7 : vector<16x32xf32>
    %71 = vector.extract_strided_slice %67 {offsets = [0, 1], sizes = [16, 1], strides = [1, 1]} : vector<16x4xf32> to vector<16x1xf32>
    %72 = vector.broadcast %71 : vector<16x1xf32> to vector<16x32xf32>
    %73 = arith.mulf %72, %10 : vector<16x32xf32>
    %74 = arith.addf %70, %73 : vector<16x32xf32>
    %75 = vector.extract_strided_slice %67 {offsets = [0, 2], sizes = [16, 1], strides = [1, 1]} : vector<16x4xf32> to vector<16x1xf32>
    %76 = vector.broadcast %75 : vector<16x1xf32> to vector<16x32xf32>
    %77 = arith.mulf %76, %13 : vector<16x32xf32>
    %78 = arith.addf %74, %77 : vector<16x32xf32>
    %79 = vector.extract_strided_slice %67 {offsets = [0, 3], sizes = [16, 1], strides = [1, 1]} : vector<16x4xf32> to vector<16x1xf32>
    %80 = vector.broadcast %79 : vector<16x1xf32> to vector<16x32xf32>
    %81 = arith.mulf %80, %16 : vector<16x32xf32>
    %82 = arith.addf %78, %81 : vector<16x32xf32>
    %c14 = arith.constant 14 : index
    %c0_29 = arith.constant 0 : index
    %c0_30 = arith.constant 0 : index
    %83 = vector.load %arg3[%c14, %c0_29, %c0_30] : memref<16x16x32xf32, #tpu.memory_space<vmem>>, vector<1x16x32xf32>
    %84 = vector.shape_cast %83 : vector<1x16x32xf32> to vector<16x32xf32>
    %85 = arith.addf %82, %84 : vector<16x32xf32>
    %cst_31 = arith.constant 0.000000e+00 : f32
    %86 = vector.broadcast %cst_31 : f32 to vector<16x32xf32>
    %87 = arith.maximumf %85, %86 : vector<16x32xf32>
    %c14_32 = arith.constant 14 : index
    %c0_33 = arith.constant 0 : index
    %c0_34 = arith.constant 0 : index
    %88 = vector.load %arg4[%c14_32, %c0_33, %c0_34] : memref<16x16x32xf32, #tpu.memory_space<vmem>>, vector<1x16x32xf32>
    %89 = vector.shape_cast %88 : vector<1x16x32xf32> to vector<16x32xf32>
    %90 = arith.addf %82, %89 : vector<16x32xf32>
    %cst_35 = arith.constant 0.000000e+00 : f32
    %91 = vector.broadcast %cst_35 : f32 to vector<16x32xf32>
    %92 = arith.maximumf %90, %91 : vector<16x32xf32>
    %93 = arith.subf %87, %92 : vector<16x32xf32>
    %94 = vector.broadcast %0 : f32 to vector<16x32xf32>
    %95 = arith.mulf %94, %93 : vector<16x32xf32>
    %96 = arith.addf %92, %95 : vector<16x32xf32>
    %cst_36 = arith.constant dense<0.000000e+00> : vector<16x4xf32>
    %97 = tpu.matmul %96, %1, %cst_36 {dimension_numbers = #tpu.dot_dimension_numbers<[1], [0], [0], [1], [0, 0, 1, 1], [], []>} : vector<16x32xf32>, vector<32x4xf32>, vector<16x4xf32> -> vector<16x4xf32>
    %98 = arith.addf %97, %4 : vector<16x4xf32>
    %cst_37 = arith.constant 9.22731304 : f32
    %99 = vector.broadcast %cst_37 : f32 to vector<16x4xf32>
    %100 = arith.mulf %99, %67 : vector<16x4xf32>
    %cst_38 = arith.constant 9.17296695 : f32
    %101 = vector.broadcast %cst_38 : f32 to vector<16x4xf32>
    %102 = arith.mulf %101, %98 : vector<16x4xf32>
    %103 = arith.subf %100, %102 : vector<16x4xf32>
    %cst_39 = arith.constant -1.000000e+00 : f32
    %cst_40 = arith.constant 1.000000e+00 : f32
    %104 = vector.broadcast %cst_39 : f32 to vector<16x4xf32>
    %105 = arith.maximumf %104, %103 : vector<16x4xf32>
    %106 = vector.broadcast %cst_40 : f32 to vector<16x4xf32>
    %107 = arith.minimumf %106, %105 : vector<16x4xf32>
    %cst_41 = arith.constant 0.063013643 : f32
    %108 = vector.broadcast %cst_41 : f32 to vector<16x4xf32>
    %109 = arith.mulf %108, %107 : vector<16x4xf32>
    %cst_42 = arith.constant 7.463170e-01 : f32
    %110 = vector.broadcast %cst_42 : f32 to vector<16x4xf32>
    %111 = arith.mulf %110, %67 : vector<16x4xf32>
    %112 = arith.addf %109, %111 : vector<16x4xf32>
    %c14_43 = arith.constant 14 : index
    %c0_44 = arith.constant 0 : index
    %c0_45 = arith.constant 0 : index
    %113 = vector.load %arg2[%c14_43, %c0_44, %c0_45] : memref<16x16x4xf32, #tpu.memory_space<vmem>>, vector<1x16x4xf32>
    %114 = vector.shape_cast %113 : vector<1x16x4xf32> to vector<16x4xf32>
    %cst_46 = arith.constant 3.274320e-01 : f32
    %115 = vector.broadcast %cst_46 : f32 to vector<16x4xf32>
    %116 = arith.mulf %115, %114 : vector<16x4xf32>
    %117 = arith.addf %112, %116 : vector<16x4xf32>
    %118 = vector.extract_strided_slice %117 {offsets = [0, 0], sizes = [16, 1], strides = [1, 1]} : vector<16x4xf32> to vector<16x1xf32>
    %119 = vector.broadcast %118 : vector<16x1xf32> to vector<16x32xf32>
    %120 = arith.mulf %119, %7 : vector<16x32xf32>
    %121 = vector.extract_strided_slice %117 {offsets = [0, 1], sizes = [16, 1], strides = [1, 1]} : vector<16x4xf32> to vector<16x1xf32>
    %122 = vector.broadcast %121 : vector<16x1xf32> to vector<16x32xf32>
    %123 = arith.mulf %122, %10 : vector<16x32xf32>
    %124 = arith.addf %120, %123 : vector<16x32xf32>
    %125 = vector.extract_strided_slice %117 {offsets = [0, 2], sizes = [16, 1], strides = [1, 1]} : vector<16x4xf32> to vector<16x1xf32>
    %126 = vector.broadcast %125 : vector<16x1xf32> to vector<16x32xf32>
    %127 = arith.mulf %126, %13 : vector<16x32xf32>
    %128 = arith.addf %124, %127 : vector<16x32xf32>
    %129 = vector.extract_strided_slice %117 {offsets = [0, 3], sizes = [16, 1], strides = [1, 1]} : vector<16x4xf32> to vector<16x1xf32>
    %130 = vector.broadcast %129 : vector<16x1xf32> to vector<16x32xf32>
    %131 = arith.mulf %130, %16 : vector<16x32xf32>
    %132 = arith.addf %128, %131 : vector<16x32xf32>
    %c13 = arith.constant 13 : index
    %c0_47 = arith.constant 0 : index
    %c0_48 = arith.constant 0 : index
    %133 = vector.load %arg3[%c13, %c0_47, %c0_48] : memref<16x16x32xf32, #tpu.memory_space<vmem>>, vector<1x16x32xf32>
    %134 = vector.shape_cast %133 : vector<1x16x32xf32> to vector<16x32xf32>
    %135 = arith.addf %132, %134 : vector<16x32xf32>
    %cst_49 = arith.constant 0.000000e+00 : f32
    %136 = vector.broadcast %cst_49 : f32 to vector<16x32xf32>
    %137 = arith.maximumf %135, %136 : vector<16x32xf32>
    %c13_50 = arith.constant 13 : index
    %c0_51 = arith.constant 0 : index
    %c0_52 = arith.constant 0 : index
    %138 = vector.load %arg4[%c13_50, %c0_51, %c0_52] : memref<16x16x32xf32, #tpu.memory_space<vmem>>, vector<1x16x32xf32>
    %139 = vector.shape_cast %138 : vector<1x16x32xf32> to vector<16x32xf32>
    %140 = arith.addf %132, %139 : vector<16x32xf32>
    %cst_53 = arith.constant 0.000000e+00 : f32
    %141 = vector.broadcast %cst_53 : f32 to vector<16x32xf32>
    %142 = arith.maximumf %140, %141 : vector<16x32xf32>
    %143 = arith.subf %137, %142 : vector<16x32xf32>
    %144 = vector.broadcast %0 : f32 to vector<16x32xf32>
    %145 = arith.mulf %144, %143 : vector<16x32xf32>
    %146 = arith.addf %142, %145 : vector<16x32xf32>
    %cst_54 = arith.constant dense<0.000000e+00> : vector<16x4xf32>
    %147 = tpu.matmul %146, %1, %cst_54 {dimension_numbers = #tpu.dot_dimension_numbers<[1], [0], [0], [1], [0, 0, 1, 1], [], []>} : vector<16x32xf32>, vector<32x4xf32>, vector<16x4xf32> -> vector<16x4xf32>
    %148 = arith.addf %147, %4 : vector<16x4xf32>
    %cst_55 = arith.constant 6.94951487 : f32
    %149 = vector.broadcast %cst_55 : f32 to vector<16x4xf32>
    %150 = arith.mulf %149, %117 : vector<16x4xf32>
    %cst_56 = arith.constant 6.87719107 : f32
    %151 = vector.broadcast %cst_56 : f32 to vector<16x4xf32>
    %152 = arith.mulf %151, %148 : vector<16x4xf32>
    %153 = arith.subf %150, %152 : vector<16x4xf32>
    %cst_57 = arith.constant -1.000000e+00 : f32
    %cst_58 = arith.constant 1.000000e+00 : f32
    %154 = vector.broadcast %cst_57 : f32 to vector<16x4xf32>
    %155 = arith.maximumf %154, %153 : vector<16x4xf32>
    %156 = vector.broadcast %cst_58 : f32 to vector<16x4xf32>
    %157 = arith.minimumf %156, %155 : vector<16x4xf32>
    %cst_59 = arith.constant 0.0785360038 : f32
    %158 = vector.broadcast %cst_59 : f32 to vector<16x4xf32>
    %159 = arith.mulf %158, %157 : vector<16x4xf32>
    %cst_60 = arith.constant 0.756549656 : f32
    %160 = vector.broadcast %cst_60 : f32 to vector<16x4xf32>
    %161 = arith.mulf %160, %117 : vector<16x4xf32>
    %162 = arith.addf %159, %161 : vector<16x4xf32>
    %c13_61 = arith.constant 13 : index
    %c0_62 = arith.constant 0 : index
    %c0_63 = arith.constant 0 : index
    %163 = vector.load %arg2[%c13_61, %c0_62, %c0_63] : memref<16x16x4xf32, #tpu.memory_space<vmem>>, vector<1x16x4xf32>
    %164 = vector.shape_cast %163 : vector<1x16x4xf32> to vector<16x4xf32>
    %cst_64 = arith.constant 0.317948639 : f32
    %165 = vector.broadcast %cst_64 : f32 to vector<16x4xf32>
    %166 = arith.mulf %165, %164 : vector<16x4xf32>
    %167 = arith.addf %162, %166 : vector<16x4xf32>
    %168 = vector.extract_strided_slice %167 {offsets = [0, 0], sizes = [16, 1], strides = [1, 1]} : vector<16x4xf32> to vector<16x1xf32>
    %169 = vector.broadcast %168 : vector<16x1xf32> to vector<16x32xf32>
    %170 = arith.mulf %169, %7 : vector<16x32xf32>
    %171 = vector.extract_strided_slice %167 {offsets = [0, 1], sizes = [16, 1], strides = [1, 1]} : vector<16x4xf32> to vector<16x1xf32>
    %172 = vector.broadcast %171 : vector<16x1xf32> to vector<16x32xf32>
    %173 = arith.mulf %172, %10 : vector<16x32xf32>
    %174 = arith.addf %170, %173 : vector<16x32xf32>
    %175 = vector.extract_strided_slice %167 {offsets = [0, 2], sizes = [16, 1], strides = [1, 1]} : vector<16x4xf32> to vector<16x1xf32>
    %176 = vector.broadcast %175 : vector<16x1xf32> to vector<16x32xf32>
    %177 = arith.mulf %176, %13 : vector<16x32xf32>
    %178 = arith.addf %174, %177 : vector<16x32xf32>
    %179 = vector.extract_strided_slice %167 {offsets = [0, 3], sizes = [16, 1], strides = [1, 1]} : vector<16x4xf32> to vector<16x1xf32>
    %180 = vector.broadcast %179 : vector<16x1xf32> to vector<16x32xf32>
    %181 = arith.mulf %180, %16 : vector<16x32xf32>
    %182 = arith.addf %178, %181 : vector<16x32xf32>
    %c12 = arith.constant 12 : index
    %c0_65 = arith.constant 0 : index
    %c0_66 = arith.constant 0 : index
    %183 = vector.load %arg3[%c12, %c0_65, %c0_66] : memref<16x16x32xf32, #tpu.memory_space<vmem>>, vector<1x16x32xf32>
    %184 = vector.shape_cast %183 : vector<1x16x32xf32> to vector<16x32xf32>
    %185 = arith.addf %182, %184 : vector<16x32xf32>
    %cst_67 = arith.constant 0.000000e+00 : f32
    %186 = vector.broadcast %cst_67 : f32 to vector<16x32xf32>
    %187 = arith.maximumf %185, %186 : vector<16x32xf32>
    %c12_68 = arith.constant 12 : index
    %c0_69 = arith.constant 0 : index
    %c0_70 = arith.constant 0 : index
    %188 = vector.load %arg4[%c12_68, %c0_69, %c0_70] : memref<16x16x32xf32, #tpu.memory_space<vmem>>, vector<1x16x32xf32>
    %189 = vector.shape_cast %188 : vector<1x16x32xf32> to vector<16x32xf32>
    %190 = arith.addf %182, %189 : vector<16x32xf32>
    %cst_71 = arith.constant 0.000000e+00 : f32
    %191 = vector.broadcast %cst_71 : f32 to vector<16x32xf32>
    %192 = arith.maximumf %190, %191 : vector<16x32xf32>
    %193 = arith.subf %187, %192 : vector<16x32xf32>
    %194 = vector.broadcast %0 : f32 to vector<16x32xf32>
    %195 = arith.mulf %194, %193 : vector<16x32xf32>
    %196 = arith.addf %192, %195 : vector<16x32xf32>
    %cst_72 = arith.constant dense<0.000000e+00> : vector<16x4xf32>
    %197 = tpu.matmul %196, %1, %cst_72 {dimension_numbers = #tpu.dot_dimension_numbers<[1], [0], [0], [1], [0, 0, 1, 1], [], []>} : vector<16x32xf32>, vector<32x4xf32>, vector<16x4xf32> -> vector<16x4xf32>
    %198 = arith.addf %197, %4 : vector<16x4xf32>
    %cst_73 = arith.constant 5.33618879 : f32
    %199 = vector.broadcast %cst_73 : f32 to vector<16x4xf32>
    %200 = arith.mulf %199, %167 : vector<16x4xf32>
    %cst_74 = arith.constant 5.24165154 : f32
    %201 = vector.broadcast %cst_74 : f32 to vector<16x4xf32>
    %202 = arith.mulf %201, %198 : vector<16x4xf32>
    %203 = arith.subf %200, %202 : vector<16x4xf32>
    %cst_75 = arith.constant -1.000000e+00 : f32
    %cst_76 = arith.constant 1.000000e+00 : f32
    %204 = vector.broadcast %cst_75 : f32 to vector<16x4xf32>
    %205 = arith.maximumf %204, %203 : vector<16x4xf32>
    %206 = vector.broadcast %cst_76 : f32 to vector<16x4xf32>
    %207 = arith.minimumf %206, %205 : vector<16x4xf32>
    %cst_77 = arith.constant 9.605260e-02 : f32
    %208 = vector.broadcast %cst_77 : f32 to vector<16x4xf32>
    %209 = arith.mulf %208, %207 : vector<16x4xf32>
    %cst_78 = arith.constant 0.764841914 : f32
    %210 = vector.broadcast %cst_78 : f32 to vector<16x4xf32>
    %211 = arith.mulf %210, %167 : vector<16x4xf32>
    %212 = arith.addf %209, %211 : vector<16x4xf32>
    %c12_79 = arith.constant 12 : index
    %c0_80 = arith.constant 0 : index
    %c0_81 = arith.constant 0 : index
    %213 = vector.load %arg2[%c12_79, %c0_80, %c0_81] : memref<16x16x4xf32, #tpu.memory_space<vmem>>, vector<1x16x4xf32>
    %214 = vector.shape_cast %213 : vector<1x16x4xf32> to vector<16x4xf32>
    %cst_82 = arith.constant 0.307512641 : f32
    %215 = vector.broadcast %cst_82 : f32 to vector<16x4xf32>
    %216 = arith.mulf %215, %214 : vector<16x4xf32>
    %217 = arith.addf %212, %216 : vector<16x4xf32>
    %218 = vector.extract_strided_slice %217 {offsets = [0, 0], sizes = [16, 1], strides = [1, 1]} : vector<16x4xf32> to vector<16x1xf32>
    %219 = vector.broadcast %218 : vector<16x1xf32> to vector<16x32xf32>
    %220 = arith.mulf %219, %7 : vector<16x32xf32>
    %221 = vector.extract_strided_slice %217 {offsets = [0, 1], sizes = [16, 1], strides = [1, 1]} : vector<16x4xf32> to vector<16x1xf32>
    %222 = vector.broadcast %221 : vector<16x1xf32> to vector<16x32xf32>
    %223 = arith.mulf %222, %10 : vector<16x32xf32>
    %224 = arith.addf %220, %223 : vector<16x32xf32>
    %225 = vector.extract_strided_slice %217 {offsets = [0, 2], sizes = [16, 1], strides = [1, 1]} : vector<16x4xf32> to vector<16x1xf32>
    %226 = vector.broadcast %225 : vector<16x1xf32> to vector<16x32xf32>
    %227 = arith.mulf %226, %13 : vector<16x32xf32>
    %228 = arith.addf %224, %227 : vector<16x32xf32>
    %229 = vector.extract_strided_slice %217 {offsets = [0, 3], sizes = [16, 1], strides = [1, 1]} : vector<16x4xf32> to vector<16x1xf32>
    %230 = vector.broadcast %229 : vector<16x1xf32> to vector<16x32xf32>
    %231 = arith.mulf %230, %16 : vector<16x32xf32>
    %232 = arith.addf %228, %231 : vector<16x32xf32>
    %c11 = arith.constant 11 : index
    %c0_83 = arith.constant 0 : index
    %c0_84 = arith.constant 0 : index
    %233 = vector.load %arg3[%c11, %c0_83, %c0_84] : memref<16x16x32xf32, #tpu.memory_space<vmem>>, vector<1x16x32xf32>
    %234 = vector.shape_cast %233 : vector<1x16x32xf32> to vector<16x32xf32>
    %235 = arith.addf %232, %234 : vector<16x32xf32>
    %cst_85 = arith.constant 0.000000e+00 : f32
    %236 = vector.broadcast %cst_85 : f32 to vector<16x32xf32>
    %237 = arith.maximumf %235, %236 : vector<16x32xf32>
    %c11_86 = arith.constant 11 : index
    %c0_87 = arith.constant 0 : index
    %c0_88 = arith.constant 0 : index
    %238 = vector.load %arg4[%c11_86, %c0_87, %c0_88] : memref<16x16x32xf32, #tpu.memory_space<vmem>>, vector<1x16x32xf32>
    %239 = vector.shape_cast %238 : vector<1x16x32xf32> to vector<16x32xf32>
    %240 = arith.addf %232, %239 : vector<16x32xf32>
    %cst_89 = arith.constant 0.000000e+00 : f32
    %241 = vector.broadcast %cst_89 : f32 to vector<16x32xf32>
    %242 = arith.maximumf %240, %241 : vector<16x32xf32>
    %243 = arith.subf %237, %242 : vector<16x32xf32>
    %244 = vector.broadcast %0 : f32 to vector<16x32xf32>
    %245 = arith.mulf %244, %243 : vector<16x32xf32>
    %246 = arith.addf %242, %245 : vector<16x32xf32>
    %cst_90 = arith.constant dense<0.000000e+00> : vector<16x4xf32>
    %247 = tpu.matmul %246, %1, %cst_90 {dimension_numbers = #tpu.dot_dimension_numbers<[1], [0], [0], [1], [0, 0, 1, 1], [], []>} : vector<16x32xf32>, vector<32x4xf32>, vector<16x4xf32> -> vector<16x4xf32>
    %248 = arith.addf %247, %4 : vector<16x4xf32>
    %cst_91 = arith.constant 4.17739344 : f32
    %249 = vector.broadcast %cst_91 : f32 to vector<16x4xf32>
    %250 = arith.mulf %249, %217 : vector<16x4xf32>
    %cst_92 = arith.constant 4.05593586 : f32
    %251 = vector.broadcast %cst_92 : f32 to vector<16x4xf32>
    %252 = arith.mulf %251, %248 : vector<16x4xf32>
    %253 = arith.subf %250, %252 : vector<16x4xf32>
    %cst_93 = arith.constant -1.000000e+00 : f32
    %cst_94 = arith.constant 1.000000e+00 : f32
    %254 = vector.broadcast %cst_93 : f32 to vector<16x4xf32>
    %255 = arith.maximumf %254, %253 : vector<16x4xf32>
    %256 = vector.broadcast %cst_94 : f32 to vector<16x4xf32>
    %257 = arith.minimumf %256, %255 : vector<16x4xf32>
    %cst_95 = arith.constant 0.115491822 : f32
    %258 = vector.broadcast %cst_95 : f32 to vector<16x4xf32>
    %259 = arith.mulf %258, %257 : vector<16x4xf32>
    %cst_96 = arith.constant 0.770479559 : f32
    %260 = vector.broadcast %cst_96 : f32 to vector<16x4xf32>
    %261 = arith.mulf %260, %217 : vector<16x4xf32>
    %262 = arith.addf %259, %261 : vector<16x4xf32>
    %c11_97 = arith.constant 11 : index
    %c0_98 = arith.constant 0 : index
    %c0_99 = arith.constant 0 : index
    %263 = vector.load %arg2[%c11_97, %c0_98, %c0_99] : memref<16x16x4xf32, #tpu.memory_space<vmem>>, vector<1x16x4xf32>
    %264 = vector.shape_cast %263 : vector<1x16x4xf32> to vector<16x4xf32>
    %cst_100 = arith.constant 0.295981497 : f32
    %265 = vector.broadcast %cst_100 : f32 to vector<16x4xf32>
    %266 = arith.mulf %265, %264 : vector<16x4xf32>
    %267 = arith.addf %262, %266 : vector<16x4xf32>
    %268 = vector.extract_strided_slice %267 {offsets = [0, 0], sizes = [16, 1], strides = [1, 1]} : vector<16x4xf32> to vector<16x1xf32>
    %269 = vector.broadcast %268 : vector<16x1xf32> to vector<16x32xf32>
    %270 = arith.mulf %269, %7 : vector<16x32xf32>
    %271 = vector.extract_strided_slice %267 {offsets = [0, 1], sizes = [16, 1], strides = [1, 1]} : vector<16x4xf32> to vector<16x1xf32>
    %272 = vector.broadcast %271 : vector<16x1xf32> to vector<16x32xf32>
    %273 = arith.mulf %272, %10 : vector<16x32xf32>
    %274 = arith.addf %270, %273 : vector<16x32xf32>
    %275 = vector.extract_strided_slice %267 {offsets = [0, 2], sizes = [16, 1], strides = [1, 1]} : vector<16x4xf32> to vector<16x1xf32>
    %276 = vector.broadcast %275 : vector<16x1xf32> to vector<16x32xf32>
    %277 = arith.mulf %276, %13 : vector<16x32xf32>
    %278 = arith.addf %274, %277 : vector<16x32xf32>
    %279 = vector.extract_strided_slice %267 {offsets = [0, 3], sizes = [16, 1], strides = [1, 1]} : vector<16x4xf32> to vector<16x1xf32>
    %280 = vector.broadcast %279 : vector<16x1xf32> to vector<16x32xf32>
    %281 = arith.mulf %280, %16 : vector<16x32xf32>
    %282 = arith.addf %278, %281 : vector<16x32xf32>
    %c10 = arith.constant 10 : index
    %c0_101 = arith.constant 0 : index
    %c0_102 = arith.constant 0 : index
    %283 = vector.load %arg3[%c10, %c0_101, %c0_102] : memref<16x16x32xf32, #tpu.memory_space<vmem>>, vector<1x16x32xf32>
    %284 = vector.shape_cast %283 : vector<1x16x32xf32> to vector<16x32xf32>
    %285 = arith.addf %282, %284 : vector<16x32xf32>
    %cst_103 = arith.constant 0.000000e+00 : f32
    %286 = vector.broadcast %cst_103 : f32 to vector<16x32xf32>
    %287 = arith.maximumf %285, %286 : vector<16x32xf32>
    %c10_104 = arith.constant 10 : index
    %c0_105 = arith.constant 0 : index
    %c0_106 = arith.constant 0 : index
    %288 = vector.load %arg4[%c10_104, %c0_105, %c0_106] : memref<16x16x32xf32, #tpu.memory_space<vmem>>, vector<1x16x32xf32>
    %289 = vector.shape_cast %288 : vector<1x16x32xf32> to vector<16x32xf32>
    %290 = arith.addf %282, %289 : vector<16x32xf32>
    %cst_107 = arith.constant 0.000000e+00 : f32
    %291 = vector.broadcast %cst_107 : f32 to vector<16x32xf32>
    %292 = arith.maximumf %290, %291 : vector<16x32xf32>
    %293 = arith.subf %287, %292 : vector<16x32xf32>
    %294 = vector.broadcast %0 : f32 to vector<16x32xf32>
    %295 = arith.mulf %294, %293 : vector<16x32xf32>
    %296 = arith.addf %292, %295 : vector<16x32xf32>
    %cst_108 = arith.constant dense<0.000000e+00> : vector<16x4xf32>
    %297 = tpu.matmul %296, %1, %cst_108 {dimension_numbers = #tpu.dot_dimension_numbers<[1], [0], [0], [1], [0, 0, 1, 1], [], []>} : vector<16x32xf32>, vector<32x4xf32>, vector<16x4xf32> -> vector<16x4xf32>
    %298 = arith.addf %297, %4 : vector<16x4xf32>
    %cst_109 = arith.constant 3.33408809 : f32
    %299 = vector.broadcast %cst_109 : f32 to vector<16x4xf32>
    %300 = arith.mulf %299, %267 : vector<16x4xf32>
    %cst_110 = arith.constant 3.18058848 : f32
    %301 = vector.broadcast %cst_110 : f32 to vector<16x4xf32>
    %302 = arith.mulf %301, %298 : vector<16x4xf32>
    %303 = arith.subf %300, %302 : vector<16x4xf32>
    %cst_111 = arith.constant -1.000000e+00 : f32
    %cst_112 = arith.constant 1.000000e+00 : f32
    %304 = vector.broadcast %cst_111 : f32 to vector<16x4xf32>
    %305 = arith.maximumf %304, %303 : vector<16x4xf32>
    %306 = vector.broadcast %cst_112 : f32 to vector<16x4xf32>
    %307 = arith.minimumf %306, %305 : vector<16x4xf32>
    %cst_113 = arith.constant 0.136852324 : f32
    %308 = vector.broadcast %cst_113 : f32 to vector<16x4xf32>
    %309 = arith.mulf %308, %307 : vector<16x4xf32>
    %cst_114 = arith.constant 0.772662699 : f32
    %310 = vector.broadcast %cst_114 : f32 to vector<16x4xf32>
    %311 = arith.mulf %310, %267 : vector<16x4xf32>
    %312 = arith.addf %309, %311 : vector<16x4xf32>
    %c10_115 = arith.constant 10 : index
    %c0_116 = arith.constant 0 : index
    %c0_117 = arith.constant 0 : index
    %313 = vector.load %arg2[%c10_115, %c0_116, %c0_117] : memref<16x16x4xf32, #tpu.memory_space<vmem>>, vector<1x16x4xf32>
    %314 = vector.shape_cast %313 : vector<1x16x4xf32> to vector<16x4xf32>
    %cst_118 = arith.constant 0.283210933 : f32
    %315 = vector.broadcast %cst_118 : f32 to vector<16x4xf32>
    %316 = arith.mulf %315, %314 : vector<16x4xf32>
    %317 = arith.addf %312, %316 : vector<16x4xf32>
    %318 = vector.extract_strided_slice %317 {offsets = [0, 0], sizes = [16, 1], strides = [1, 1]} : vector<16x4xf32> to vector<16x1xf32>
    %319 = vector.broadcast %318 : vector<16x1xf32> to vector<16x32xf32>
    %320 = arith.mulf %319, %7 : vector<16x32xf32>
    %321 = vector.extract_strided_slice %317 {offsets = [0, 1], sizes = [16, 1], strides = [1, 1]} : vector<16x4xf32> to vector<16x1xf32>
    %322 = vector.broadcast %321 : vector<16x1xf32> to vector<16x32xf32>
    %323 = arith.mulf %322, %10 : vector<16x32xf32>
    %324 = arith.addf %320, %323 : vector<16x32xf32>
    %325 = vector.extract_strided_slice %317 {offsets = [0, 2], sizes = [16, 1], strides = [1, 1]} : vector<16x4xf32> to vector<16x1xf32>
    %326 = vector.broadcast %325 : vector<16x1xf32> to vector<16x32xf32>
    %327 = arith.mulf %326, %13 : vector<16x32xf32>
    %328 = arith.addf %324, %327 : vector<16x32xf32>
    %329 = vector.extract_strided_slice %317 {offsets = [0, 3], sizes = [16, 1], strides = [1, 1]} : vector<16x4xf32> to vector<16x1xf32>
    %330 = vector.broadcast %329 : vector<16x1xf32> to vector<16x32xf32>
    %331 = arith.mulf %330, %16 : vector<16x32xf32>
    %332 = arith.addf %328, %331 : vector<16x32xf32>
    %c9 = arith.constant 9 : index
    %c0_119 = arith.constant 0 : index
    %c0_120 = arith.constant 0 : index
    %333 = vector.load %arg3[%c9, %c0_119, %c0_120] : memref<16x16x32xf32, #tpu.memory_space<vmem>>, vector<1x16x32xf32>
    %334 = vector.shape_cast %333 : vector<1x16x32xf32> to vector<16x32xf32>
    %335 = arith.addf %332, %334 : vector<16x32xf32>
    %cst_121 = arith.constant 0.000000e+00 : f32
    %336 = vector.broadcast %cst_121 : f32 to vector<16x32xf32>
    %337 = arith.maximumf %335, %336 : vector<16x32xf32>
    %c9_122 = arith.constant 9 : index
    %c0_123 = arith.constant 0 : index
    %c0_124 = arith.constant 0 : index
    %338 = vector.load %arg4[%c9_122, %c0_123, %c0_124] : memref<16x16x32xf32, #tpu.memory_space<vmem>>, vector<1x16x32xf32>
    %339 = vector.shape_cast %338 : vector<1x16x32xf32> to vector<16x32xf32>
    %340 = arith.addf %332, %339 : vector<16x32xf32>
    %cst_125 = arith.constant 0.000000e+00 : f32
    %341 = vector.broadcast %cst_125 : f32 to vector<16x32xf32>
    %342 = arith.maximumf %340, %341 : vector<16x32xf32>
    %343 = arith.subf %337, %342 : vector<16x32xf32>
    %344 = vector.broadcast %0 : f32 to vector<16x32xf32>
    %345 = arith.mulf %344, %343 : vector<16x32xf32>
    %346 = arith.addf %342, %345 : vector<16x32xf32>
    %cst_126 = arith.constant dense<0.000000e+00> : vector<16x4xf32>
    %347 = tpu.matmul %346, %1, %cst_126 {dimension_numbers = #tpu.dot_dimension_numbers<[1], [0], [0], [1], [0, 0, 1, 1], [], []>} : vector<16x32xf32>, vector<32x4xf32>, vector<16x4xf32> -> vector<16x4xf32>
    %348 = arith.addf %347, %4 : vector<16x4xf32>
    %cst_127 = arith.constant 2.71297789 : f32
    %349 = vector.broadcast %cst_127 : f32 to vector<16x4xf32>
    %350 = arith.mulf %349, %317 : vector<16x4xf32>
    %cst_128 = arith.constant 2.52195334 : f32
    %351 = vector.broadcast %cst_128 : f32 to vector<16x4xf32>
    %352 = arith.mulf %351, %348 : vector<16x4xf32>
    %353 = arith.subf %350, %352 : vector<16x4xf32>
    %cst_129 = arith.constant -1.000000e+00 : f32
    %cst_130 = arith.constant 1.000000e+00 : f32
    %354 = vector.broadcast %cst_129 : f32 to vector<16x4xf32>
    %355 = arith.maximumf %354, %353 : vector<16x4xf32>
    %356 = vector.broadcast %cst_130 : f32 to vector<16x4xf32>
    %357 = arith.minimumf %356, %355 : vector<16x4xf32>
    %cst_131 = arith.constant 0.160302535 : f32
    %358 = vector.broadcast %cst_131 : f32 to vector<16x4xf32>
    %359 = arith.mulf %358, %357 : vector<16x4xf32>
    %cst_132 = arith.constant 0.770508706 : f32
    %360 = vector.broadcast %cst_132 : f32 to vector<16x4xf32>
    %361 = arith.mulf %360, %317 : vector<16x4xf32>
    %362 = arith.addf %359, %361 : vector<16x4xf32>
    %c9_133 = arith.constant 9 : index
    %c0_134 = arith.constant 0 : index
    %c0_135 = arith.constant 0 : index
    %363 = vector.load %arg2[%c9_133, %c0_134, %c0_135] : memref<16x16x4xf32, #tpu.memory_space<vmem>>, vector<1x16x4xf32>
    %364 = vector.shape_cast %363 : vector<1x16x4xf32> to vector<16x4xf32>
    %cst_136 = arith.constant 0.269056141 : f32
    %365 = vector.broadcast %cst_136 : f32 to vector<16x4xf32>
    %366 = arith.mulf %365, %364 : vector<16x4xf32>
    %367 = arith.addf %362, %366 : vector<16x4xf32>
    %368 = vector.extract_strided_slice %367 {offsets = [0, 0], sizes = [16, 1], strides = [1, 1]} : vector<16x4xf32> to vector<16x1xf32>
    %369 = vector.broadcast %368 : vector<16x1xf32> to vector<16x32xf32>
    %370 = arith.mulf %369, %7 : vector<16x32xf32>
    %371 = vector.extract_strided_slice %367 {offsets = [0, 1], sizes = [16, 1], strides = [1, 1]} : vector<16x4xf32> to vector<16x1xf32>
    %372 = vector.broadcast %371 : vector<16x1xf32> to vector<16x32xf32>
    %373 = arith.mulf %372, %10 : vector<16x32xf32>
    %374 = arith.addf %370, %373 : vector<16x32xf32>
    %375 = vector.extract_strided_slice %367 {offsets = [0, 2], sizes = [16, 1], strides = [1, 1]} : vector<16x4xf32> to vector<16x1xf32>
    %376 = vector.broadcast %375 : vector<16x1xf32> to vector<16x32xf32>
    %377 = arith.mulf %376, %13 : vector<16x32xf32>
    %378 = arith.addf %374, %377 : vector<16x32xf32>
    %379 = vector.extract_strided_slice %367 {offsets = [0, 3], sizes = [16, 1], strides = [1, 1]} : vector<16x4xf32> to vector<16x1xf32>
    %380 = vector.broadcast %379 : vector<16x1xf32> to vector<16x32xf32>
    %381 = arith.mulf %380, %16 : vector<16x32xf32>
    %382 = arith.addf %378, %381 : vector<16x32xf32>
    %c8 = arith.constant 8 : index
    %c0_137 = arith.constant 0 : index
    %c0_138 = arith.constant 0 : index
    %383 = vector.load %arg3[%c8, %c0_137, %c0_138] : memref<16x16x32xf32, #tpu.memory_space<vmem>>, vector<1x16x32xf32>
    %384 = vector.shape_cast %383 : vector<1x16x32xf32> to vector<16x32xf32>
    %385 = arith.addf %382, %384 : vector<16x32xf32>
    %cst_139 = arith.constant 0.000000e+00 : f32
    %386 = vector.broadcast %cst_139 : f32 to vector<16x32xf32>
    %387 = arith.maximumf %385, %386 : vector<16x32xf32>
    %c8_140 = arith.constant 8 : index
    %c0_141 = arith.constant 0 : index
    %c0_142 = arith.constant 0 : index
    %388 = vector.load %arg4[%c8_140, %c0_141, %c0_142] : memref<16x16x32xf32, #tpu.memory_space<vmem>>, vector<1x16x32xf32>
    %389 = vector.shape_cast %388 : vector<1x16x32xf32> to vector<16x32xf32>
    %390 = arith.addf %382, %389 : vector<16x32xf32>
    %cst_143 = arith.constant 0.000000e+00 : f32
    %391 = vector.broadcast %cst_143 : f32 to vector<16x32xf32>
    %392 = arith.maximumf %390, %391 : vector<16x32xf32>
    %393 = arith.subf %387, %392 : vector<16x32xf32>
    %394 = vector.broadcast %0 : f32 to vector<16x32xf32>
    %395 = arith.mulf %394, %393 : vector<16x32xf32>
    %396 = arith.addf %392, %395 : vector<16x32xf32>
    %cst_144 = arith.constant dense<0.000000e+00> : vector<16x4xf32>
    %397 = tpu.matmul %396, %1, %cst_144 {dimension_numbers = #tpu.dot_dimension_numbers<[1], [0], [0], [1], [0, 0, 1, 1], [], []>} : vector<16x32xf32>, vector<32x4xf32>, vector<16x4xf32> -> vector<16x4xf32>
    %398 = arith.addf %397, %4 : vector<16x4xf32>
    %cst_145 = arith.constant 2.25067568 : f32
    %399 = vector.broadcast %cst_145 : f32 to vector<16x4xf32>
    %400 = arith.mulf %399, %367 : vector<16x4xf32>
    %cst_146 = arith.constant 2.01631856 : f32
    %401 = vector.broadcast %cst_146 : f32 to vector<16x4xf32>
    %402 = arith.mulf %401, %398 : vector<16x4xf32>
    %403 = arith.subf %400, %402 : vector<16x4xf32>
    %cst_147 = arith.constant -1.000000e+00 : f32
    %cst_148 = arith.constant 1.000000e+00 : f32
    %404 = vector.broadcast %cst_147 : f32 to vector<16x4xf32>
    %405 = arith.maximumf %404, %403 : vector<16x4xf32>
    %406 = vector.broadcast %cst_148 : f32 to vector<16x4xf32>
    %407 = arith.minimumf %406, %405 : vector<16x4xf32>
    %cst_149 = arith.constant 0.186301842 : f32
    %408 = vector.broadcast %cst_149 : f32 to vector<16x4xf32>
    %409 = arith.mulf %408, %407 : vector<16x4xf32>
    %cst_150 = arith.constant 0.763017177 : f32
    %410 = vector.broadcast %cst_150 : f32 to vector<16x4xf32>
    %411 = arith.mulf %410, %367 : vector<16x4xf32>
    %412 = arith.addf %409, %411 : vector<16x4xf32>
    %c8_151 = arith.constant 8 : index
    %c0_152 = arith.constant 0 : index
    %c0_153 = arith.constant 0 : index
    %413 = vector.load %arg2[%c8_151, %c0_152, %c0_153] : memref<16x16x4xf32, #tpu.memory_space<vmem>>, vector<1x16x4xf32>
    %414 = vector.shape_cast %413 : vector<1x16x4xf32> to vector<16x4xf32>
    %cst_154 = arith.constant 0.253366053 : f32
    %415 = vector.broadcast %cst_154 : f32 to vector<16x4xf32>
    %416 = arith.mulf %415, %414 : vector<16x4xf32>
    %417 = arith.addf %412, %416 : vector<16x4xf32>
    %418 = vector.extract_strided_slice %417 {offsets = [0, 0], sizes = [16, 1], strides = [1, 1]} : vector<16x4xf32> to vector<16x1xf32>
    %419 = vector.broadcast %418 : vector<16x1xf32> to vector<16x32xf32>
    %420 = arith.mulf %419, %7 : vector<16x32xf32>
    %421 = vector.extract_strided_slice %417 {offsets = [0, 1], sizes = [16, 1], strides = [1, 1]} : vector<16x4xf32> to vector<16x1xf32>
    %422 = vector.broadcast %421 : vector<16x1xf32> to vector<16x32xf32>
    %423 = arith.mulf %422, %10 : vector<16x32xf32>
    %424 = arith.addf %420, %423 : vector<16x32xf32>
    %425 = vector.extract_strided_slice %417 {offsets = [0, 2], sizes = [16, 1], strides = [1, 1]} : vector<16x4xf32> to vector<16x1xf32>
    %426 = vector.broadcast %425 : vector<16x1xf32> to vector<16x32xf32>
    %427 = arith.mulf %426, %13 : vector<16x32xf32>
    %428 = arith.addf %424, %427 : vector<16x32xf32>
    %429 = vector.extract_strided_slice %417 {offsets = [0, 3], sizes = [16, 1], strides = [1, 1]} : vector<16x4xf32> to vector<16x1xf32>
    %430 = vector.broadcast %429 : vector<16x1xf32> to vector<16x32xf32>
    %431 = arith.mulf %430, %16 : vector<16x32xf32>
    %432 = arith.addf %428, %431 : vector<16x32xf32>
    %c7 = arith.constant 7 : index
    %c0_155 = arith.constant 0 : index
    %c0_156 = arith.constant 0 : index
    %433 = vector.load %arg3[%c7, %c0_155, %c0_156] : memref<16x16x32xf32, #tpu.memory_space<vmem>>, vector<1x16x32xf32>
    %434 = vector.shape_cast %433 : vector<1x16x32xf32> to vector<16x32xf32>
    %435 = arith.addf %432, %434 : vector<16x32xf32>
    %cst_157 = arith.constant 0.000000e+00 : f32
    %436 = vector.broadcast %cst_157 : f32 to vector<16x32xf32>
    %437 = arith.maximumf %435, %436 : vector<16x32xf32>
    %c7_158 = arith.constant 7 : index
    %c0_159 = arith.constant 0 : index
    %c0_160 = arith.constant 0 : index
    %438 = vector.load %arg4[%c7_158, %c0_159, %c0_160] : memref<16x16x32xf32, #tpu.memory_space<vmem>>, vector<1x16x32xf32>
    %439 = vector.shape_cast %438 : vector<1x16x32xf32> to vector<16x32xf32>
    %440 = arith.addf %432, %439 : vector<16x32xf32>
    %cst_161 = arith.constant 0.000000e+00 : f32
    %441 = vector.broadcast %cst_161 : f32 to vector<16x32xf32>
    %442 = arith.maximumf %440, %441 : vector<16x32xf32>
    %443 = arith.subf %437, %442 : vector<16x32xf32>
    %444 = vector.broadcast %0 : f32 to vector<16x32xf32>
    %445 = arith.mulf %444, %443 : vector<16x32xf32>
    %446 = arith.addf %442, %445 : vector<16x32xf32>
    %cst_162 = arith.constant dense<0.000000e+00> : vector<16x4xf32>
    %447 = tpu.matmul %446, %1, %cst_162 {dimension_numbers = #tpu.dot_dimension_numbers<[1], [0], [0], [1], [0, 0, 1, 1], [], []>} : vector<16x32xf32>, vector<32x4xf32>, vector<16x4xf32> -> vector<16x4xf32>
    %448 = arith.addf %447, %4 : vector<16x4xf32>
    %cst_163 = arith.constant 1.90360606 : f32
    %449 = vector.broadcast %cst_163 : f32 to vector<16x4xf32>
    %450 = arith.mulf %449, %417 : vector<16x4xf32>
    %cst_164 = arith.constant 1.61978889 : f32
    %451 = vector.broadcast %cst_164 : f32 to vector<16x4xf32>
    %452 = arith.mulf %451, %448 : vector<16x4xf32>
    %453 = arith.subf %450, %452 : vector<16x4xf32>
    %cst_165 = arith.constant -1.000000e+00 : f32
    %cst_166 = arith.constant 1.000000e+00 : f32
    %454 = vector.broadcast %cst_165 : f32 to vector<16x4xf32>
    %455 = arith.maximumf %454, %453 : vector<16x4xf32>
    %456 = vector.broadcast %cst_166 : f32 to vector<16x4xf32>
    %457 = arith.minimumf %456, %455 : vector<16x4xf32>
    %cst_167 = arith.constant 0.215756208 : f32
    %458 = vector.broadcast %cst_167 : f32 to vector<16x4xf32>
    %459 = arith.mulf %458, %457 : vector<16x4xf32>
    %cst_168 = arith.constant 0.74896568 : f32
    %460 = vector.broadcast %cst_168 : f32 to vector<16x4xf32>
    %461 = arith.mulf %460, %417 : vector<16x4xf32>
    %462 = arith.addf %459, %461 : vector<16x4xf32>
    %c7_169 = arith.constant 7 : index
    %c0_170 = arith.constant 0 : index
    %c0_171 = arith.constant 0 : index
    %463 = vector.load %arg2[%c7_169, %c0_170, %c0_171] : memref<16x16x4xf32, #tpu.memory_space<vmem>>, vector<1x16x4xf32>
    %464 = vector.shape_cast %463 : vector<1x16x4xf32> to vector<16x4xf32>
    %cst_172 = arith.constant 0.235967666 : f32
    %465 = vector.broadcast %cst_172 : f32 to vector<16x4xf32>
    %466 = arith.mulf %465, %464 : vector<16x4xf32>
    %467 = arith.addf %462, %466 : vector<16x4xf32>
    %468 = vector.extract_strided_slice %467 {offsets = [0, 0], sizes = [16, 1], strides = [1, 1]} : vector<16x4xf32> to vector<16x1xf32>
    %469 = vector.broadcast %468 : vector<16x1xf32> to vector<16x32xf32>
    %470 = arith.mulf %469, %7 : vector<16x32xf32>
    %471 = vector.extract_strided_slice %467 {offsets = [0, 1], sizes = [16, 1], strides = [1, 1]} : vector<16x4xf32> to vector<16x1xf32>
    %472 = vector.broadcast %471 : vector<16x1xf32> to vector<16x32xf32>
    %473 = arith.mulf %472, %10 : vector<16x32xf32>
    %474 = arith.addf %470, %473 : vector<16x32xf32>
    %475 = vector.extract_strided_slice %467 {offsets = [0, 2], sizes = [16, 1], strides = [1, 1]} : vector<16x4xf32> to vector<16x1xf32>
    %476 = vector.broadcast %475 : vector<16x1xf32> to vector<16x32xf32>
    %477 = arith.mulf %476, %13 : vector<16x32xf32>
    %478 = arith.addf %474, %477 : vector<16x32xf32>
    %479 = vector.extract_strided_slice %467 {offsets = [0, 3], sizes = [16, 1], strides = [1, 1]} : vector<16x4xf32> to vector<16x1xf32>
    %480 = vector.broadcast %479 : vector<16x1xf32> to vector<16x32xf32>
    %481 = arith.mulf %480, %16 : vector<16x32xf32>
    %482 = arith.addf %478, %481 : vector<16x32xf32>
    %c6 = arith.constant 6 : index
    %c0_173 = arith.constant 0 : index
    %c0_174 = arith.constant 0 : index
    %483 = vector.load %arg3[%c6, %c0_173, %c0_174] : memref<16x16x32xf32, #tpu.memory_space<vmem>>, vector<1x16x32xf32>
    %484 = vector.shape_cast %483 : vector<1x16x32xf32> to vector<16x32xf32>
    %485 = arith.addf %482, %484 : vector<16x32xf32>
    %cst_175 = arith.constant 0.000000e+00 : f32
    %486 = vector.broadcast %cst_175 : f32 to vector<16x32xf32>
    %487 = arith.maximumf %485, %486 : vector<16x32xf32>
    %c6_176 = arith.constant 6 : index
    %c0_177 = arith.constant 0 : index
    %c0_178 = arith.constant 0 : index
    %488 = vector.load %arg4[%c6_176, %c0_177, %c0_178] : memref<16x16x32xf32, #tpu.memory_space<vmem>>, vector<1x16x32xf32>
    %489 = vector.shape_cast %488 : vector<1x16x32xf32> to vector<16x32xf32>
    %490 = arith.addf %482, %489 : vector<16x32xf32>
    %cst_179 = arith.constant 0.000000e+00 : f32
    %491 = vector.broadcast %cst_179 : f32 to vector<16x32xf32>
    %492 = arith.maximumf %490, %491 : vector<16x32xf32>
    %493 = arith.subf %487, %492 : vector<16x32xf32>
    %494 = vector.broadcast %0 : f32 to vector<16x32xf32>
    %495 = arith.mulf %494, %493 : vector<16x32xf32>
    %496 = arith.addf %492, %495 : vector<16x32xf32>
    %cst_180 = arith.constant dense<0.000000e+00> : vector<16x4xf32>
    %497 = tpu.matmul %496, %1, %cst_180 {dimension_numbers = #tpu.dot_dimension_numbers<[1], [0], [0], [1], [0, 0, 1, 1], [], []>} : vector<16x32xf32>, vector<32x4xf32>, vector<16x4xf32> -> vector<16x4xf32>
    %498 = arith.addf %497, %4 : vector<16x4xf32>
    %cst_181 = arith.constant 1.64149177 : f32
    %499 = vector.broadcast %cst_181 : f32 to vector<16x4xf32>
    %500 = arith.mulf %499, %467 : vector<16x4xf32>
    %cst_182 = arith.constant 1.30172777 : f32
    %501 = vector.broadcast %cst_182 : f32 to vector<16x4xf32>
    %502 = arith.mulf %501, %498 : vector<16x4xf32>
    %503 = arith.subf %500, %502 : vector<16x4xf32>
    %cst_183 = arith.constant -1.000000e+00 : f32
    %cst_184 = arith.constant 1.000000e+00 : f32
    %504 = vector.broadcast %cst_183 : f32 to vector<16x4xf32>
    %505 = arith.maximumf %504, %503 : vector<16x4xf32>
    %506 = vector.broadcast %cst_184 : f32 to vector<16x4xf32>
    %507 = arith.minimumf %506, %505 : vector<16x4xf32>
    %cst_185 = arith.constant 0.250249654 : f32
    %508 = vector.broadcast %cst_185 : f32 to vector<16x4xf32>
    %509 = arith.mulf %508, %507 : vector<16x4xf32>
    %cst_186 = arith.constant 0.726689636 : f32
    %510 = vector.broadcast %cst_186 : f32 to vector<16x4xf32>
    %511 = arith.mulf %510, %467 : vector<16x4xf32>
    %512 = arith.addf %509, %511 : vector<16x4xf32>
    %c6_187 = arith.constant 6 : index
    %c0_188 = arith.constant 0 : index
    %c0_189 = arith.constant 0 : index
    %513 = vector.load %arg2[%c6_187, %c0_188, %c0_189] : memref<16x16x4xf32, #tpu.memory_space<vmem>>, vector<1x16x4xf32>
    %514 = vector.shape_cast %513 : vector<1x16x4xf32> to vector<16x4xf32>
    %cst_190 = arith.constant 0.216636717 : f32
    %515 = vector.broadcast %cst_190 : f32 to vector<16x4xf32>
    %516 = arith.mulf %515, %514 : vector<16x4xf32>
    %517 = arith.addf %512, %516 : vector<16x4xf32>
    %518 = vector.extract_strided_slice %517 {offsets = [0, 0], sizes = [16, 1], strides = [1, 1]} : vector<16x4xf32> to vector<16x1xf32>
    %519 = vector.broadcast %518 : vector<16x1xf32> to vector<16x32xf32>
    %520 = arith.mulf %519, %7 : vector<16x32xf32>
    %521 = vector.extract_strided_slice %517 {offsets = [0, 1], sizes = [16, 1], strides = [1, 1]} : vector<16x4xf32> to vector<16x1xf32>
    %522 = vector.broadcast %521 : vector<16x1xf32> to vector<16x32xf32>
    %523 = arith.mulf %522, %10 : vector<16x32xf32>
    %524 = arith.addf %520, %523 : vector<16x32xf32>
    %525 = vector.extract_strided_slice %517 {offsets = [0, 2], sizes = [16, 1], strides = [1, 1]} : vector<16x4xf32> to vector<16x1xf32>
    %526 = vector.broadcast %525 : vector<16x1xf32> to vector<16x32xf32>
    %527 = arith.mulf %526, %13 : vector<16x32xf32>
    %528 = arith.addf %524, %527 : vector<16x32xf32>
    %529 = vector.extract_strided_slice %517 {offsets = [0, 3], sizes = [16, 1], strides = [1, 1]} : vector<16x4xf32> to vector<16x1xf32>
    %530 = vector.broadcast %529 : vector<16x1xf32> to vector<16x32xf32>
    %531 = arith.mulf %530, %16 : vector<16x32xf32>
    %532 = arith.addf %528, %531 : vector<16x32xf32>
    %c5 = arith.constant 5 : index
    %c0_191 = arith.constant 0 : index
    %c0_192 = arith.constant 0 : index
    %533 = vector.load %arg3[%c5, %c0_191, %c0_192] : memref<16x16x32xf32, #tpu.memory_space<vmem>>, vector<1x16x32xf32>
    %534 = vector.shape_cast %533 : vector<1x16x32xf32> to vector<16x32xf32>
    %535 = arith.addf %532, %534 : vector<16x32xf32>
    %cst_193 = arith.constant 0.000000e+00 : f32
    %536 = vector.broadcast %cst_193 : f32 to vector<16x32xf32>
    %537 = arith.maximumf %535, %536 : vector<16x32xf32>
    %c5_194 = arith.constant 5 : index
    %c0_195 = arith.constant 0 : index
    %c0_196 = arith.constant 0 : index
    %538 = vector.load %arg4[%c5_194, %c0_195, %c0_196] : memref<16x16x32xf32, #tpu.memory_space<vmem>>, vector<1x16x32xf32>
    %539 = vector.shape_cast %538 : vector<1x16x32xf32> to vector<16x32xf32>
    %540 = arith.addf %532, %539 : vector<16x32xf32>
    %cst_197 = arith.constant 0.000000e+00 : f32
    %541 = vector.broadcast %cst_197 : f32 to vector<16x32xf32>
    %542 = arith.maximumf %540, %541 : vector<16x32xf32>
    %543 = arith.subf %537, %542 : vector<16x32xf32>
    %544 = vector.broadcast %0 : f32 to vector<16x32xf32>
    %545 = arith.mulf %544, %543 : vector<16x32xf32>
    %546 = arith.addf %542, %545 : vector<16x32xf32>
    %cst_198 = arith.constant dense<0.000000e+00> : vector<16x4xf32>
    %547 = tpu.matmul %546, %1, %cst_198 {dimension_numbers = #tpu.dot_dimension_numbers<[1], [0], [0], [1], [0, 0, 1, 1], [], []>} : vector<16x32xf32>, vector<32x4xf32>, vector<16x4xf32> -> vector<16x4xf32>
    %548 = arith.addf %547, %4 : vector<16x4xf32>
    %cst_199 = arith.constant 1.44310474 : f32
    %549 = vector.broadcast %cst_199 : f32 to vector<16x4xf32>
    %550 = arith.mulf %549, %517 : vector<16x4xf32>
    %cst_200 = arith.constant 1.04045725 : f32
    %551 = vector.broadcast %cst_200 : f32 to vector<16x4xf32>
    %552 = arith.mulf %551, %548 : vector<16x4xf32>
    %553 = arith.subf %550, %552 : vector<16x4xf32>
    %cst_201 = arith.constant -1.000000e+00 : f32
    %cst_202 = arith.constant 1.000000e+00 : f32
    %554 = vector.broadcast %cst_201 : f32 to vector<16x4xf32>
    %555 = arith.maximumf %554, %553 : vector<16x4xf32>
    %556 = vector.broadcast %cst_202 : f32 to vector<16x4xf32>
    %557 = arith.minimumf %556, %555 : vector<16x4xf32>
    %cst_203 = arith.constant 0.292450339 : f32
    %558 = vector.broadcast %cst_203 : f32 to vector<16x4xf32>
    %559 = arith.mulf %558, %557 : vector<16x4xf32>
    %cst_204 = arith.constant 0.693653106 : f32
    %560 = vector.broadcast %cst_204 : f32 to vector<16x4xf32>
    %561 = arith.mulf %560, %517 : vector<16x4xf32>
    %562 = arith.addf %559, %561 : vector<16x4xf32>
    %c5_205 = arith.constant 5 : index
    %c0_206 = arith.constant 0 : index
    %c0_207 = arith.constant 0 : index
    %563 = vector.load %arg2[%c5_205, %c0_206, %c0_207] : memref<16x16x4xf32, #tpu.memory_space<vmem>>, vector<1x16x4xf32>
    %564 = vector.shape_cast %563 : vector<1x16x4xf32> to vector<16x4xf32>
    %cst_208 = arith.constant 0.195048466 : f32
    %565 = vector.broadcast %cst_208 : f32 to vector<16x4xf32>
    %566 = arith.mulf %565, %564 : vector<16x4xf32>
    %567 = arith.addf %562, %566 : vector<16x4xf32>
    %568 = vector.extract_strided_slice %567 {offsets = [0, 0], sizes = [16, 1], strides = [1, 1]} : vector<16x4xf32> to vector<16x1xf32>
    %569 = vector.broadcast %568 : vector<16x1xf32> to vector<16x32xf32>
    %570 = arith.mulf %569, %7 : vector<16x32xf32>
    %571 = vector.extract_strided_slice %567 {offsets = [0, 1], sizes = [16, 1], strides = [1, 1]} : vector<16x4xf32> to vector<16x1xf32>
    %572 = vector.broadcast %571 : vector<16x1xf32> to vector<16x32xf32>
    %573 = arith.mulf %572, %10 : vector<16x32xf32>
    %574 = arith.addf %570, %573 : vector<16x32xf32>
    %575 = vector.extract_strided_slice %567 {offsets = [0, 2], sizes = [16, 1], strides = [1, 1]} : vector<16x4xf32> to vector<16x1xf32>
    %576 = vector.broadcast %575 : vector<16x1xf32> to vector<16x32xf32>
    %577 = arith.mulf %576, %13 : vector<16x32xf32>
    %578 = arith.addf %574, %577 : vector<16x32xf32>
    %579 = vector.extract_strided_slice %567 {offsets = [0, 3], sizes = [16, 1], strides = [1, 1]} : vector<16x4xf32> to vector<16x1xf32>
    %580 = vector.broadcast %579 : vector<16x1xf32> to vector<16x32xf32>
    %581 = arith.mulf %580, %16 : vector<16x32xf32>
    %582 = arith.addf %578, %581 : vector<16x32xf32>
    %c4 = arith.constant 4 : index
    %c0_209 = arith.constant 0 : index
    %c0_210 = arith.constant 0 : index
    %583 = vector.load %arg3[%c4, %c0_209, %c0_210] : memref<16x16x32xf32, #tpu.memory_space<vmem>>, vector<1x16x32xf32>
    %584 = vector.shape_cast %583 : vector<1x16x32xf32> to vector<16x32xf32>
    %585 = arith.addf %582, %584 : vector<16x32xf32>
    %cst_211 = arith.constant 0.000000e+00 : f32
    %586 = vector.broadcast %cst_211 : f32 to vector<16x32xf32>
    %587 = arith.maximumf %585, %586 : vector<16x32xf32>
    %c4_212 = arith.constant 4 : index
    %c0_213 = arith.constant 0 : index
    %c0_214 = arith.constant 0 : index
    %588 = vector.load %arg4[%c4_212, %c0_213, %c0_214] : memref<16x16x32xf32, #tpu.memory_space<vmem>>, vector<1x16x32xf32>
    %589 = vector.shape_cast %588 : vector<1x16x32xf32> to vector<16x32xf32>
    %590 = arith.addf %582, %589 : vector<16x32xf32>
    %cst_215 = arith.constant 0.000000e+00 : f32
    %591 = vector.broadcast %cst_215 : f32 to vector<16x32xf32>
    %592 = arith.maximumf %590, %591 : vector<16x32xf32>
    %593 = arith.subf %587, %592 : vector<16x32xf32>
    %594 = vector.broadcast %0 : f32 to vector<16x32xf32>
    %595 = arith.mulf %594, %593 : vector<16x32xf32>
    %596 = arith.addf %592, %595 : vector<16x32xf32>
    %cst_216 = arith.constant dense<0.000000e+00> : vector<16x4xf32>
    %597 = tpu.matmul %596, %1, %cst_216 {dimension_numbers = #tpu.dot_dimension_numbers<[1], [0], [0], [1], [0, 0, 1, 1], [], []>} : vector<16x32xf32>, vector<32x4xf32>, vector<16x4xf32> -> vector<16x4xf32>
    %598 = arith.addf %597, %4 : vector<16x4xf32>
    %cst_217 = arith.constant 1.29346442 : f32
    %599 = vector.broadcast %cst_217 : f32 to vector<16x4xf32>
    %600 = arith.mulf %599, %567 : vector<16x4xf32>
    %cst_218 = arith.constant 0.820396363 : f32
    %601 = vector.broadcast %cst_218 : f32 to vector<16x4xf32>
    %602 = arith.mulf %601, %598 : vector<16x4xf32>
    %603 = arith.subf %600, %602 : vector<16x4xf32>
    %cst_219 = arith.constant -1.000000e+00 : f32
    %cst_220 = arith.constant 1.000000e+00 : f32
    %604 = vector.broadcast %cst_219 : f32 to vector<16x4xf32>
    %605 = arith.maximumf %604, %603 : vector<16x4xf32>
    %606 = vector.broadcast %cst_220 : f32 to vector<16x4xf32>
    %607 = arith.minimumf %606, %605 : vector<16x4xf32>
    %cst_221 = arith.constant 0.346917897 : f32
    %608 = vector.broadcast %cst_221 : f32 to vector<16x4xf32>
    %609 = arith.mulf %608, %607 : vector<16x4xf32>
    %cst_222 = arith.constant 0.645597934 : f32
    %610 = vector.broadcast %cst_222 : f32 to vector<16x4xf32>
    %611 = arith.mulf %610, %567 : vector<16x4xf32>
    %612 = arith.addf %609, %611 : vector<16x4xf32>
    %c4_223 = arith.constant 4 : index
    %c0_224 = arith.constant 0 : index
    %c0_225 = arith.constant 0 : index
    %613 = vector.load %arg2[%c4_223, %c0_224, %c0_225] : memref<16x16x4xf32, #tpu.memory_space<vmem>>, vector<1x16x4xf32>
    %614 = vector.shape_cast %613 : vector<1x16x4xf32> to vector<16x4xf32>
    %cst_226 = arith.constant 0.170691103 : f32
    %615 = vector.broadcast %cst_226 : f32 to vector<16x4xf32>
    %616 = arith.mulf %615, %614 : vector<16x4xf32>
    %617 = arith.addf %612, %616 : vector<16x4xf32>
    %618 = vector.extract_strided_slice %617 {offsets = [0, 0], sizes = [16, 1], strides = [1, 1]} : vector<16x4xf32> to vector<16x1xf32>
    %619 = vector.broadcast %618 : vector<16x1xf32> to vector<16x32xf32>
    %620 = arith.mulf %619, %7 : vector<16x32xf32>
    %621 = vector.extract_strided_slice %617 {offsets = [0, 1], sizes = [16, 1], strides = [1, 1]} : vector<16x4xf32> to vector<16x1xf32>
    %622 = vector.broadcast %621 : vector<16x1xf32> to vector<16x32xf32>
    %623 = arith.mulf %622, %10 : vector<16x32xf32>
    %624 = arith.addf %620, %623 : vector<16x32xf32>
    %625 = vector.extract_strided_slice %617 {offsets = [0, 2], sizes = [16, 1], strides = [1, 1]} : vector<16x4xf32> to vector<16x1xf32>
    %626 = vector.broadcast %625 : vector<16x1xf32> to vector<16x32xf32>
    %627 = arith.mulf %626, %13 : vector<16x32xf32>
    %628 = arith.addf %624, %627 : vector<16x32xf32>
    %629 = vector.extract_strided_slice %617 {offsets = [0, 3], sizes = [16, 1], strides = [1, 1]} : vector<16x4xf32> to vector<16x1xf32>
    %630 = vector.broadcast %629 : vector<16x1xf32> to vector<16x32xf32>
    %631 = arith.mulf %630, %16 : vector<16x32xf32>
    %632 = arith.addf %628, %631 : vector<16x32xf32>
    %c3_227 = arith.constant 3 : index
    %c0_228 = arith.constant 0 : index
    %c0_229 = arith.constant 0 : index
    %633 = vector.load %arg3[%c3_227, %c0_228, %c0_229] : memref<16x16x32xf32, #tpu.memory_space<vmem>>, vector<1x16x32xf32>
    %634 = vector.shape_cast %633 : vector<1x16x32xf32> to vector<16x32xf32>
    %635 = arith.addf %632, %634 : vector<16x32xf32>
    %cst_230 = arith.constant 0.000000e+00 : f32
    %636 = vector.broadcast %cst_230 : f32 to vector<16x32xf32>
    %637 = arith.maximumf %635, %636 : vector<16x32xf32>
    %c3_231 = arith.constant 3 : index
    %c0_232 = arith.constant 0 : index
    %c0_233 = arith.constant 0 : index
    %638 = vector.load %arg4[%c3_231, %c0_232, %c0_233] : memref<16x16x32xf32, #tpu.memory_space<vmem>>, vector<1x16x32xf32>
    %639 = vector.shape_cast %638 : vector<1x16x32xf32> to vector<16x32xf32>
    %640 = arith.addf %632, %639 : vector<16x32xf32>
    %cst_234 = arith.constant 0.000000e+00 : f32
    %641 = vector.broadcast %cst_234 : f32 to vector<16x32xf32>
    %642 = arith.maximumf %640, %641 : vector<16x32xf32>
    %643 = arith.subf %637, %642 : vector<16x32xf32>
    %644 = vector.broadcast %0 : f32 to vector<16x32xf32>
    %645 = arith.mulf %644, %643 : vector<16x32xf32>
    %646 = arith.addf %642, %645 : vector<16x32xf32>
    %cst_235 = arith.constant dense<0.000000e+00> : vector<16x4xf32>
    %647 = tpu.matmul %646, %1, %cst_235 {dimension_numbers = #tpu.dot_dimension_numbers<[1], [0], [0], [1], [0, 0, 1, 1], [], []>} : vector<16x32xf32>, vector<32x4xf32>, vector<16x4xf32> -> vector<16x4xf32>
    %648 = arith.addf %647, %4 : vector<16x4xf32>
    %cst_236 = arith.constant 1.18197584 : f32
    %649 = vector.broadcast %cst_236 : f32 to vector<16x4xf32>
    %650 = arith.mulf %649, %617 : vector<16x4xf32>
    %cst_237 = arith.constant 0.630132496 : f32
    %651 = vector.broadcast %cst_237 : f32 to vector<16x4xf32>
    %652 = arith.mulf %651, %648 : vector<16x4xf32>
    %653 = arith.subf %650, %652 : vector<16x4xf32>
    %cst_238 = arith.constant -1.000000e+00 : f32
    %cst_239 = arith.constant 1.000000e+00 : f32
    %654 = vector.broadcast %cst_238 : f32 to vector<16x4xf32>
    %655 = arith.maximumf %654, %653 : vector<16x4xf32>
    %656 = vector.broadcast %cst_239 : f32 to vector<16x4xf32>
    %657 = arith.minimumf %656, %655 : vector<16x4xf32>
    %cst_240 = arith.constant 0.421867132 : f32
    %658 = vector.broadcast %cst_240 : f32 to vector<16x4xf32>
    %659 = arith.mulf %658, %657 : vector<16x4xf32>
    %cst_241 = arith.constant 0.574730575 : f32
    %660 = vector.broadcast %cst_241 : f32 to vector<16x4xf32>
    %661 = arith.mulf %660, %617 : vector<16x4xf32>
    %662 = arith.addf %659, %661 : vector<16x4xf32>
    %c3_242 = arith.constant 3 : index
    %c0_243 = arith.constant 0 : index
    %c0_244 = arith.constant 0 : index
    %663 = vector.load %arg2[%c3_242, %c0_243, %c0_244] : memref<16x16x4xf32, #tpu.memory_space<vmem>>, vector<1x16x4xf32>
    %664 = vector.shape_cast %663 : vector<1x16x4xf32> to vector<16x4xf32>
    %cst_245 = arith.constant 0.142697901 : f32
    %665 = vector.broadcast %cst_245 : f32 to vector<16x4xf32>
    %666 = arith.mulf %665, %664 : vector<16x4xf32>
    %667 = arith.addf %662, %666 : vector<16x4xf32>
    %668 = vector.extract_strided_slice %667 {offsets = [0, 0], sizes = [16, 1], strides = [1, 1]} : vector<16x4xf32> to vector<16x1xf32>
    %669 = vector.broadcast %668 : vector<16x1xf32> to vector<16x32xf32>
    %670 = arith.mulf %669, %7 : vector<16x32xf32>
    %671 = vector.extract_strided_slice %667 {offsets = [0, 1], sizes = [16, 1], strides = [1, 1]} : vector<16x4xf32> to vector<16x1xf32>
    %672 = vector.broadcast %671 : vector<16x1xf32> to vector<16x32xf32>
    %673 = arith.mulf %672, %10 : vector<16x32xf32>
    %674 = arith.addf %670, %673 : vector<16x32xf32>
    %675 = vector.extract_strided_slice %667 {offsets = [0, 2], sizes = [16, 1], strides = [1, 1]} : vector<16x4xf32> to vector<16x1xf32>
    %676 = vector.broadcast %675 : vector<16x1xf32> to vector<16x32xf32>
    %677 = arith.mulf %676, %13 : vector<16x32xf32>
    %678 = arith.addf %674, %677 : vector<16x32xf32>
    %679 = vector.extract_strided_slice %667 {offsets = [0, 3], sizes = [16, 1], strides = [1, 1]} : vector<16x4xf32> to vector<16x1xf32>
    %680 = vector.broadcast %679 : vector<16x1xf32> to vector<16x32xf32>
    %681 = arith.mulf %680, %16 : vector<16x32xf32>
    %682 = arith.addf %678, %681 : vector<16x32xf32>
    %c2_246 = arith.constant 2 : index
    %c0_247 = arith.constant 0 : index
    %c0_248 = arith.constant 0 : index
    %683 = vector.load %arg3[%c2_246, %c0_247, %c0_248] : memref<16x16x32xf32, #tpu.memory_space<vmem>>, vector<1x16x32xf32>
    %684 = vector.shape_cast %683 : vector<1x16x32xf32> to vector<16x32xf32>
    %685 = arith.addf %682, %684 : vector<16x32xf32>
    %cst_249 = arith.constant 0.000000e+00 : f32
    %686 = vector.broadcast %cst_249 : f32 to vector<16x32xf32>
    %687 = arith.maximumf %685, %686 : vector<16x32xf32>
    %c2_250 = arith.constant 2 : index
    %c0_251 = arith.constant 0 : index
    %c0_252 = arith.constant 0 : index
    %688 = vector.load %arg4[%c2_250, %c0_251, %c0_252] : memref<16x16x32xf32, #tpu.memory_space<vmem>>, vector<1x16x32xf32>
    %689 = vector.shape_cast %688 : vector<1x16x32xf32> to vector<16x32xf32>
    %690 = arith.addf %682, %689 : vector<16x32xf32>
    %cst_253 = arith.constant 0.000000e+00 : f32
    %691 = vector.broadcast %cst_253 : f32 to vector<16x32xf32>
    %692 = arith.maximumf %690, %691 : vector<16x32xf32>
    %693 = arith.subf %687, %692 : vector<16x32xf32>
    %694 = vector.broadcast %0 : f32 to vector<16x32xf32>
    %695 = arith.mulf %694, %693 : vector<16x32xf32>
    %696 = arith.addf %692, %695 : vector<16x32xf32>
    %cst_254 = arith.constant dense<0.000000e+00> : vector<16x4xf32>
    %697 = tpu.matmul %696, %1, %cst_254 {dimension_numbers = #tpu.dot_dimension_numbers<[1], [0], [0], [1], [0, 0, 1, 1], [], []>} : vector<16x32xf32>, vector<32x4xf32>, vector<16x4xf32> -> vector<16x4xf32>
    %698 = arith.addf %697, %4 : vector<16x4xf32>
    %cst_255 = arith.constant 1.10118484 : f32
    %699 = vector.broadcast %cst_255 : f32 to vector<16x4xf32>
    %700 = arith.mulf %699, %667 : vector<16x4xf32>
    %cst_256 = arith.constant 0.461094379 : f32
    %701 = vector.broadcast %cst_256 : f32 to vector<16x4xf32>
    %702 = arith.mulf %701, %698 : vector<16x4xf32>
    %703 = arith.subf %700, %702 : vector<16x4xf32>
    %cst_257 = arith.constant -1.000000e+00 : f32
    %cst_258 = arith.constant 1.000000e+00 : f32
    %704 = vector.broadcast %cst_257 : f32 to vector<16x4xf32>
    %705 = arith.maximumf %704, %703 : vector<16x4xf32>
    %706 = vector.broadcast %cst_258 : f32 to vector<16x4xf32>
    %707 = arith.minimumf %706, %705 : vector<16x4xf32>
    %cst_259 = arith.constant 0.533350766 : f32
    %708 = vector.broadcast %cst_259 : f32 to vector<16x4xf32>
    %709 = arith.mulf %708, %707 : vector<16x4xf32>
    %cst_260 = arith.constant 0.465494424 : f32
    %710 = vector.broadcast %cst_260 : f32 to vector<16x4xf32>
    %711 = arith.mulf %710, %667 : vector<16x4xf32>
    %712 = arith.addf %709, %711 : vector<16x4xf32>
    %c2_261 = arith.constant 2 : index
    %c0_262 = arith.constant 0 : index
    %c0_263 = arith.constant 0 : index
    %713 = vector.load %arg2[%c2_261, %c0_262, %c0_263] : memref<16x16x4xf32, #tpu.memory_space<vmem>>, vector<1x16x4xf32>
    %714 = vector.shape_cast %713 : vector<1x16x4xf32> to vector<16x4xf32>
    %cst_264 = arith.constant 0.10946957 : f32
    %715 = vector.broadcast %cst_264 : f32 to vector<16x4xf32>
    %716 = arith.mulf %715, %714 : vector<16x4xf32>
    %717 = arith.addf %712, %716 : vector<16x4xf32>
    %718 = vector.extract_strided_slice %717 {offsets = [0, 0], sizes = [16, 1], strides = [1, 1]} : vector<16x4xf32> to vector<16x1xf32>
    %719 = vector.broadcast %718 : vector<16x1xf32> to vector<16x32xf32>
    %720 = arith.mulf %719, %7 : vector<16x32xf32>
    %721 = vector.extract_strided_slice %717 {offsets = [0, 1], sizes = [16, 1], strides = [1, 1]} : vector<16x4xf32> to vector<16x1xf32>
    %722 = vector.broadcast %721 : vector<16x1xf32> to vector<16x32xf32>
    %723 = arith.mulf %722, %10 : vector<16x32xf32>
    %724 = arith.addf %720, %723 : vector<16x32xf32>
    %725 = vector.extract_strided_slice %717 {offsets = [0, 2], sizes = [16, 1], strides = [1, 1]} : vector<16x4xf32> to vector<16x1xf32>
    %726 = vector.broadcast %725 : vector<16x1xf32> to vector<16x32xf32>
    %727 = arith.mulf %726, %13 : vector<16x32xf32>
    %728 = arith.addf %724, %727 : vector<16x32xf32>
    %729 = vector.extract_strided_slice %717 {offsets = [0, 3], sizes = [16, 1], strides = [1, 1]} : vector<16x4xf32> to vector<16x1xf32>
    %730 = vector.broadcast %729 : vector<16x1xf32> to vector<16x32xf32>
    %731 = arith.mulf %730, %16 : vector<16x32xf32>
    %732 = arith.addf %728, %731 : vector<16x32xf32>
    %c1_265 = arith.constant 1 : index
    %c0_266 = arith.constant 0 : index
    %c0_267 = arith.constant 0 : index
    %733 = vector.load %arg3[%c1_265, %c0_266, %c0_267] : memref<16x16x32xf32, #tpu.memory_space<vmem>>, vector<1x16x32xf32>
    %734 = vector.shape_cast %733 : vector<1x16x32xf32> to vector<16x32xf32>
    %735 = arith.addf %732, %734 : vector<16x32xf32>
    %cst_268 = arith.constant 0.000000e+00 : f32
    %736 = vector.broadcast %cst_268 : f32 to vector<16x32xf32>
    %737 = arith.maximumf %735, %736 : vector<16x32xf32>
    %c1_269 = arith.constant 1 : index
    %c0_270 = arith.constant 0 : index
    %c0_271 = arith.constant 0 : index
    %738 = vector.load %arg4[%c1_269, %c0_270, %c0_271] : memref<16x16x32xf32, #tpu.memory_space<vmem>>, vector<1x16x32xf32>
    %739 = vector.shape_cast %738 : vector<1x16x32xf32> to vector<16x32xf32>
    %740 = arith.addf %732, %739 : vector<16x32xf32>
    %cst_272 = arith.constant 0.000000e+00 : f32
    %741 = vector.broadcast %cst_272 : f32 to vector<16x32xf32>
    %742 = arith.maximumf %740, %741 : vector<16x32xf32>
    %743 = arith.subf %737, %742 : vector<16x32xf32>
    %744 = vector.broadcast %0 : f32 to vector<16x32xf32>
    %745 = arith.mulf %744, %743 : vector<16x32xf32>
    %746 = arith.addf %742, %745 : vector<16x32xf32>
    %cst_273 = arith.constant dense<0.000000e+00> : vector<16x4xf32>
    %747 = tpu.matmul %746, %1, %cst_273 {dimension_numbers = #tpu.dot_dimension_numbers<[1], [0], [0], [1], [0, 0, 1, 1], [], []>} : vector<16x32xf32>, vector<32x4xf32>, vector<16x4xf32> -> vector<16x4xf32>
    %748 = arith.addf %747, %4 : vector<16x4xf32>
    %cst_274 = arith.constant 1.04594612 : f32
    %749 = vector.broadcast %cst_274 : f32 to vector<16x4xf32>
    %750 = arith.mulf %749, %717 : vector<16x4xf32>
    %cst_275 = arith.constant 0.306599617 : f32
    %751 = vector.broadcast %cst_275 : f32 to vector<16x4xf32>
    %752 = arith.mulf %751, %748 : vector<16x4xf32>
    %753 = arith.subf %750, %752 : vector<16x4xf32>
    %cst_276 = arith.constant -1.000000e+00 : f32
    %cst_277 = arith.constant 1.000000e+00 : f32
    %754 = vector.broadcast %cst_276 : f32 to vector<16x4xf32>
    %755 = arith.maximumf %754, %753 : vector<16x4xf32>
    %756 = vector.broadcast %cst_277 : f32 to vector<16x4xf32>
    %757 = arith.minimumf %756, %755 : vector<16x4xf32>
    %cst_278 = arith.constant 0.715099931 : f32
    %758 = vector.broadcast %cst_278 : f32 to vector<16x4xf32>
    %759 = arith.mulf %758, %757 : vector<16x4xf32>
    %cst_279 = arith.constant 0.284694612 : f32
    %760 = vector.broadcast %cst_279 : f32 to vector<16x4xf32>
    %761 = arith.mulf %760, %717 : vector<16x4xf32>
    %762 = arith.addf %759, %761 : vector<16x4xf32>
    %c1_280 = arith.constant 1 : index
    %c0_281 = arith.constant 0 : index
    %c0_282 = arith.constant 0 : index
    %763 = vector.load %arg2[%c1_280, %c0_281, %c0_282] : memref<16x16x4xf32, #tpu.memory_space<vmem>>, vector<1x16x4xf32>
    %764 = vector.shape_cast %763 : vector<1x16x4xf32> to vector<16x4xf32>
    %cst_283 = arith.constant 0.0676332042 : f32
    %765 = vector.broadcast %cst_283 : f32 to vector<16x4xf32>
    %766 = arith.mulf %765, %764 : vector<16x4xf32>
    %767 = arith.addf %762, %766 : vector<16x4xf32>
    %768 = vector.extract_strided_slice %767 {offsets = [0, 0], sizes = [16, 1], strides = [1, 1]} : vector<16x4xf32> to vector<16x1xf32>
    %769 = vector.broadcast %768 : vector<16x1xf32> to vector<16x32xf32>
    %770 = arith.mulf %769, %7 : vector<16x32xf32>
    %771 = vector.extract_strided_slice %767 {offsets = [0, 1], sizes = [16, 1], strides = [1, 1]} : vector<16x4xf32> to vector<16x1xf32>
    %772 = vector.broadcast %771 : vector<16x1xf32> to vector<16x32xf32>
    %773 = arith.mulf %772, %10 : vector<16x32xf32>
    %774 = arith.addf %770, %773 : vector<16x32xf32>
    %775 = vector.extract_strided_slice %767 {offsets = [0, 2], sizes = [16, 1], strides = [1, 1]} : vector<16x4xf32> to vector<16x1xf32>
    %776 = vector.broadcast %775 : vector<16x1xf32> to vector<16x32xf32>
    %777 = arith.mulf %776, %13 : vector<16x32xf32>
    %778 = arith.addf %774, %777 : vector<16x32xf32>
    %779 = vector.extract_strided_slice %767 {offsets = [0, 3], sizes = [16, 1], strides = [1, 1]} : vector<16x4xf32> to vector<16x1xf32>
    %780 = vector.broadcast %779 : vector<16x1xf32> to vector<16x32xf32>
    %781 = arith.mulf %780, %16 : vector<16x32xf32>
    %782 = arith.addf %778, %781 : vector<16x32xf32>
    %c0_284 = arith.constant 0 : index
    %c0_285 = arith.constant 0 : index
    %c0_286 = arith.constant 0 : index
    %783 = vector.load %arg3[%c0_284, %c0_285, %c0_286] : memref<16x16x32xf32, #tpu.memory_space<vmem>>, vector<1x16x32xf32>
    %784 = vector.shape_cast %783 : vector<1x16x32xf32> to vector<16x32xf32>
    %785 = arith.addf %782, %784 : vector<16x32xf32>
    %cst_287 = arith.constant 0.000000e+00 : f32
    %786 = vector.broadcast %cst_287 : f32 to vector<16x32xf32>
    %787 = arith.maximumf %785, %786 : vector<16x32xf32>
    %c0_288 = arith.constant 0 : index
    %c0_289 = arith.constant 0 : index
    %c0_290 = arith.constant 0 : index
    %788 = vector.load %arg4[%c0_288, %c0_289, %c0_290] : memref<16x16x32xf32, #tpu.memory_space<vmem>>, vector<1x16x32xf32>
    %789 = vector.shape_cast %788 : vector<1x16x32xf32> to vector<16x32xf32>
    %790 = arith.addf %782, %789 : vector<16x32xf32>
    %cst_291 = arith.constant 0.000000e+00 : f32
    %791 = vector.broadcast %cst_291 : f32 to vector<16x32xf32>
    %792 = arith.maximumf %790, %791 : vector<16x32xf32>
    %793 = arith.subf %787, %792 : vector<16x32xf32>
    %794 = vector.broadcast %0 : f32 to vector<16x32xf32>
    %795 = arith.mulf %794, %793 : vector<16x32xf32>
    %796 = arith.addf %792, %795 : vector<16x32xf32>
    %cst_292 = arith.constant dense<0.000000e+00> : vector<16x4xf32>
    %797 = tpu.matmul %796, %1, %cst_292 {dimension_numbers = #tpu.dot_dimension_numbers<[1], [0], [0], [1], [0, 0, 1, 1], [], []>} : vector<16x32xf32>, vector<32x4xf32>, vector<16x4xf32> -> vector<16x4xf32>
    %798 = arith.addf %797, %4 : vector<16x4xf32>
    %cst_293 = arith.constant 1.0128752 : f32
    %799 = vector.broadcast %cst_293 : f32 to vector<16x4xf32>
    %800 = arith.mulf %799, %767 : vector<16x4xf32>
    %cst_294 = arith.constant 0.16098468 : f32
    %801 = vector.broadcast %cst_294 : f32 to vector<16x4xf32>
    %802 = arith.mulf %801, %798 : vector<16x4xf32>
    %803 = arith.subf %800, %802 : vector<16x4xf32>
    %cst_295 = arith.constant -1.000000e+00 : f32
    %cst_296 = arith.constant 1.000000e+00 : f32
    %804 = vector.broadcast %cst_295 : f32 to vector<16x4xf32>
    %805 = arith.maximumf %804, %803 : vector<16x4xf32>
    %806 = vector.broadcast %cst_296 : f32 to vector<16x4xf32>
    %807 = arith.minimumf %806, %805 : vector<16x4xf32>
    %cst_297 = arith.constant 1.000000e+00 : f32
    %808 = vector.broadcast %cst_297 : f32 to vector<16x4xf32>
    %809 = arith.mulf %808, %807 : vector<16x4xf32>
    %cst_298 = arith.constant 0.000000e+00 : f32
    %810 = vector.broadcast %cst_298 : f32 to vector<16x4xf32>
    %811 = arith.mulf %810, %767 : vector<16x4xf32>
    %812 = arith.addf %809, %811 : vector<16x4xf32>
    %c0_299 = arith.constant 0 : index
    %c0_300 = arith.constant 0 : index
    %813 = vector.load %arg8[%c0_299, %c0_300] : memref<16x4xf32, #tpu.memory_space<vmem>>, vector<16x4xf32>
    tpu.vector_store %arg8[%c0_299, %c0_300], %812 {strides = array<i32>} : memref<16x4xf32, #tpu.memory_space<vmem>>, vector<16x4xf32>,
    return
  }
}

</mosaic_0001>

<llo_original>
// kernel: _sample.1
$region0: #{_sample.1}
  #allocation0 [shape = 'u32[]', space=smem, size = 0x4, offset = 0x4, fixed_abs, tag = 'smem constant byte address 0x4 - core index']
  #allocation1 [shape = 'u32[144,128]{1,0:T(1,128)}', space=vmem, size = 0x12000, scoped, tag = 'internal scratch']
  #allocation2 [shape = 'f32[1,1]{1,0:T(1,128)S(6)}', space=smem, size = 0x200, scoped, tag = 'scoped memory for _sample.1']
  %s0 = inlined_call_operand.<no memory space> [shape: f32[1,1], index: 0, kind: input, shape index: {}]
  %s1 = inlined_call_operand.vmem [shape: f32[16,4], index: 1, kind: input, shape index: {}]
  %s2 = inlined_call_operand.vmem [shape: f32[16,16,4], index: 2, kind: input, shape index: {}]
  %s3 = inlined_call_operand.vmem [shape: f32[16,16,32], index: 3, kind: input, shape index: {}]
  %s4 = inlined_call_operand.vmem [shape: f32[16,16,32], index: 4, kind: input, shape index: {}]
  %s5 = inlined_call_operand.vmem [shape: f32[4,32], index: 5, kind: input, shape index: {}]
  %s6 = inlined_call_operand.vmem [shape: f32[32,4], index: 6, kind: input, shape index: {}]
  %s7 = inlined_call_operand.vmem [shape: f32[1,4], index: 7, kind: input, shape index: {}]
  %s8 = inlined_call_operand.vmem [shape: f32[16,4], index: 8, kind: output, shape index: {}]
  %s9 = sld [smem:[#allocation0]]
  $region42: #{_sample.1} parent=0
    _
  %s11 = ssub.s32 1, %s9
  %s12 = scalar_select 0, %s11, %s9
  %13 = sst [smem:[#allocation2]] %s0
  // Predicated region
  $region2: #{_sample.1} parent=0 // pred_check
    _
  $region3: #{_sample.1} parent=0 // pred_check_branch
    %15 = sbr.rel (0) target = $region5
  $region4: #{_sample.1} parent=0 // pred_region
    _
  $region5: #{_sample.1} parent=0 // pred_fallthru
    _
  // Predicated region
  $region6: #{_sample.1} parent=0 // pred_check
    _
  $region7: #{_sample.1} parent=0 // pred_check_branch
    %17 = sbr.rel (0) target = $region9
  $region8: #{_sample.1} parent=0 // pred_region
    _
  $region9: #{_sample.1} parent=0 // pred_fallthru
    _
  // Predicated region
  $region10: #{_sample.1} parent=0 // pred_check
    _
  $region11: #{_sample.1} parent=0 // pred_check_branch
    %19 = sbr.rel (0) target = $region13
  $region12: #{_sample.1} parent=0 // pred_region
    _
  $region13: #{_sample.1} parent=0 // pred_fallthru
    _
  // Predicated region
  $region14: #{_sample.1} parent=0 // pred_check
    _
  $region15: #{_sample.1} parent=0 // pred_check_branch
    %21 = sbr.rel (0) target = $region17
  $region16: #{_sample.1} parent=0 // pred_region
    _
  $region17: #{_sample.1} parent=0 // pred_fallthru
    _
  // Predicated region
  $region18: #{_sample.1} parent=0 // pred_check
    _
  $region19: #{_sample.1} parent=0 // pred_check_branch
    %23 = sbr.rel (0) target = $region21
  $region20: #{_sample.1} parent=0 // pred_region
    _
  $region21: #{_sample.1} parent=0 // pred_fallthru
    _
  // Predicated region
  $region22: #{_sample.1} parent=0 // pred_check
    _
  $region23: #{_sample.1} parent=0 // pred_check_branch
    %25 = sbr.rel (0) target = $region25
  $region24: #{_sample.1} parent=0 // pred_region
    _
  $region25: #{_sample.1} parent=0 // pred_fallthru
    _
  // Predicated region
  $region26: #{_sample.1} parent=0 // pred_check
    _
  $region27: #{_sample.1} parent=0 // pred_check_branch
    %27 = sbr.rel (0) target = $region29
  $region28: #{_sample.1} parent=0 // pred_region
    _
  $region29: #{_sample.1} parent=0 // pred_fallthru
    _
  // Predicated region
  $region30: #{_sample.1} parent=0 // pred_check
    _
  $region31: #{_sample.1} parent=0 // pred_check_branch
    %29 = sbr.rel (0) target = $region33
  $region32: #{_sample.1} parent=0 // pred_region
    _
  $region33: #{_sample.1} parent=0 // pred_fallthru
    _
  %s30 = sld [smem:[#allocation2]]
  %v31 = vld [vmem:[%s6] sm:$0xff]
  %v32 = vld [vmem:[%s6 + $0x8] sm:$0xff]
  %v33 = vld [vmem:[%s6 + $0x10] sm:$0xff]
  %v34 = vld [vmem:[%s6 + $0x18] sm:$0xff]
  %v35 = vld [vmem:[%s7] sm:$0x1]
  %v37 = vlaneseq
  %v38 = vshrl.u32 %v37, 7
  %v39 = vsub.s32 0, %v38
  %v40 = vrot.slane %v35, %v39
  %v42 = vld [vmem:[%s5] sm:$0x1]
  %v43 = vlaneseq
  %v44 = vshrl.u32 %v43, 7
  %v45 = vsub.s32 0, %v44
  %v46 = vrot.slane %v42, %v45
  %v47 = vld [vmem:[%s5 + $0x1] sm:$0x1]
  %v48 = vlaneseq
  %v49 = vshrl.u32 %v48, 7
  %v50 = vsub.s32 0, %v49
  %v51 = vrot.slane %v47, %v50
  %v52 = vld [vmem:[%s5 + $0x2] sm:$0x1]
  %v53 = vlaneseq
  %v54 = vshrl.u32 %v53, 7
  %v55 = vsub.s32 0, %v54
  %v56 = vrot.slane %v52, %v55
  %v57 = vld [vmem:[%s5 + $0x3] sm:$0x1]
  %v58 = vlaneseq
  %v59 = vshrl.u32 %v58, 7
  %v60 = vsub.s32 0, %v59
  %v61 = vrot.slane %v57, %v60
  %v62 = vld [vmem:[%s1] sm:$0xff]
  %v63 = vld [vmem:[%s1 + $0x8] sm:$0xff]
  %65 = vset.pattern.permute.xlu0 0
  %66 = vperm.xlu0 %65, %v62
  %v67 = vpop.permute.xlu0 %66
  %70 = vset.pattern.permute.xlu0 0
  %71 = vperm.xlu0 %70, %v63
  %v72 = vpop.permute.xlu0 %71
  %v74 = vmul.f32 %v67, %v46
  %v75 = vmul.f32 %v72, %v46
  %76 = vset.pattern.permute.xlu0 1
  %77 = vperm.xlu0 %76, %v62
  %v78 = vpop.permute.xlu0 %77
  %80 = vset.pattern.permute.xlu0 1
  %81 = vperm.xlu0 %80, %v63
  %v82 = vpop.permute.xlu0 %81
  %v84 = vmul.f32 %v78, %v51
  %v85 = vmul.f32 %v82, %v51
  %v86 = vadd.f32 %v74, %v84
  %v87 = vadd.f32 %v75, %v85
  %88 = vset.pattern.permute.xlu0 2
  %89 = vperm.xlu0 %88, %v62
  %v90 = vpop.permute.xlu0 %89
  %92 = vset.pattern.permute.xlu0 2
  %93 = vperm.xlu0 %92, %v63
  %v94 = vpop.permute.xlu0 %93
  %v96 = vmul.f32 %v90, %v56
  %v97 = vmul.f32 %v94, %v56
  %v98 = vadd.f32 %v86, %v96
  %v99 = vadd.f32 %v87, %v97
  %100 = vset.pattern.permute.xlu0 3
  %101 = vperm.xlu0 %100, %v62
  %v102 = vpop.permute.xlu0 %101
  %104 = vset.pattern.permute.xlu0 3
  %105 = vperm.xlu0 %104, %v63
  %v106 = vpop.permute.xlu0 %105
  %v108 = vmul.f32 %v102, %v61
  %v109 = vmul.f32 %v106, %v61
  %v110 = vadd.f32 %v98, %v108
  %v111 = vadd.f32 %v99, %v109
  %s112 = scalar_lea.vmem %s3, 240
  %v113 = vld [vmem:[%s112] sm:$0xff]
  %v114 = vld [vmem:[%s112 + $0x8] sm:$0xff]
  %v115 = vadd.f32 %v110, %v113
  %v116 = vadd.f32 %v111, %v114
  %v117 = vmax.f32 %v115, 0.0
  %v118 = vmax.f32 %v116, 0.0
  %s119 = scalar_lea.vmem %s4, 240
  %v120 = vld [vmem:[%s119] sm:$0xff]
  %v121 = vld [vmem:[%s119 + $0x8] sm:$0xff]
  %v122 = vadd.f32 %v110, %v120
  %v123 = vadd.f32 %v111, %v121
  %v124 = vmax.f32 %v122, 0.0
  %v125 = vmax.f32 %v123, 0.0
  %v126 = vsub.f32 %v117, %v124
  %v127 = vsub.f32 %v118, %v125
  %v128 = vstv %s30
  %v129 = vmul.f32 %v128, %v126
  %v130 = vmul.f32 %v128, %v127
  %v131 = vadd.f32 %v124, %v129
  %v132 = vadd.f32 %v125, %v130
  %vm133 = vcmask 261120
  %v135 = vsel %vm133, %v131, 0
  %v138 = vsel %vm133, %v132, 0
  %140 = vmatprep.subr.mxu0 0.0
  %141 = vmatpush1.msra.mxu0 %v31
  %142 = vmatprep.subr.mxu0 0.0
  %143 = vmatpush1.msra.mxu0 %v32
  %144 = vmatprep.subr.mxu0 0.0
  %145 = vmatpush1.msra.mxu0 %v33
  %146 = vmatprep.subr.mxu0 0.0
  %147 = vmatpush1.msra.mxu0 %v34
  %148 = vmatprep.subr.mxu0 0.0
  %149 = vmatpush1.msra.mxu0 0.0
  %150 = vmatprep.subr.mxu0 0.0
  %151 = vmatpush1.msra.mxu0 0.0
  %152 = vmatprep.subr.mxu0 0.0
  %153 = vmatpush1.msra.mxu0 0.0
  %154 = vmatprep.subr.mxu0 0.0
  %155 = vmatpush1.msra.mxu0 0.0
  %156 = vmatprep.subr.mxu0 0.0
  %157 = vmatpush1.msra.mxu0 0.0
  %158 = vmatprep.subr.mxu0 0.0
  %159 = vmatpush1.msra.mxu0 0.0
  %160 = vmatprep.subr.mxu0 0.0
  %161 = vmatpush1.msra.mxu0 0.0
  %162 = vmatprep.subr.mxu0 0.0
  %163 = vmatpush1.msra.mxu0 0.0
  %164 = vmatprep.subr.mxu0 0.0
  %165 = vmatpush1.msra.mxu0 0.0
  %166 = vmatprep.subr.mxu0 0.0
  %167 = vmatpush1.msra.mxu0 0.0
  %168 = vmatprep.subr.mxu0 0.0
  %169 = vmatpush1.msra.mxu0 0.0
  %170 = vmatprep.subr.mxu0 0.0
  %171 = vmatpush1.msra.mxu0 0.0
  %172 = vmatprep.subr.mxu0 0.0
  %173 = vmatpush1.msra.mxu0 0.0
  %174 = vmatprep.subr.mxu0 0.0
  %175 = vmatpush1.msra.mxu0 0.0
  %176 = vmatprep.subr.mxu0 0.0
  %177 = vmatpush1.msra.mxu0 0.0
  %178 = vmatprep.subr.mxu0 0.0
  %179 = vmatpush1.msra.mxu0 0.0
  %180 = vmatprep.subr.mxu0 0.0
  %181 = vmatpush1.msra.mxu0 0.0
  %182 = vmatprep.subr.mxu0 0.0
  %183 = vmatpush1.msra.mxu0 0.0
  %184 = vmatprep.subr.mxu0 0.0
  %185 = vmatpush1.msra.mxu0 0.0
  %186 = vmatprep.subr.mxu0 0.0
  %187 = vmatpush1.msra.mxu0 0.0
  %188 = vmatprep.subr.mxu0 0.0
  %189 = vmatpush1.msra.mxu0 0.0
  %190 = vmatprep.subr.mxu0 0.0
  %191 = vmatpush1.msra.mxu0 0.0
  %192 = vmatprep.subr.mxu0 0.0
  %193 = vmatpush1.msra.mxu0 0.0
  %194 = vmatprep.subr.mxu0 0.0
  %195 = vmatpush1.msra.mxu0 0.0
  %196 = vmatprep.subr.mxu0 0.0
  %197 = vmatpush1.msra.mxu0 0.0
  %198 = vmatprep.subr.mxu0 0.0
  %199 = vmatpush1.msra.mxu0 0.0
  %200 = vmatprep.subr.mxu0 0.0
  %201 = vmatpush1.msra.mxu0 0.0
  %202 = vmatprep.subr.mxu0 0.0
  %203 = vmatpush1.msra.mxu0 0.0
  %204 = vmatprep.mubr.f32.mxu0 0.0
  %205 = vmatmul.mubr.f32.gmra.mrb[0].mxu0 %v135
  %v206 = vpop.f32.mrb[0].mxu0
  %v207 = vadd.f32 %v40, %v206
  %v208 = vpop.f32.mrb[0].mxu0
  %209 = vmatprep.mubr.f32.mxu0 0.0
  %210 = vmatmul.mubr.f32.gmra.mrb[0].mxu0 %v138
  %v211 = vpop.f32.mrb[0].mxu0
  %v212 = vadd.f32 %v40, %v211
  %v213 = vpop.f32.mrb[0].mxu0
  %214 = vdwg.mxu0
  %v215 = vmul.f32 %v62, 12.490895
  %v216 = vmul.f32 %v63, 12.490895
  %v217 = vmul.f32 %v207, 12.450802
  %v218 = vmul.f32 %v212, 12.450802
  %v219 = vsub.f32 %v215, %v217
  %v220 = vsub.f32 %v216, %v218
  %v221 = vmax.f32 %v219, -1.0
  %v222 = vmax.f32 %v220, -1.0
  %v223 = vmin.f32 %v221, 1.0
  %v224 = vmin.f32 %v222, 1.0
  %v225 = vmul.f32 %v223, 0.04955056
  %v226 = vmul.f32 %v224, 0.04955056
  %v227 = vmul.f32 %v62, 0.73475623
  %v228 = vmul.f32 %v63, 0.73475623
  %v229 = vadd.f32 %v225, %v227
  %v230 = vadd.f32 %v226, %v228
  %s231 = scalar_lea.vmem %s2, 240
  %v232 = vld [vmem:[%s231] sm:$0xff]
  %v233 = vld [vmem:[%s231 + $0x8] sm:$0xff]
  %v234 = vmul.f32 %v232, 0.3360984
  %v235 = vmul.f32 %v233, 0.3360984
  %v236 = vadd.f32 %v229, %v234
  %v237 = vadd.f32 %v230, %v235
  %239 = vset.pattern.permute.xlu0 0
  %240 = vperm.xlu0 %239, %v236
  %v241 = vpop.permute.xlu0 %240
  %244 = vset.pattern.permute.xlu0 0
  %245 = vperm.xlu0 %244, %v237
  %v246 = vpop.permute.xlu0 %245
  %v248 = vmul.f32 %v241, %v46
  %v249 = vmul.f32 %v246, %v46
  %250 = vset.pattern.permute.xlu0 1
  %251 = vperm.xlu0 %250, %v236
  %v252 = vpop.permute.xlu0 %251
  %254 = vset.pattern.permute.xlu0 1
  %255 = vperm.xlu0 %254, %v237
  %v256 = vpop.permute.xlu0 %255
  %v258 = vmul.f32 %v252, %v51
  %v259 = vmul.f32 %v256, %v51
  %v260 = vadd.f32 %v248, %v258
  %v261 = vadd.f32 %v249, %v259
  %262 = vset.pattern.permute.xlu0 2
  %263 = vperm.xlu0 %262, %v236
  %v264 = vpop.permute.xlu0 %263
  %266 = vset.pattern.permute.xlu0 2
  %267 = vperm.xlu0 %266, %v237
  %v268 = vpop.permute.xlu0 %267
  %v270 = vmul.f32 %v264, %v56
  %v271 = vmul.f32 %v268, %v56
  %v272 = vadd.f32 %v260, %v270
  %v273 = vadd.f32 %v261, %v271
  %274 = vset.pattern.permute.xlu0 3
  %275 = vperm.xlu0 %274, %v236
  %v276 = vpop.permute.xlu0 %275
  %278 = vset.pattern.permute.xlu0 3
  %279 = vperm.xlu0 %278, %v237
  %v280 = vpop.permute.xlu0 %279
  %v282 = vmul.f32 %v276, %v61
  %v283 = vmul.f32 %v280, %v61
  %v284 = vadd.f32 %v272, %v282
  %v285 = vadd.f32 %v273, %v283
  %s286 = scalar_lea.vmem %s3, 224
  %v287 = vld [vmem:[%s286] sm:$0xff]
  %v288 = vld [vmem:[%s286 + $0x8] sm:$0xff]
  %v289 = vadd.f32 %v284, %v287
  %v290 = vadd.f32 %v285, %v288
  %v291 = vmax.f32 %v289, 0.0
  %v292 = vmax.f32 %v290, 0.0
  %s293 = scalar_lea.vmem %s4, 224
  %v294 = vld [vmem:[%s293] sm:$0xff]
  %v295 = vld [vmem:[%s293 + $0x8] sm:$0xff]
  %v296 = vadd.f32 %v284, %v294
  %v297 = vadd.f32 %v285, %v295
  %v298 = vmax.f32 %v296, 0.0
  %v299 = vmax.f32 %v297, 0.0
  %v300 = vsub.f32 %v291, %v298
  %v301 = vsub.f32 %v292, %v299
  %v302 = vmul.f32 %v128, %v300
  %v303 = vmul.f32 %v128, %v301
  %v304 = vadd.f32 %v298, %v302
  %v305 = vadd.f32 %v299, %v303
  %v307 = vsel %vm133, %v304, 0
  %v310 = vsel %vm133, %v305, 0
  %312 = vmatprep.subr.mxu0 0.0
  %313 = vmatpush1.msra.mxu0 %v31
  %314 = vmatprep.subr.mxu0 0.0
  %315 = vmatpush1.msra.mxu0 %v32
  %316 = vmatprep.subr.mxu0 0.0
  %317 = vmatpush1.msra.mxu0 %v33
  %318 = vmatprep.subr.mxu0 0.0
  %319 = vmatpush1.msra.mxu0 %v34
  %320 = vmatprep.subr.mxu0 0.0
  %321 = vmatpush1.msra.mxu0 0.0
  %322 = vmatprep.subr.mxu0 0.0
  %323 = vmatpush1.msra.mxu0 0.0
  %324 = vmatprep.subr.mxu0 0.0
  %325 = vmatpush1.msra.mxu0 0.0
  %326 = vmatprep.subr.mxu0 0.0
  %327 = vmatpush1.msra.mxu0 0.0
  %328 = vmatprep.subr.mxu0 0.0
  %329 = vmatpush1.msra.mxu0 0.0
  %330 = vmatprep.subr.mxu0 0.0
  %331 = vmatpush1.msra.mxu0 0.0
  %332 = vmatprep.subr.mxu0 0.0
  %333 = vmatpush1.msra.mxu0 0.0
  %334 = vmatprep.subr.mxu0 0.0
  %335 = vmatpush1.msra.mxu0 0.0
  %336 = vmatprep.subr.mxu0 0.0
  %337 = vmatpush1.msra.mxu0 0.0
  %338 = vmatprep.subr.mxu0 0.0
  %339 = vmatpush1.msra.mxu0 0.0
  %340 = vmatprep.subr.mxu0 0.0
  %341 = vmatpush1.msra.mxu0 0.0
  %342 = vmatprep.subr.mxu0 0.0
  %343 = vmatpush1.msra.mxu0 0.0
  %344 = vmatprep.subr.mxu0 0.0
  %345 = vmatpush1.msra.mxu0 0.0
  %346 = vmatprep.subr.mxu0 0.0
  %347 = vmatpush1.msra.mxu0 0.0
  %348 = vmatprep.subr.mxu0 0.0
  %349 = vmatpush1.msra.mxu0 0.0
  %350 = vmatprep.subr.mxu0 0.0
  %351 = vmatpush1.msra.mxu0 0.0
  %352 = vmatprep.subr.mxu0 0.0
  %353 = vmatpush1.msra.mxu0 0.0
  %354 = vmatprep.subr.mxu0 0.0
  %355 = vmatpush1.msra.mxu0 0.0
  %356 = vmatprep.subr.mxu0 0.0
  %357 = vmatpush1.msra.mxu0 0.0
  %358 = vmatprep.subr.mxu0 0.0
  %359 = vmatpush1.msra.mxu0 0.0
  %360 = vmatprep.subr.mxu0 0.0
  %361 = vmatpush1.msra.mxu0 0.0
  %362 = vmatprep.subr.mxu0 0.0
  %363 = vmatpush1.msra.mxu0 0.0
  %364 = vmatprep.subr.mxu0 0.0
  %365 = vmatpush1.msra.mxu0 0.0
  %366 = vmatprep.subr.mxu0 0.0
  %367 = vmatpush1.msra.mxu0 0.0
  %368 = vmatprep.subr.mxu0 0.0
  %369 = vmatpush1.msra.mxu0 0.0
  %370 = vmatprep.subr.mxu0 0.0
  %371 = vmatpush1.msra.mxu0 0.0
  %372 = vmatprep.subr.mxu0 0.0
  %373 = vmatpush1.msra.mxu0 0.0
  %374 = vmatprep.subr.mxu0 0.0
  %375 = vmatpush1.msra.mxu0 0.0
  %376 = vmatprep.mubr.f32.mxu0 0.0
  %377 = vmatmul.mubr.f32.gmra.mrb[0].mxu0 %v307
  %v378 = vpop.f32.mrb[0].mxu0
  %v379 = vadd.f32 %v40, %v378
  %v380 = vpop.f32.mrb[0].mxu0
  %381 = vmatprep.mubr.f32.mxu0 0.0
  %382 = vmatmul.mubr.f32.gmra.mrb[0].mxu0 %v310
  %v383 = vpop.f32.mrb[0].mxu0
  %v384 = vadd.f32 %v40, %v383
  %v385 = vpop.f32.mrb[0].mxu0
  %386 = vdwg.mxu0
  %v387 = vmul.f32 %v236, 9.227313
  %v388 = vmul.f32 %v237, 9.227313
  %v389 = vmul.f32 %v379, 9.172967
  %v390 = vmul.f32 %v384, 9.172967
  %v391 = vsub.f32 %v387, %v389
  %v392 = vsub.f32 %v388, %v390
  %v393 = vmax.f32 %v391, -1.0
  %v394 = vmax.f32 %v392, -1.0
  %v395 = vmin.f32 %v393, 1.0
  %v396 = vmin.f32 %v394, 1.0
  %v397 = vmul.f32 %v395, 0.06301364
  %v398 = vmul.f32 %v396, 0.06301364
  %v399 = vmul.f32 %v236, 0.746317
  %v400 = vmul.f32 %v237, 0.746317
  %v401 = vadd.f32 %v397, %v399
  %v402 = vadd.f32 %v398, %v400
  %s403 = scalar_lea.vmem %s2, 224
  %v404 = vld [vmem:[%s403] sm:$0xff]
  %v405 = vld [vmem:[%s403 + $0x8] sm:$0xff]
  %v406 = vmul.f32 %v404, 0.327432
  %v407 = vmul.f32 %v405, 0.327432
  %v408 = vadd.f32 %v401, %v406
  %v409 = vadd.f32 %v402, %v407
  %411 = vset.pattern.permute.xlu0 0
  %412 = vperm.xlu0 %411, %v408
  %v413 = vpop.permute.xlu0 %412
  %416 = vset.pattern.permute.xlu0 0
  %417 = vperm.xlu0 %416, %v409
  %v418 = vpop.permute.xlu0 %417
  %v420 = vmul.f32 %v413, %v46
  %v421 = vmul.f32 %v418, %v46
  %422 = vset.pattern.permute.xlu0 1
  %423 = vperm.xlu0 %422, %v408
  %v424 = vpop.permute.xlu0 %423
  %426 = vset.pattern.permute.xlu0 1
  %427 = vperm.xlu0 %426, %v409
  %v428 = vpop.permute.xlu0 %427
  %v430 = vmul.f32 %v424, %v51
  %v431 = vmul.f32 %v428, %v51
  %v432 = vadd.f32 %v420, %v430
  %v433 = vadd.f32 %v421, %v431
  %434 = vset.pattern.permute.xlu0 2
  %435 = vperm.xlu0 %434, %v408
  %v436 = vpop.permute.xlu0 %435
  %438 = vset.pattern.permute.xlu0 2
  %439 = vperm.xlu0 %438, %v409
  %v440 = vpop.permute.xlu0 %439
  %v442 = vmul.f32 %v436, %v56
  %v443 = vmul.f32 %v440, %v56
  %v444 = vadd.f32 %v432, %v442
  %v445 = vadd.f32 %v433, %v443
  %446 = vset.pattern.permute.xlu0 3
  %447 = vperm.xlu0 %446, %v408
  %v448 = vpop.permute.xlu0 %447
  %450 = vset.pattern.permute.xlu0 3
  %451 = vperm.xlu0 %450, %v409
  %v452 = vpop.permute.xlu0 %451
  %v454 = vmul.f32 %v448, %v61
  %v455 = vmul.f32 %v452, %v61
  %v456 = vadd.f32 %v444, %v454
  %v457 = vadd.f32 %v445, %v455
  %s458 = scalar_lea.vmem %s3, 208
  %v459 = vld [vmem:[%s458] sm:$0xff]
  %v460 = vld [vmem:[%s458 + $0x8] sm:$0xff]
  %v461 = vadd.f32 %v456, %v459
  %v462 = vadd.f32 %v457, %v460
  %v463 = vmax.f32 %v461, 0.0
  %v464 = vmax.f32 %v462, 0.0
  %s465 = scalar_lea.vmem %s4, 208
  %v466 = vld [vmem:[%s465] sm:$0xff]
  %v467 = vld [vmem:[%s465 + $0x8] sm:$0xff]
  %v468 = vadd.f32 %v456, %v466
  %v469 = vadd.f32 %v457, %v467
  %v470 = vmax.f32 %v468, 0.0
  %v471 = vmax.f32 %v469, 0.0
  %v472 = vsub.f32 %v463, %v470
  %v473 = vsub.f32 %v464, %v471
  %v474 = vmul.f32 %v128, %v472
  %v475 = vmul.f32 %v128, %v473
  %v476 = vadd.f32 %v470, %v474
  %v477 = vadd.f32 %v471, %v475
  %v479 = vsel %vm133, %v476, 0
  %v482 = vsel %vm133, %v477, 0
  %484 = vmatprep.subr.mxu0 0.0
  %485 = vmatpush1.msra.mxu0 %v31
  %486 = vmatprep.subr.mxu0 0.0
  %487 = vmatpush1.msra.mxu0 %v32
  %488 = vmatprep.subr.mxu0 0.0
  %489 = vmatpush1.msra.mxu0 %v33
  %490 = vmatprep.subr.mxu0 0.0
  %491 = vmatpush1.msra.mxu0 %v34
  %492 = vmatprep.subr.mxu0 0.0
  %493 = vmatpush1.msra.mxu0 0.0
  %494 = vmatprep.subr.mxu0 0.0
  %495 = vmatpush1.msra.mxu0 0.0
  %496 = vmatprep.subr.mxu0 0.0
  %497 = vmatpush1.msra.mxu0 0.0
  %498 = vmatprep.subr.mxu0 0.0
  %499 = vmatpush1.msra.mxu0 0.0
  %500 = vmatprep.subr.mxu0 0.0
  %501 = vmatpush1.msra.mxu0 0.0
  %502 = vmatprep.subr.mxu0 0.0
  %503 = vmatpush1.msra.mxu0 0.0
  %504 = vmatprep.subr.mxu0 0.0
  %505 = vmatpush1.msra.mxu0 0.0
  %506 = vmatprep.subr.mxu0 0.0
  %507 = vmatpush1.msra.mxu0 0.0
  %508 = vmatprep.subr.mxu0 0.0
  %509 = vmatpush1.msra.mxu0 0.0
  %510 = vmatprep.subr.mxu0 0.0
  %511 = vmatpush1.msra.mxu0 0.0
  %512 = vmatprep.subr.mxu0 0.0
  %513 = vmatpush1.msra.mxu0 0.0
  %514 = vmatprep.subr.mxu0 0.0
  %515 = vmatpush1.msra.mxu0 0.0
  %516 = vmatprep.subr.mxu0 0.0
  %517 = vmatpush1.msra.mxu0 0.0
  %518 = vmatprep.subr.mxu0 0.0
  %519 = vmatpush1.msra.mxu0 0.0
  %520 = vmatprep.subr.mxu0 0.0
  %521 = vmatpush1.msra.mxu0 0.0
  %522 = vmatprep.subr.mxu0 0.0
  %523 = vmatpush1.msra.mxu0 0.0
  %524 = vmatprep.subr.mxu0 0.0
  %525 = vmatpush1.msra.mxu0 0.0
  %526 = vmatprep.subr.mxu0 0.0
  %527 = vmatpush1.msra.mxu0 0.0
  %528 = vmatprep.subr.mxu0 0.0
  %529 = vmatpush1.msra.mxu0 0.0
  %530 = vmatprep.subr.mxu0 0.0
  %531 = vmatpush1.msra.mxu0 0.0
  %532 = vmatprep.subr.mxu0 0.0
  %533 = vmatpush1.msra.mxu0 0.0
  %534 = vmatprep.subr.mxu0 0.0
  %535 = vmatpush1.msra.mxu0 0.0
  %536 = vmatprep.subr.mxu0 0.0
  %537 = vmatpush1.msra.mxu0 0.0
  %538 = vmatprep.subr.mxu0 0.0
  %539 = vmatpush1.msra.mxu0 0.0
  %540 = vmatprep.subr.mxu0 0.0
  %541 = vmatpush1.msra.mxu0 0.0
  %542 = vmatprep.subr.mxu0 0.0
  %543 = vmatpush1.msra.mxu0 0.0
  %544 = vmatprep.subr.mxu0 0.0
  %545 = vmatpush1.msra.mxu0 0.0
  %546 = vmatprep.subr.mxu0 0.0
  %547 = vmatpush1.msra.mxu0 0.0
  %548 = vmatprep.mubr.f32.mxu0 0.0
  %549 = vmatmul.mubr.f32.gmra.mrb[0].mxu0 %v479
  %v550 = vpop.f32.mrb[0].mxu0
  %v551 = vadd.f32 %v40, %v550
  %v552 = vpop.f32.mrb[0].mxu0
  %553 = vmatprep.mubr.f32.mxu0 0.0
  %554 = vmatmul.mubr.f32.gmra.mrb[0].mxu0 %v482
  %v555 = vpop.f32.mrb[0].mxu0
  %v556 = vadd.f32 %v40, %v555
  %v557 = vpop.f32.mrb[0].mxu0
  %558 = vdwg.mxu0
  %v559 = vmul.f32 %v408, 6.949515
  %v560 = vmul.f32 %v409, 6.949515
  %v561 = vmul.f32 %v551, 6.877191
  %v562 = vmul.f32 %v556, 6.877191
  %v563 = vsub.f32 %v559, %v561
  %v564 = vsub.f32 %v560, %v562
  %v565 = vmax.f32 %v563, -1.0
  %v566 = vmax.f32 %v564, -1.0
  %v567 = vmin.f32 %v565, 1.0
  %v568 = vmin.f32 %v566, 1.0
  %v569 = vmul.f32 %v567, 0.078536004
  %v570 = vmul.f32 %v568, 0.078536004
  %v571 = vmul.f32 %v408, 0.75654966
  %v572 = vmul.f32 %v409, 0.75654966
  %v573 = vadd.f32 %v569, %v571
  %v574 = vadd.f32 %v570, %v572
  %s575 = scalar_lea.vmem %s2, 208
  %v576 = vld [vmem:[%s575] sm:$0xff]
  %v577 = vld [vmem:[%s575 + $0x8] sm:$0xff]
  %v578 = vmul.f32 %v576, 0.31794864
  %v579 = vmul.f32 %v577, 0.31794864
  %v580 = vadd.f32 %v573, %v578
  %v581 = vadd.f32 %v574, %v579
  %583 = vset.pattern.permute.xlu0 0
  %584 = vperm.xlu0 %583, %v580
  %v585 = vpop.permute.xlu0 %584
  %588 = vset.pattern.permute.xlu0 0
  %589 = vperm.xlu0 %588, %v581
  %v590 = vpop.permute.xlu0 %589
  %v592 = vmul.f32 %v585, %v46
  %v593 = vmul.f32 %v590, %v46
  %594 = vset.pattern.permute.xlu0 1
  %595 = vperm.xlu0 %594, %v580
  %v596 = vpop.permute.xlu0 %595
  %598 = vset.pattern.permute.xlu0 1
  %599 = vperm.xlu0 %598, %v581
  %v600 = vpop.permute.xlu0 %599
  %v602 = vmul.f32 %v596, %v51
  %v603 = vmul.f32 %v600, %v51
  %v604 = vadd.f32 %v592, %v602
  %v605 = vadd.f32 %v593, %v603
  %606 = vset.pattern.permute.xlu0 2
  %607 = vperm.xlu0 %606, %v580
  %v608 = vpop.permute.xlu0 %607
  %610 = vset.pattern.permute.xlu0 2
  %611 = vperm.xlu0 %610, %v581
  %v612 = vpop.permute.xlu0 %611
  %v614 = vmul.f32 %v608, %v56
  %v615 = vmul.f32 %v612, %v56
  %v616 = vadd.f32 %v604, %v614
  %v617 = vadd.f32 %v605, %v615
  %618 = vset.pattern.permute.xlu0 3
  %619 = vperm.xlu0 %618, %v580
  %v620 = vpop.permute.xlu0 %619
  %622 = vset.pattern.permute.xlu0 3
  %623 = vperm.xlu0 %622, %v581
  %v624 = vpop.permute.xlu0 %623
  %v626 = vmul.f32 %v620, %v61
  %v627 = vmul.f32 %v624, %v61
  %v628 = vadd.f32 %v616, %v626
  %v629 = vadd.f32 %v617, %v627
  %s630 = scalar_lea.vmem %s3, 192
  %v631 = vld [vmem:[%s630] sm:$0xff]
  %v632 = vld [vmem:[%s630 + $0x8] sm:$0xff]
  %v633 = vadd.f32 %v628, %v631
  %v634 = vadd.f32 %v629, %v632
  %v635 = vmax.f32 %v633, 0.0
  %v636 = vmax.f32 %v634, 0.0
  %s637 = scalar_lea.vmem %s4, 192
  %v638 = vld [vmem:[%s637] sm:$0xff]
  %v639 = vld [vmem:[%s637 + $0x8] sm:$0xff]
  %v640 = vadd.f32 %v628, %v638
  %v641 = vadd.f32 %v629, %v639
  %v642 = vmax.f32 %v640, 0.0
  %v643 = vmax.f32 %v641, 0.0
  %v644 = vsub.f32 %v635, %v642
  %v645 = vsub.f32 %v636, %v643
  %v646 = vmul.f32 %v128, %v644
  %v647 = vmul.f32 %v128, %v645
  %v648 = vadd.f32 %v642, %v646
  %v649 = vadd.f32 %v643, %v647
  %v651 = vsel %vm133, %v648, 0
  %v654 = vsel %vm133, %v649, 0
  %656 = vmatprep.subr.mxu0 0.0
  %657 = vmatpush1.msra.mxu0 %v31
  %658 = vmatprep.subr.mxu0 0.0
  %659 = vmatpush1.msra.mxu0 %v32
  %660 = vmatprep.subr.mxu0 0.0
  %661 = vmatpush1.msra.mxu0 %v33
  %662 = vmatprep.subr.mxu0 0.0
  %663 = vmatpush1.msra.mxu0 %v34
  %664 = vmatprep.subr.mxu0 0.0
  %665 = vmatpush1.msra.mxu0 0.0
  %666 = vmatprep.subr.mxu0 0.0
  %667 = vmatpush1.msra.mxu0 0.0
  %668 = vmatprep.subr.mxu0 0.0
  %669 = vmatpush1.msra.mxu0 0.0
  %670 = vmatprep.subr.mxu0 0.0
  %671 = vmatpush1.msra.mxu0 0.0
  %672 = vmatprep.subr.mxu0 0.0
  %673 = vmatpush1.msra.mxu0 0.0
  %674 = vmatprep.subr.mxu0 0.0
  %675 = vmatpush1.msra.mxu0 0.0
  %676 = vmatprep.subr.mxu0 0.0
  %677 = vmatpush1.msra.mxu0 0.0
  %678 = vmatprep.subr.mxu0 0.0
  %679 = vmatpush1.msra.mxu0 0.0
  %680 = vmatprep.subr.mxu0 0.0
  %681 = vmatpush1.msra.mxu0 0.0
  %682 = vmatprep.subr.mxu0 0.0
  %683 = vmatpush1.msra.mxu0 0.0
  %684 = vmatprep.subr.mxu0 0.0
  %685 = vmatpush1.msra.mxu0 0.0
  %686 = vmatprep.subr.mxu0 0.0
  %687 = vmatpush1.msra.mxu0 0.0
  %688 = vmatprep.subr.mxu0 0.0
  %689 = vmatpush1.msra.mxu0 0.0
  %690 = vmatprep.subr.mxu0 0.0
  %691 = vmatpush1.msra.mxu0 0.0
  %692 = vmatprep.subr.mxu0 0.0
  %693 = vmatpush1.msra.mxu0 0.0
  %694 = vmatprep.subr.mxu0 0.0
  %695 = vmatpush1.msra.mxu0 0.0
  %696 = vmatprep.subr.mxu0 0.0
  %697 = vmatpush1.msra.mxu0 0.0
  %698 = vmatprep.subr.mxu0 0.0
  %699 = vmatpush1.msra.mxu0 0.0
  %700 = vmatprep.subr.mxu0 0.0
  %701 = vmatpush1.msra.mxu0 0.0
  %702 = vmatprep.subr.mxu0 0.0
  %703 = vmatpush1.msra.mxu0 0.0
  %704 = vmatprep.subr.mxu0 0.0
  %705 = vmatpush1.msra.mxu0 0.0
  %706 = vmatprep.subr.mxu0 0.0
  %707 = vmatpush1.msra.mxu0 0.0
  %708 = vmatprep.subr.mxu0 0.0
  %709 = vmatpush1.msra.mxu0 0.0
  %710 = vmatprep.subr.mxu0 0.0
  %711 = vmatpush1.msra.mxu0 0.0
  %712 = vmatprep.subr.mxu0 0.0
  %713 = vmatpush1.msra.mxu0 0.0
  %714 = vmatprep.subr.mxu0 0.0
  %715 = vmatpush1.msra.mxu0 0.0
  %716 = vmatprep.subr.mxu0 0.0
  %717 = vmatpush1.msra.mxu0 0.0
  %718 = vmatprep.subr.mxu0 0.0
  %719 = vmatpush1.msra.mxu0 0.0
  %720 = vmatprep.mubr.f32.mxu0 0.0
  %721 = vmatmul.mubr.f32.gmra.mrb[0].mxu0 %v651
  %v722 = vpop.f32.mrb[0].mxu0
  %v723 = vadd.f32 %v40, %v722
  %v724 = vpop.f32.mrb[0].mxu0
  %725 = vmatprep.mubr.f32.mxu0 0.0
  %726 = vmatmul.mubr.f32.gmra.mrb[0].mxu0 %v654
  %v727 = vpop.f32.mrb[0].mxu0
  %v728 = vadd.f32 %v40, %v727
  %v729 = vpop.f32.mrb[0].mxu0
  %730 = vdwg.mxu0
  %v731 = vmul.f32 %v580, 5.336189
  %v732 = vmul.f32 %v581, 5.336189
  %v733 = vmul.f32 %v723, 5.2416515
  %v734 = vmul.f32 %v728, 5.2416515
  %v735 = vsub.f32 %v731, %v733
  %v736 = vsub.f32 %v732, %v734
  %v737 = vmax.f32 %v735, -1.0
  %v738 = vmax.f32 %v736, -1.0
  %v739 = vmin.f32 %v737, 1.0
  %v740 = vmin.f32 %v738, 1.0
  %v741 = vmul.f32 %v739, 0.0960526
  %v742 = vmul.f32 %v740, 0.0960526
  %v743 = vmul.f32 %v580, 0.7648419
  %v744 = vmul.f32 %v581, 0.7648419
  %v745 = vadd.f32 %v741, %v743
  %v746 = vadd.f32 %v742, %v744
  %s747 = scalar_lea.vmem %s2, 192
  %v748 = vld [vmem:[%s747] sm:$0xff]
  %v749 = vld [vmem:[%s747 + $0x8] sm:$0xff]
  %v750 = vmul.f32 %v748, 0.30751264
  %v751 = vmul.f32 %v749, 0.30751264
  %v752 = vadd.f32 %v745, %v750
  %v753 = vadd.f32 %v746, %v751
  %755 = vset.pattern.permute.xlu0 0
  %756 = vperm.xlu0 %755, %v752
  %v757 = vpop.permute.xlu0 %756
  %760 = vset.pattern.permute.xlu0 0
  %761 = vperm.xlu0 %760, %v753
  %v762 = vpop.permute.xlu0 %761
  %v764 = vmul.f32 %v757, %v46
  %v765 = vmul.f32 %v762, %v46
  %766 = vset.pattern.permute.xlu0 1
  %767 = vperm.xlu0 %766, %v752
  %v768 = vpop.permute.xlu0 %767
  %770 = vset.pattern.permute.xlu0 1
  %771 = vperm.xlu0 %770, %v753
  %v772 = vpop.permute.xlu0 %771
  %v774 = vmul.f32 %v768, %v51
  %v775 = vmul.f32 %v772, %v51
  %v776 = vadd.f32 %v764, %v774
  %v777 = vadd.f32 %v765, %v775
  %778 = vset.pattern.permute.xlu0 2
  %779 = vperm.xlu0 %778, %v752
  %v780 = vpop.permute.xlu0 %779
  %782 = vset.pattern.permute.xlu0 2
  %783 = vperm.xlu0 %782, %v753
  %v784 = vpop.permute.xlu0 %783
  %v786 = vmul.f32 %v780, %v56
  %v787 = vmul.f32 %v784, %v56
  %v788 = vadd.f32 %v776, %v786
  %v789 = vadd.f32 %v777, %v787
  %790 = vset.pattern.permute.xlu0 3
  %791 = vperm.xlu0 %790, %v752
  %v792 = vpop.permute.xlu0 %791
  %794 = vset.pattern.permute.xlu0 3
  %795 = vperm.xlu0 %794, %v753
  %v796 = vpop.permute.xlu0 %795
  %v798 = vmul.f32 %v792, %v61
  %v799 = vmul.f32 %v796, %v61
  %v800 = vadd.f32 %v788, %v798
  %v801 = vadd.f32 %v789, %v799
  %s802 = scalar_lea.vmem %s3, 176
  %v803 = vld [vmem:[%s802] sm:$0xff]
  %v804 = vld [vmem:[%s802 + $0x8] sm:$0xff]
  %v805 = vadd.f32 %v800, %v803
  %v806 = vadd.f32 %v801, %v804
  %v807 = vmax.f32 %v805, 0.0
  %v808 = vmax.f32 %v806, 0.0
  %s809 = scalar_lea.vmem %s4, 176
  %v810 = vld [vmem:[%s809] sm:$0xff]
  %v811 = vld [vmem:[%s809 + $0x8] sm:$0xff]
  %v812 = vadd.f32 %v800, %v810
  %v813 = vadd.f32 %v801, %v811
  %v814 = vmax.f32 %v812, 0.0
  %v815 = vmax.f32 %v813, 0.0
  %v816 = vsub.f32 %v807, %v814
  %v817 = vsub.f32 %v808, %v815
  %v818 = vmul.f32 %v128, %v816
  %v819 = vmul.f32 %v128, %v817
  %v820 = vadd.f32 %v814, %v818
  %v821 = vadd.f32 %v815, %v819
  %v823 = vsel %vm133, %v820, 0
  %v826 = vsel %vm133, %v821, 0
  %828 = vmatprep.subr.mxu0 0.0
  %829 = vmatpush1.msra.mxu0 %v31
  %830 = vmatprep.subr.mxu0 0.0
  %831 = vmatpush1.msra.mxu0 %v32
  %832 = vmatprep.subr.mxu0 0.0
  %833 = vmatpush1.msra.mxu0 %v33
  %834 = vmatprep.subr.mxu0 0.0
  %835 = vmatpush1.msra.mxu0 %v34
  %836 = vmatprep.subr.mxu0 0.0
  %837 = vmatpush1.msra.mxu0 0.0
  %838 = vmatprep.subr.mxu0 0.0
  %839 = vmatpush1.msra.mxu0 0.0
  %840 = vmatprep.subr.mxu0 0.0
  %841 = vmatpush1.msra.mxu0 0.0
  %842 = vmatprep.subr.mxu0 0.0
  %843 = vmatpush1.msra.mxu0 0.0
  %844 = vmatprep.subr.mxu0 0.0
  %845 = vmatpush1.msra.mxu0 0.0
  %846 = vmatprep.subr.mxu0 0.0
  %847 = vmatpush1.msra.mxu0 0.0
  %848 = vmatprep.subr.mxu0 0.0
  %849 = vmatpush1.msra.mxu0 0.0
  %850 = vmatprep.subr.mxu0 0.0
  %851 = vmatpush1.msra.mxu0 0.0
  %852 = vmatprep.subr.mxu0 0.0
  %853 = vmatpush1.msra.mxu0 0.0
  %854 = vmatprep.subr.mxu0 0.0
  %855 = vmatpush1.msra.mxu0 0.0
  %856 = vmatprep.subr.mxu0 0.0
  %857 = vmatpush1.msra.mxu0 0.0
  %858 = vmatprep.subr.mxu0 0.0
  %859 = vmatpush1.msra.mxu0 0.0
  %860 = vmatprep.subr.mxu0 0.0
  %861 = vmatpush1.msra.mxu0 0.0
  %862 = vmatprep.subr.mxu0 0.0
  %863 = vmatpush1.msra.mxu0 0.0
  %864 = vmatprep.subr.mxu0 0.0
  %865 = vmatpush1.msra.mxu0 0.0
  %866 = vmatprep.subr.mxu0 0.0
  %867 = vmatpush1.msra.mxu0 0.0
  %868 = vmatprep.subr.mxu0 0.0
  %869 = vmatpush1.msra.mxu0 0.0
  %870 = vmatprep.subr.mxu0 0.0
  %871 = vmatpush1.msra.mxu0 0.0
  %872 = vmatprep.subr.mxu0 0.0
  %873 = vmatpush1.msra.mxu0 0.0
  %874 = vmatprep.subr.mxu0 0.0
  %875 = vmatpush1.msra.mxu0 0.0
  %876 = vmatprep.subr.mxu0 0.0
  %877 = vmatpush1.msra.mxu0 0.0
  %878 = vmatprep.subr.mxu0 0.0
  %879 = vmatpush1.msra.mxu0 0.0
  %880 = vmatprep.subr.mxu0 0.0
  %881 = vmatpush1.msra.mxu0 0.0
  %882 = vmatprep.subr.mxu0 0.0
  %883 = vmatpush1.msra.mxu0 0.0
  %884 = vmatprep.subr.mxu0 0.0
  %885 = vmatpush1.msra.mxu0 0.0
  %886 = vmatprep.subr.mxu0 0.0
  %887 = vmatpush1.msra.mxu0 0.0
  %888 = vmatprep.subr.mxu0 0.0
  %889 = vmatpush1.msra.mxu0 0.0
  %890 = vmatprep.subr.mxu0 0.0
  %891 = vmatpush1.msra.mxu0 0.0
  %892 = vmatprep.mubr.f32.mxu0 0.0
  %893 = vmatmul.mubr.f32.gmra.mrb[0].mxu0 %v823
  %v894 = vpop.f32.mrb[0].mxu0
  %v895 = vadd.f32 %v40, %v894
  %v896 = vpop.f32.mrb[0].mxu0
  %897 = vmatprep.mubr.f32.mxu0 0.0
  %898 = vmatmul.mubr.f32.gmra.mrb[0].mxu0 %v826
  %v899 = vpop.f32.mrb[0].mxu0
  %v900 = vadd.f32 %v40, %v899
  %v901 = vpop.f32.mrb[0].mxu0
  %902 = vdwg.mxu0
  %v903 = vmul.f32 %v752, 4.1773934
  %v904 = vmul.f32 %v753, 4.1773934
  %v905 = vmul.f32 %v895, 4.055936
  %v906 = vmul.f32 %v900, 4.055936
  %v907 = vsub.f32 %v903, %v905
  %v908 = vsub.f32 %v904, %v906
  %v909 = vmax.f32 %v907, -1.0
  %v910 = vmax.f32 %v908, -1.0
  %v911 = vmin.f32 %v909, 1.0
  %v912 = vmin.f32 %v910, 1.0
  %v913 = vmul.f32 %v911, 0.11549182
  %v914 = vmul.f32 %v912, 0.11549182
  %v915 = vmul.f32 %v752, 0.77047956
  %v916 = vmul.f32 %v753, 0.77047956
  %v917 = vadd.f32 %v913, %v915
  %v918 = vadd.f32 %v914, %v916
  %s919 = scalar_lea.vmem %s2, 176
  %v920 = vld [vmem:[%s919] sm:$0xff]
  %v921 = vld [vmem:[%s919 + $0x8] sm:$0xff]
  %v922 = vmul.f32 %v920, 0.2959815
  %v923 = vmul.f32 %v921, 0.2959815
  %v924 = vadd.f32 %v917, %v922
  %v925 = vadd.f32 %v918, %v923
  %927 = vset.pattern.permute.xlu0 0
  %928 = vperm.xlu0 %927, %v924
  %v929 = vpop.permute.xlu0 %928
  %932 = vset.pattern.permute.xlu0 0
  %933 = vperm.xlu0 %932, %v925
  %v934 = vpop.permute.xlu0 %933
  %v936 = vmul.f32 %v929, %v46
  %v937 = vmul.f32 %v934, %v46
  %938 = vset.pattern.permute.xlu0 1
  %939 = vperm.xlu0 %938, %v924
  %v940 = vpop.permute.xlu0 %939
  %942 = vset.pattern.permute.xlu0 1
  %943 = vperm.xlu0 %942, %v925
  %v944 = vpop.permute.xlu0 %943
  %v946 = vmul.f32 %v940, %v51
  %v947 = vmul.f32 %v944, %v51
  %v948 = vadd.f32 %v936, %v946
  %v949 = vadd.f32 %v937, %v947
  %950 = vset.pattern.permute.xlu0 2
  %951 = vperm.xlu0 %950, %v924
  %v952 = vpop.permute.xlu0 %951
  %954 = vset.pattern.permute.xlu0 2
  %955 = vperm.xlu0 %954, %v925
  %v956 = vpop.permute.xlu0 %955
  %v958 = vmul.f32 %v952, %v56
  %v959 = vmul.f32 %v956, %v56
  %v960 = vadd.f32 %v948, %v958
  %v961 = vadd.f32 %v949, %v959
  %962 = vset.pattern.permute.xlu0 3
  %963 = vperm.xlu0 %962, %v924
  %v964 = vpop.permute.xlu0 %963
  %966 = vset.pattern.permute.xlu0 3
  %967 = vperm.xlu0 %966, %v925
  %v968 = vpop.permute.xlu0 %967
  %v970 = vmul.f32 %v964, %v61
  %v971 = vmul.f32 %v968, %v61
  %v972 = vadd.f32 %v960, %v970
  %v973 = vadd.f32 %v961, %v971
  %s974 = scalar_lea.vmem %s3, 160
  %v975 = vld [vmem:[%s974] sm:$0xff]
  %v976 = vld [vmem:[%s974 + $0x8] sm:$0xff]
  %v977 = vadd.f32 %v972, %v975
  %v978 = vadd.f32 %v973, %v976
  %v979 = vmax.f32 %v977, 0.0
  %v980 = vmax.f32 %v978, 0.0
  %s981 = scalar_lea.vmem %s4, 160
  %v982 = vld [vmem:[%s981] sm:$0xff]
  %v983 = vld [vmem:[%s981 + $0x8] sm:$0xff]
  %v984 = vadd.f32 %v972, %v982
  %v985 = vadd.f32 %v973, %v983
  %v986 = vmax.f32 %v984, 0.0
  %v987 = vmax.f32 %v985, 0.0
  %v988 = vsub.f32 %v979, %v986
  %v989 = vsub.f32 %v980, %v987
  %v990 = vmul.f32 %v128, %v988
  %v991 = vmul.f32 %v128, %v989
  %v992 = vadd.f32 %v986, %v990
  %v993 = vadd.f32 %v987, %v991
  %v995 = vsel %vm133, %v992, 0
  %v998 = vsel %vm133, %v993, 0
  %1000 = vmatprep.subr.mxu0 0.0
  %1001 = vmatpush1.msra.mxu0 %v31
  %1002 = vmatprep.subr.mxu0 0.0
  %1003 = vmatpush1.msra.mxu0 %v32
  %1004 = vmatprep.subr.mxu0 0.0
  %1005 = vmatpush1.msra.mxu0 %v33
  %1006 = vmatprep.subr.mxu0 0.0
  %1007 = vmatpush1.msra.mxu0 %v34
  %1008 = vmatprep.subr.mxu0 0.0
  %1009 = vmatpush1.msra.mxu0 0.0
  %1010 = vmatprep.subr.mxu0 0.0
  %1011 = vmatpush1.msra.mxu0 0.0
  %1012 = vmatprep.subr.mxu0 0.0
  %1013 = vmatpush1.msra.mxu0 0.0
  %1014 = vmatprep.subr.mxu0 0.0
  %1015 = vmatpush1.msra.mxu0 0.0
  %1016 = vmatprep.subr.mxu0 0.0
  %1017 = vmatpush1.msra.mxu0 0.0
  %1018 = vmatprep.subr.mxu0 0.0
  %1019 = vmatpush1.msra.mxu0 0.0
  %1020 = vmatprep.subr.mxu0 0.0
  %1021 = vmatpush1.msra.mxu0 0.0
  %1022 = vmatprep.subr.mxu0 0.0
  %1023 = vmatpush1.msra.mxu0 0.0
  %1024 = vmatprep.subr.mxu0 0.0
  %1025 = vmatpush1.msra.mxu0 0.0
  %1026 = vmatprep.subr.mxu0 0.0
  %1027 = vmatpush1.msra.mxu0 0.0
  %1028 = vmatprep.subr.mxu0 0.0
  %1029 = vmatpush1.msra.mxu0 0.0
  %1030 = vmatprep.subr.mxu0 0.0
  %1031 = vmatpush1.msra.mxu0 0.0
  %1032 = vmatprep.subr.mxu0 0.0
  %1033 = vmatpush1.msra.mxu0 0.0
  %1034 = vmatprep.subr.mxu0 0.0
  %1035 = vmatpush1.msra.mxu0 0.0
  %1036 = vmatprep.subr.mxu0 0.0
  %1037 = vmatpush1.msra.mxu0 0.0
  %1038 = vmatprep.subr.mxu0 0.0
  %1039 = vmatpush1.msra.mxu0 0.0
  %1040 = vmatprep.subr.mxu0 0.0
  %1041 = vmatpush1.msra.mxu0 0.0
  %1042 = vmatprep.subr.mxu0 0.0
  %1043 = vmatpush1.msra.mxu0 0.0
  %1044 = vmatprep.subr.mxu0 0.0
  %1045 = vmatpush1.msra.mxu0 0.0
  %1046 = vmatprep.subr.mxu0 0.0
  %1047 = vmatpush1.msra.mxu0 0.0
  %1048 = vmatprep.subr.mxu0 0.0
  %1049 = vmatpush1.msra.mxu0 0.0
  %1050 = vmatprep.subr.mxu0 0.0
  %1051 = vmatpush1.msra.mxu0 0.0
  %1052 = vmatprep.subr.mxu0 0.0
  %1053 = vmatpush1.msra.mxu0 0.0
  %1054 = vmatprep.subr.mxu0 0.0
  %1055 = vmatpush1.msra.mxu0 0.0
  %1056 = vmatprep.subr.mxu0 0.0
  %1057 = vmatpush1.msra.mxu0 0.0
  %1058 = vmatprep.subr.mxu0 0.0
  %1059 = vmatpush1.msra.mxu0 0.0
  %1060 = vmatprep.subr.mxu0 0.0
  %1061 = vmatpush1.msra.mxu0 0.0
  %1062 = vmatprep.subr.mxu0 0.0
  %1063 = vmatpush1.msra.mxu0 0.0
  %1064 = vmatprep.mubr.f32.mxu0 0.0
  %1065 = vmatmul.mubr.f32.gmra.mrb[0].mxu0 %v995
  %v1066 = vpop.f32.mrb[0].mxu0
  %v1067 = vadd.f32 %v40, %v1066
  %v1068 = vpop.f32.mrb[0].mxu0
  %1069 = vmatprep.mubr.f32.mxu0 0.0
  %1070 = vmatmul.mubr.f32.gmra.mrb[0].mxu0 %v998
  %v1071 = vpop.f32.mrb[0].mxu0
  %v1072 = vadd.f32 %v40, %v1071
  %v1073 = vpop.f32.mrb[0].mxu0
  %1074 = vdwg.mxu0
  %v1075 = vmul.f32 %v924, 3.334088
  %v1076 = vmul.f32 %v925, 3.334088
  %v1077 = vmul.f32 %v1067, 3.1805885
  %v1078 = vmul.f32 %v1072, 3.1805885
  %v1079 = vsub.f32 %v1075, %v1077
  %v1080 = vsub.f32 %v1076, %v1078
  %v1081 = vmax.f32 %v1079, -1.0
  %v1082 = vmax.f32 %v1080, -1.0
  %v1083 = vmin.f32 %v1081, 1.0
  %v1084 = vmin.f32 %v1082, 1.0
  %v1085 = vmul.f32 %v1083, 0.13685232
  %v1086 = vmul.f32 %v1084, 0.13685232
  %v1087 = vmul.f32 %v924, 0.7726627
  %v1088 = vmul.f32 %v925, 0.7726627
  %v1089 = vadd.f32 %v1085, %v1087
  %v1090 = vadd.f32 %v1086, %v1088
  %s1091 = scalar_lea.vmem %s2, 160
  %v1092 = vld [vmem:[%s1091] sm:$0xff]
  %v1093 = vld [vmem:[%s1091 + $0x8] sm:$0xff]
  %v1094 = vmul.f32 %v1092, 0.28321093
  %v1095 = vmul.f32 %v1093, 0.28321093
  %v1096 = vadd.f32 %v1089, %v1094
  %v1097 = vadd.f32 %v1090, %v1095
  %1099 = vset.pattern.permute.xlu0 0
  %1100 = vperm.xlu0 %1099, %v1096
  %v1101 = vpop.permute.xlu0 %1100
  %1104 = vset.pattern.permute.xlu0 0
  %1105 = vperm.xlu0 %1104, %v1097
  %v1106 = vpop.permute.xlu0 %1105
  %v1108 = vmul.f32 %v1101, %v46
  %v1109 = vmul.f32 %v1106, %v46
  %1110 = vset.pattern.permute.xlu0 1
  %1111 = vperm.xlu0 %1110, %v1096
  %v1112 = vpop.permute.xlu0 %1111
  %1114 = vset.pattern.permute.xlu0 1
  %1115 = vperm.xlu0 %1114, %v1097
  %v1116 = vpop.permute.xlu0 %1115
  %v1118 = vmul.f32 %v1112, %v51
  %v1119 = vmul.f32 %v1116, %v51
  %v1120 = vadd.f32 %v1108, %v1118
  %v1121 = vadd.f32 %v1109, %v1119
  %1122 = vset.pattern.permute.xlu0 2
  %1123 = vperm.xlu0 %1122, %v1096
  %v1124 = vpop.permute.xlu0 %1123
  %1126 = vset.pattern.permute.xlu0 2
  %1127 = vperm.xlu0 %1126, %v1097
  %v1128 = vpop.permute.xlu0 %1127
  %v1130 = vmul.f32 %v1124, %v56
  %v1131 = vmul.f32 %v1128, %v56
  %v1132 = vadd.f32 %v1120, %v1130
  %v1133 = vadd.f32 %v1121, %v1131
  %1134 = vset.pattern.permute.xlu0 3
  %1135 = vperm.xlu0 %1134, %v1096
  %v1136 = vpop.permute.xlu0 %1135
  %1138 = vset.pattern.permute.xlu0 3
  %1139 = vperm.xlu0 %1138, %v1097
  %v1140 = vpop.permute.xlu0 %1139
  %v1142 = vmul.f32 %v1136, %v61
  %v1143 = vmul.f32 %v1140, %v61
  %v1144 = vadd.f32 %v1132, %v1142
  %v1145 = vadd.f32 %v1133, %v1143
  %s1146 = scalar_lea.vmem %s3, 144
  %v1147 = vld [vmem:[%s1146] sm:$0xff]
  %v1148 = vld [vmem:[%s1146 + $0x8] sm:$0xff]
  %v1149 = vadd.f32 %v1144, %v1147
  %v1150 = vadd.f32 %v1145, %v1148
  %v1151 = vmax.f32 %v1149, 0.0
  %v1152 = vmax.f32 %v1150, 0.0
  %s1153 = scalar_lea.vmem %s4, 144
  %v1154 = vld [vmem:[%s1153] sm:$0xff]
  %v1155 = vld [vmem:[%s1153 + $0x8] sm:$0xff]
  %v1156 = vadd.f32 %v1144, %v1154
  %v1157 = vadd.f32 %v1145, %v1155
  %v1158 = vmax.f32 %v1156, 0.0
  %v1159 = vmax.f32 %v1157, 0.0
  %v1160 = vsub.f32 %v1151, %v1158
  %v1161 = vsub.f32 %v1152, %v1159
  %v1162 = vmul.f32 %v128, %v1160
  %v1163 = vmul.f32 %v128, %v1161
  %v1164 = vadd.f32 %v1158, %v1162
  %v1165 = vadd.f32 %v1159, %v1163
  %v1167 = vsel %vm133, %v1164, 0
  %v1170 = vsel %vm133, %v1165, 0
  %1172 = vmatprep.subr.mxu0 0.0
  %1173 = vmatpush1.msra.mxu0 %v31
  %1174 = vmatprep.subr.mxu0 0.0
  %1175 = vmatpush1.msra.mxu0 %v32
  %1176 = vmatprep.subr.mxu0 0.0
  %1177 = vmatpush1.msra.mxu0 %v33
  %1178 = vmatprep.subr.mxu0 0.0
  %1179 = vmatpush1.msra.mxu0 %v34
  %1180 = vmatprep.subr.mxu0 0.0
  %1181 = vmatpush1.msra.mxu0 0.0
  %1182 = vmatprep.subr.mxu0 0.0
  %1183 = vmatpush1.msra.mxu0 0.0
  %1184 = vmatprep.subr.mxu0 0.0
  %1185 = vmatpush1.msra.mxu0 0.0
  %1186 = vmatprep.subr.mxu0 0.0
  %1187 = vmatpush1.msra.mxu0 0.0
  %1188 = vmatprep.subr.mxu0 0.0
  %1189 = vmatpush1.msra.mxu0 0.0
  %1190 = vmatprep.subr.mxu0 0.0
  %1191 = vmatpush1.msra.mxu0 0.0
  %1192 = vmatprep.subr.mxu0 0.0
  %1193 = vmatpush1.msra.mxu0 0.0
  %1194 = vmatprep.subr.mxu0 0.0
  %1195 = vmatpush1.msra.mxu0 0.0
  %1196 = vmatprep.subr.mxu0 0.0
  %1197 = vmatpush1.msra.mxu0 0.0
  %1198 = vmatprep.subr.mxu0 0.0
  %1199 = vmatpush1.msra.mxu0 0.0
  %1200 = vmatprep.subr.mxu0 0.0
  %1201 = vmatpush1.msra.mxu0 0.0
  %1202 = vmatprep.subr.mxu0 0.0
  %1203 = vmatpush1.msra.mxu0 0.0
  %1204 = vmatprep.subr.mxu0 0.0
  %1205 = vmatpush1.msra.mxu0 0.0
  %1206 = vmatprep.subr.mxu0 0.0
  %1207 = vmatpush1.msra.mxu0 0.0
  %1208 = vmatprep.subr.mxu0 0.0
  %1209 = vmatpush1.msra.mxu0 0.0
  %1210 = vmatprep.subr.mxu0 0.0
  %1211 = vmatpush1.msra.mxu0 0.0
  %1212 = vmatprep.subr.mxu0 0.0
  %1213 = vmatpush1.msra.mxu0 0.0
  %1214 = vmatprep.subr.mxu0 0.0
  %1215 = vmatpush1.msra.mxu0 0.0
  %1216 = vmatprep.subr.mxu0 0.0
  %1217 = vmatpush1.msra.mxu0 0.0
  %1218 = vmatprep.subr.mxu0 0.0
  %1219 = vmatpush1.msra.mxu0 0.0
  %1220 = vmatprep.subr.mxu0 0.0
  %1221 = vmatpush1.msra.mxu0 0.0
  %1222 = vmatprep.subr.mxu0 0.0
  %1223 = vmatpush1.msra.mxu0 0.0
  %1224 = vmatprep.subr.mxu0 0.0
  %1225 = vmatpush1.msra.mxu0 0.0
  %1226 = vmatprep.subr.mxu0 0.0
  %1227 = vmatpush1.msra.mxu0 0.0
  %1228 = vmatprep.subr.mxu0 0.0
  %1229 = vmatpush1.msra.mxu0 0.0
  %1230 = vmatprep.subr.mxu0 0.0
  %1231 = vmatpush1.msra.mxu0 0.0
  %1232 = vmatprep.subr.mxu0 0.0
  %1233 = vmatpush1.msra.mxu0 0.0
  %1234 = vmatprep.subr.mxu0 0.0
  %1235 = vmatpush1.msra.mxu0 0.0
  %1236 = vmatprep.mubr.f32.mxu0 0.0
  %1237 = vmatmul.mubr.f32.gmra.mrb[0].mxu0 %v1167
  %v1238 = vpop.f32.mrb[0].mxu0
  %v1239 = vadd.f32 %v40, %v1238
  %v1240 = vpop.f32.mrb[0].mxu0
  %1241 = vmatprep.mubr.f32.mxu0 0.0
  %1242 = vmatmul.mubr.f32.gmra.mrb[0].mxu0 %v1170
  %v1243 = vpop.f32.mrb[0].mxu0
  %v1244 = vadd.f32 %v40, %v1243
  %v1245 = vpop.f32.mrb[0].mxu0
  %1246 = vdwg.mxu0
  %v1247 = vmul.f32 %v1096, 2.712978
  %v1248 = vmul.f32 %v1097, 2.712978
  %v1249 = vmul.f32 %v1239, 2.5219533
  %v1250 = vmul.f32 %v1244, 2.5219533
  %v1251 = vsub.f32 %v1247, %v1249
  %v1252 = vsub.f32 %v1248, %v1250
  %v1253 = vmax.f32 %v1251, -1.0
  %v1254 = vmax.f32 %v1252, -1.0
  %v1255 = vmin.f32 %v1253, 1.0
  %v1256 = vmin.f32 %v1254, 1.0
  %v1257 = vmul.f32 %v1255, 0.16030253
  %v1258 = vmul.f32 %v1256, 0.16030253
  %v1259 = vmul.f32 %v1096, 0.7705087
  %v1260 = vmul.f32 %v1097, 0.7705087
  %v1261 = vadd.f32 %v1257, %v1259
  %v1262 = vadd.f32 %v1258, %v1260
  %s1263 = scalar_lea.vmem %s2, 144
  %v1264 = vld [vmem:[%s1263] sm:$0xff]
  %v1265 = vld [vmem:[%s1263 + $0x8] sm:$0xff]
  %v1266 = vmul.f32 %v1264, 0.26905614
  %v1267 = vmul.f32 %v1265, 0.26905614
  %v1268 = vadd.f32 %v1261, %v1266
  %v1269 = vadd.f32 %v1262, %v1267
  %1271 = vset.pattern.permute.xlu0 0
  %1272 = vperm.xlu0 %1271, %v1268
  %v1273 = vpop.permute.xlu0 %1272
  %1276 = vset.pattern.permute.xlu0 0
  %1277 = vperm.xlu0 %1276, %v1269
  %v1278 = vpop.permute.xlu0 %1277
  %v1280 = vmul.f32 %v1273, %v46
  %v1281 = vmul.f32 %v1278, %v46
  %1282 = vset.pattern.permute.xlu0 1
  %1283 = vperm.xlu0 %1282, %v1268
  %v1284 = vpop.permute.xlu0 %1283
  %1286 = vset.pattern.permute.xlu0 1
  %1287 = vperm.xlu0 %1286, %v1269
  %v1288 = vpop.permute.xlu0 %1287
  %v1290 = vmul.f32 %v1284, %v51
  %v1291 = vmul.f32 %v1288, %v51
  %v1292 = vadd.f32 %v1280, %v1290
  %v1293 = vadd.f32 %v1281, %v1291
  %1294 = vset.pattern.permute.xlu0 2
  %1295 = vperm.xlu0 %1294, %v1268
  %v1296 = vpop.permute.xlu0 %1295
  %1298 = vset.pattern.permute.xlu0 2
  %1299 = vperm.xlu0 %1298, %v1269
  %v1300 = vpop.permute.xlu0 %1299
  %v1302 = vmul.f32 %v1296, %v56
  %v1303 = vmul.f32 %v1300, %v56
  %v1304 = vadd.f32 %v1292, %v1302
  %v1305 = vadd.f32 %v1293, %v1303
  %1306 = vset.pattern.permute.xlu0 3
  %1307 = vperm.xlu0 %1306, %v1268
  %v1308 = vpop.permute.xlu0 %1307
  %1310 = vset.pattern.permute.xlu0 3
  %1311 = vperm.xlu0 %1310, %v1269
  %v1312 = vpop.permute.xlu0 %1311
  %v1314 = vmul.f32 %v1308, %v61
  %v1315 = vmul.f32 %v1312, %v61
  %v1316 = vadd.f32 %v1304, %v1314
  %v1317 = vadd.f32 %v1305, %v1315
  %s1318 = scalar_lea.vmem %s3, 128
  %v1319 = vld [vmem:[%s1318] sm:$0xff]
  %v1320 = vld [vmem:[%s1318 + $0x8] sm:$0xff]
  %v1321 = vadd.f32 %v1316, %v1319
  %v1322 = vadd.f32 %v1317, %v1320
  %v1323 = vmax.f32 %v1321, 0.0
  %v1324 = vmax.f32 %v1322, 0.0
  %s1325 = scalar_lea.vmem %s4, 128
  %v1326 = vld [vmem:[%s1325] sm:$0xff]
  %v1327 = vld [vmem:[%s1325 + $0x8] sm:$0xff]
  %v1328 = vadd.f32 %v1316, %v1326
  %v1329 = vadd.f32 %v1317, %v1327
  %v1330 = vmax.f32 %v1328, 0.0
  %v1331 = vmax.f32 %v1329, 0.0
  %v1332 = vsub.f32 %v1323, %v1330
  %v1333 = vsub.f32 %v1324, %v1331
  %v1334 = vmul.f32 %v128, %v1332
  %v1335 = vmul.f32 %v128, %v1333
  %v1336 = vadd.f32 %v1330, %v1334
  %v1337 = vadd.f32 %v1331, %v1335
  %v1339 = vsel %vm133, %v1336, 0
  %v1342 = vsel %vm133, %v1337, 0
  %1344 = vmatprep.subr.mxu0 0.0
  %1345 = vmatpush1.msra.mxu0 %v31
  %1346 = vmatprep.subr.mxu0 0.0
  %1347 = vmatpush1.msra.mxu0 %v32
  %1348 = vmatprep.subr.mxu0 0.0
  %1349 = vmatpush1.msra.mxu0 %v33
  %1350 = vmatprep.subr.mxu0 0.0
  %1351 = vmatpush1.msra.mxu0 %v34
  %1352 = vmatprep.subr.mxu0 0.0
  %1353 = vmatpush1.msra.mxu0 0.0
  %1354 = vmatprep.subr.mxu0 0.0
  %1355 = vmatpush1.msra.mxu0 0.0
  %1356 = vmatprep.subr.mxu0 0.0
  %1357 = vmatpush1.msra.mxu0 0.0
  %1358 = vmatprep.subr.mxu0 0.0
  %1359 = vmatpush1.msra.mxu0 0.0
  %1360 = vmatprep.subr.mxu0 0.0
  %1361 = vmatpush1.msra.mxu0 0.0
  %1362 = vmatprep.subr.mxu0 0.0
  %1363 = vmatpush1.msra.mxu0 0.0
  %1364 = vmatprep.subr.mxu0 0.0
  %1365 = vmatpush1.msra.mxu0 0.0
  %1366 = vmatprep.subr.mxu0 0.0
  %1367 = vmatpush1.msra.mxu0 0.0
  %1368 = vmatprep.subr.mxu0 0.0
  %1369 = vmatpush1.msra.mxu0 0.0
  %1370 = vmatprep.subr.mxu0 0.0
  %1371 = vmatpush1.msra.mxu0 0.0
  %1372 = vmatprep.subr.mxu0 0.0
  %1373 = vmatpush1.msra.mxu0 0.0
  %1374 = vmatprep.subr.mxu0 0.0
  %1375 = vmatpush1.msra.mxu0 0.0
  %1376 = vmatprep.subr.mxu0 0.0
  %1377 = vmatpush1.msra.mxu0 0.0
  %1378 = vmatprep.subr.mxu0 0.0
  %1379 = vmatpush1.msra.mxu0 0.0
  %1380 = vmatprep.subr.mxu0 0.0
  %1381 = vmatpush1.msra.mxu0 0.0
  %1382 = vmatprep.subr.mxu0 0.0
  %1383 = vmatpush1.msra.mxu0 0.0
  %1384 = vmatprep.subr.mxu0 0.0
  %1385 = vmatpush1.msra.mxu0 0.0
  %1386 = vmatprep.subr.mxu0 0.0
  %1387 = vmatpush1.msra.mxu0 0.0
  %1388 = vmatprep.subr.mxu0 0.0
  %1389 = vmatpush1.msra.mxu0 0.0
  %1390 = vmatprep.subr.mxu0 0.0
  %1391 = vmatpush1.msra.mxu0 0.0
  %1392 = vmatprep.subr.mxu0 0.0
  %1393 = vmatpush1.msra.mxu0 0.0
  %1394 = vmatprep.subr.mxu0 0.0
  %1395 = vmatpush1.msra.mxu0 0.0
  %1396 = vmatprep.subr.mxu0 0.0
  %1397 = vmatpush1.msra.mxu0 0.0
  %1398 = vmatprep.subr.mxu0 0.0
  %1399 = vmatpush1.msra.mxu0 0.0
  %1400 = vmatprep.subr.mxu0 0.0
  %1401 = vmatpush1.msra.mxu0 0.0
  %1402 = vmatprep.subr.mxu0 0.0
  %1403 = vmatpush1.msra.mxu0 0.0
  %1404 = vmatprep.subr.mxu0 0.0
  %1405 = vmatpush1.msra.mxu0 0.0
  %1406 = vmatprep.subr.mxu0 0.0
  %1407 = vmatpush1.msra.mxu0 0.0
  %1408 = vmatprep.mubr.f32.mxu0 0.0
  %1409 = vmatmul.mubr.f32.gmra.mrb[0].mxu0 %v1339
  %v1410 = vpop.f32.mrb[0].mxu0
  %v1411 = vadd.f32 %v40, %v1410
  %v1412 = vpop.f32.mrb[0].mxu0
  %1413 = vmatprep.mubr.f32.mxu0 0.0
  %1414 = vmatmul.mubr.f32.gmra.mrb[0].mxu0 %v1342
  %v1415 = vpop.f32.mrb[0].mxu0
  %v1416 = vadd.f32 %v40, %v1415
  %v1417 = vpop.f32.mrb[0].mxu0
  %1418 = vdwg.mxu0
  %v1419 = vmul.f32 %v1268, 2.2506757
  %v1420 = vmul.f32 %v1269, 2.2506757
  %v1421 = vmul.f32 %v1411, 2.0163186
  %v1422 = vmul.f32 %v1416, 2.0163186
  %v1423 = vsub.f32 %v1419, %v1421
  %v1424 = vsub.f32 %v1420, %v1422
  %v1425 = vmax.f32 %v1423, -1.0
  %v1426 = vmax.f32 %v1424, -1.0
  %v1427 = vmin.f32 %v1425, 1.0
  %v1428 = vmin.f32 %v1426, 1.0
  %v1429 = vmul.f32 %v1427, 0.18630184
  %v1430 = vmul.f32 %v1428, 0.18630184
  %v1431 = vmul.f32 %v1268, 0.7630172
  %v1432 = vmul.f32 %v1269, 0.7630172
  %v1433 = vadd.f32 %v1429, %v1431
  %v1434 = vadd.f32 %v1430, %v1432
  %s1435 = scalar_lea.vmem %s2, 128
  %v1436 = vld [vmem:[%s1435] sm:$0xff]
  %v1437 = vld [vmem:[%s1435 + $0x8] sm:$0xff]
  %v1438 = vmul.f32 %v1436, 0.25336605
  %v1439 = vmul.f32 %v1437, 0.25336605
  %v1440 = vadd.f32 %v1433, %v1438
  %v1441 = vadd.f32 %v1434, %v1439
  %1443 = vset.pattern.permute.xlu0 0
  %1444 = vperm.xlu0 %1443, %v1440
  %v1445 = vpop.permute.xlu0 %1444
  %1448 = vset.pattern.permute.xlu0 0
  %1449 = vperm.xlu0 %1448, %v1441
  %v1450 = vpop.permute.xlu0 %1449
  %v1452 = vmul.f32 %v1445, %v46
  %v1453 = vmul.f32 %v1450, %v46
  %1454 = vset.pattern.permute.xlu0 1
  %1455 = vperm.xlu0 %1454, %v1440
  %v1456 = vpop.permute.xlu0 %1455
  %1458 = vset.pattern.permute.xlu0 1
  %1459 = vperm.xlu0 %1458, %v1441
  %v1460 = vpop.permute.xlu0 %1459
  %v1462 = vmul.f32 %v1456, %v51
  %v1463 = vmul.f32 %v1460, %v51
  %v1464 = vadd.f32 %v1452, %v1462
  %v1465 = vadd.f32 %v1453, %v1463
  %1466 = vset.pattern.permute.xlu0 2
  %1467 = vperm.xlu0 %1466, %v1440
  %v1468 = vpop.permute.xlu0 %1467
  %1470 = vset.pattern.permute.xlu0 2
  %1471 = vperm.xlu0 %1470, %v1441
  %v1472 = vpop.permute.xlu0 %1471
  %v1474 = vmul.f32 %v1468, %v56
  %v1475 = vmul.f32 %v1472, %v56
  %v1476 = vadd.f32 %v1464, %v1474
  %v1477 = vadd.f32 %v1465, %v1475
  %1478 = vset.pattern.permute.xlu0 3
  %1479 = vperm.xlu0 %1478, %v1440
  %v1480 = vpop.permute.xlu0 %1479
  %1482 = vset.pattern.permute.xlu0 3
  %1483 = vperm.xlu0 %1482, %v1441
  %v1484 = vpop.permute.xlu0 %1483
  %v1486 = vmul.f32 %v1480, %v61
  %v1487 = vmul.f32 %v1484, %v61
  %v1488 = vadd.f32 %v1476, %v1486
  %v1489 = vadd.f32 %v1477, %v1487
  %s1490 = scalar_lea.vmem %s3, 112
  %v1491 = vld [vmem:[%s1490] sm:$0xff]
  %v1492 = vld [vmem:[%s1490 + $0x8] sm:$0xff]
  %v1493 = vadd.f32 %v1488, %v1491
  %v1494 = vadd.f32 %v1489, %v1492
  %v1495 = vmax.f32 %v1493, 0.0
  %v1496 = vmax.f32 %v1494, 0.0
  %s1497 = scalar_lea.vmem %s4, 112
  %v1498 = vld [vmem:[%s1497] sm:$0xff]
  %v1499 = vld [vmem:[%s1497 + $0x8] sm:$0xff]
  %v1500 = vadd.f32 %v1488, %v1498
  %v1501 = vadd.f32 %v1489, %v1499
  %v1502 = vmax.f32 %v1500, 0.0
  %v1503 = vmax.f32 %v1501, 0.0
  %v1504 = vsub.f32 %v1495, %v1502
  %v1505 = vsub.f32 %v1496, %v1503
  %v1506 = vmul.f32 %v128, %v1504
  %v1507 = vmul.f32 %v128, %v1505
  %v1508 = vadd.f32 %v1502, %v1506
  %v1509 = vadd.f32 %v1503, %v1507
  %v1511 = vsel %vm133, %v1508, 0
  %v1514 = vsel %vm133, %v1509, 0
  %1516 = vmatprep.subr.mxu0 0.0
  %1517 = vmatpush1.msra.mxu0 %v31
  %1518 = vmatprep.subr.mxu0 0.0
  %1519 = vmatpush1.msra.mxu0 %v32
  %1520 = vmatprep.subr.mxu0 0.0
  %1521 = vmatpush1.msra.mxu0 %v33
  %1522 = vmatprep.subr.mxu0 0.0
  %1523 = vmatpush1.msra.mxu0 %v34
  %1524 = vmatprep.subr.mxu0 0.0
  %1525 = vmatpush1.msra.mxu0 0.0
  %1526 = vmatprep.subr.mxu0 0.0
  %1527 = vmatpush1.msra.mxu0 0.0
  %1528 = vmatprep.subr.mxu0 0.0
  %1529 = vmatpush1.msra.mxu0 0.0
  %1530 = vmatprep.subr.mxu0 0.0
  %1531 = vmatpush1.msra.mxu0 0.0
  %1532 = vmatprep.subr.mxu0 0.0
  %1533 = vmatpush1.msra.mxu0 0.0
  %1534 = vmatprep.subr.mxu0 0.0
  %1535 = vmatpush1.msra.mxu0 0.0
  %1536 = vmatprep.subr.mxu0 0.0
  %1537 = vmatpush1.msra.mxu0 0.0
  %1538 = vmatprep.subr.mxu0 0.0
  %1539 = vmatpush1.msra.mxu0 0.0
  %1540 = vmatprep.subr.mxu0 0.0
  %1541 = vmatpush1.msra.mxu0 0.0
  %1542 = vmatprep.subr.mxu0 0.0
  %1543 = vmatpush1.msra.mxu0 0.0
  %1544 = vmatprep.subr.mxu0 0.0
  %1545 = vmatpush1.msra.mxu0 0.0
  %1546 = vmatprep.subr.mxu0 0.0
  %1547 = vmatpush1.msra.mxu0 0.0
  %1548 = vmatprep.subr.mxu0 0.0
  %1549 = vmatpush1.msra.mxu0 0.0
  %1550 = vmatprep.subr.mxu0 0.0
  %1551 = vmatpush1.msra.mxu0 0.0
  %1552 = vmatprep.subr.mxu0 0.0
  %1553 = vmatpush1.msra.mxu0 0.0
  %1554 = vmatprep.subr.mxu0 0.0
  %1555 = vmatpush1.msra.mxu0 0.0
  %1556 = vmatprep.subr.mxu0 0.0
  %1557 = vmatpush1.msra.mxu0 0.0
  %1558 = vmatprep.subr.mxu0 0.0
  %1559 = vmatpush1.msra.mxu0 0.0
  %1560 = vmatprep.subr.mxu0 0.0
  %1561 = vmatpush1.msra.mxu0 0.0
  %1562 = vmatprep.subr.mxu0 0.0
  %1563 = vmatpush1.msra.mxu0 0.0
  %1564 = vmatprep.subr.mxu0 0.0
  %1565 = vmatpush1.msra.mxu0 0.0
  %1566 = vmatprep.subr.mxu0 0.0
  %1567 = vmatpush1.msra.mxu0 0.0
  %1568 = vmatprep.subr.mxu0 0.0
  %1569 = vmatpush1.msra.mxu0 0.0
  %1570 = vmatprep.subr.mxu0 0.0
  %1571 = vmatpush1.msra.mxu0 0.0
  %1572 = vmatprep.subr.mxu0 0.0
  %1573 = vmatpush1.msra.mxu0 0.0
  %1574 = vmatprep.subr.mxu0 0.0
  %1575 = vmatpush1.msra.mxu0 0.0
  %1576 = vmatprep.subr.mxu0 0.0
  %1577 = vmatpush1.msra.mxu0 0.0
  %1578 = vmatprep.subr.mxu0 0.0
  %1579 = vmatpush1.msra.mxu0 0.0
  %1580 = vmatprep.mubr.f32.mxu0 0.0
  %1581 = vmatmul.mubr.f32.gmra.mrb[0].mxu0 %v1511
  %v1582 = vpop.f32.mrb[0].mxu0
  %v1583 = vadd.f32 %v40, %v1582
  %v1584 = vpop.f32.mrb[0].mxu0
  %1585 = vmatprep.mubr.f32.mxu0 0.0
  %1586 = vmatmul.mubr.f32.gmra.mrb[0].mxu0 %v1514
  %v1587 = vpop.f32.mrb[0].mxu0
  %v1588 = vadd.f32 %v40, %v1587
  %v1589 = vpop.f32.mrb[0].mxu0
  %1590 = vdwg.mxu0
  %v1591 = vmul.f32 %v1440, 1.903606
  %v1592 = vmul.f32 %v1441, 1.903606
  %v1593 = vmul.f32 %v1583, 1.6197889
  %v1594 = vmul.f32 %v1588, 1.6197889
  %v1595 = vsub.f32 %v1591, %v1593
  %v1596 = vsub.f32 %v1592, %v1594
  %v1597 = vmax.f32 %v1595, -1.0
  %v1598 = vmax.f32 %v1596, -1.0
  %v1599 = vmin.f32 %v1597, 1.0
  %v1600 = vmin.f32 %v1598, 1.0
  %v1601 = vmul.f32 %v1599, 0.21575621
  %v1602 = vmul.f32 %v1600, 0.21575621
  %v1603 = vmul.f32 %v1440, 0.7489657
  %v1604 = vmul.f32 %v1441, 0.7489657
  %v1605 = vadd.f32 %v1601, %v1603
  %v1606 = vadd.f32 %v1602, %v1604
  %s1607 = scalar_lea.vmem %s2, 112
  %v1608 = vld [vmem:[%s1607] sm:$0xff]
  %v1609 = vld [vmem:[%s1607 + $0x8] sm:$0xff]
  %v1610 = vmul.f32 %v1608, 0.23596767
  %v1611 = vmul.f32 %v1609, 0.23596767
  %v1612 = vadd.f32 %v1605, %v1610
  %v1613 = vadd.f32 %v1606, %v1611
  %1615 = vset.pattern.permute.xlu0 0
  %1616 = vperm.xlu0 %1615, %v1612
  %v1617 = vpop.permute.xlu0 %1616
  %1620 = vset.pattern.permute.xlu0 0
  %1621 = vperm.xlu0 %1620, %v1613
  %v1622 = vpop.permute.xlu0 %1621
  %v1624 = vmul.f32 %v1617, %v46
  %v1625 = vmul.f32 %v1622, %v46
  %1626 = vset.pattern.permute.xlu0 1
  %1627 = vperm.xlu0 %1626, %v1612
  %v1628 = vpop.permute.xlu0 %1627
  %1630 = vset.pattern.permute.xlu0 1
  %1631 = vperm.xlu0 %1630, %v1613
  %v1632 = vpop.permute.xlu0 %1631
  %v1634 = vmul.f32 %v1628, %v51
  %v1635 = vmul.f32 %v1632, %v51
  %v1636 = vadd.f32 %v1624, %v1634
  %v1637 = vadd.f32 %v1625, %v1635
  %1638 = vset.pattern.permute.xlu0 2
  %1639 = vperm.xlu0 %1638, %v1612
  %v1640 = vpop.permute.xlu0 %1639
  %1642 = vset.pattern.permute.xlu0 2
  %1643 = vperm.xlu0 %1642, %v1613
  %v1644 = vpop.permute.xlu0 %1643
  %v1646 = vmul.f32 %v1640, %v56
  %v1647 = vmul.f32 %v1644, %v56
  %v1648 = vadd.f32 %v1636, %v1646
  %v1649 = vadd.f32 %v1637, %v1647
  %1650 = vset.pattern.permute.xlu0 3
  %1651 = vperm.xlu0 %1650, %v1612
  %v1652 = vpop.permute.xlu0 %1651
  %1654 = vset.pattern.permute.xlu0 3
  %1655 = vperm.xlu0 %1654, %v1613
  %v1656 = vpop.permute.xlu0 %1655
  %v1658 = vmul.f32 %v1652, %v61
  %v1659 = vmul.f32 %v1656, %v61
  %v1660 = vadd.f32 %v1648, %v1658
  %v1661 = vadd.f32 %v1649, %v1659
  %s1662 = scalar_lea.vmem %s3, 96
  %v1663 = vld [vmem:[%s1662] sm:$0xff]
  %v1664 = vld [vmem:[%s1662 + $0x8] sm:$0xff]
  %v1665 = vadd.f32 %v1660, %v1663
  %v1666 = vadd.f32 %v1661, %v1664
  %v1667 = vmax.f32 %v1665, 0.0
  %v1668 = vmax.f32 %v1666, 0.0
  %s1669 = scalar_lea.vmem %s4, 96
  %v1670 = vld [vmem:[%s1669] sm:$0xff]
  %v1671 = vld [vmem:[%s1669 + $0x8] sm:$0xff]
  %v1672 = vadd.f32 %v1660, %v1670
  %v1673 = vadd.f32 %v1661, %v1671
  %v1674 = vmax.f32 %v1672, 0.0
  %v1675 = vmax.f32 %v1673, 0.0
  %v1676 = vsub.f32 %v1667, %v1674
  %v1677 = vsub.f32 %v1668, %v1675
  %v1678 = vmul.f32 %v128, %v1676
  %v1679 = vmul.f32 %v128, %v1677
  %v1680 = vadd.f32 %v1674, %v1678
  %v1681 = vadd.f32 %v1675, %v1679
  %v1683 = vsel %vm133, %v1680, 0
  %v1686 = vsel %vm133, %v1681, 0
  %1688 = vmatprep.subr.mxu0 0.0
  %1689 = vmatpush1.msra.mxu0 %v31
  %1690 = vmatprep.subr.mxu0 0.0
  %1691 = vmatpush1.msra.mxu0 %v32
  %1692 = vmatprep.subr.mxu0 0.0
  %1693 = vmatpush1.msra.mxu0 %v33
  %1694 = vmatprep.subr.mxu0 0.0
  %1695 = vmatpush1.msra.mxu0 %v34
  %1696 = vmatprep.subr.mxu0 0.0
  %1697 = vmatpush1.msra.mxu0 0.0
  %1698 = vmatprep.subr.mxu0 0.0
  %1699 = vmatpush1.msra.mxu0 0.0
  %1700 = vmatprep.subr.mxu0 0.0
  %1701 = vmatpush1.msra.mxu0 0.0
  %1702 = vmatprep.subr.mxu0 0.0
  %1703 = vmatpush1.msra.mxu0 0.0
  %1704 = vmatprep.subr.mxu0 0.0
  %1705 = vmatpush1.msra.mxu0 0.0
  %1706 = vmatprep.subr.mxu0 0.0
  %1707 = vmatpush1.msra.mxu0 0.0
  %1708 = vmatprep.subr.mxu0 0.0
  %1709 = vmatpush1.msra.mxu0 0.0
  %1710 = vmatprep.subr.mxu0 0.0
  %1711 = vmatpush1.msra.mxu0 0.0
  %1712 = vmatprep.subr.mxu0 0.0
  %1713 = vmatpush1.msra.mxu0 0.0
  %1714 = vmatprep.subr.mxu0 0.0
  %1715 = vmatpush1.msra.mxu0 0.0
  %1716 = vmatprep.subr.mxu0 0.0
  %1717 = vmatpush1.msra.mxu0 0.0
  %1718 = vmatprep.subr.mxu0 0.0
  %1719 = vmatpush1.msra.mxu0 0.0
  %1720 = vmatprep.subr.mxu0 0.0
  %1721 = vmatpush1.msra.mxu0 0.0
  %1722 = vmatprep.subr.mxu0 0.0
  %1723 = vmatpush1.msra.mxu0 0.0
  %1724 = vmatprep.subr.mxu0 0.0
  %1725 = vmatpush1.msra.mxu0 0.0
  %1726 = vmatprep.subr.mxu0 0.0
  %1727 = vmatpush1.msra.mxu0 0.0
  %1728 = vmatprep.subr.mxu0 0.0
  %1729 = vmatpush1.msra.mxu0 0.0
  %1730 = vmatprep.subr.mxu0 0.0
  %1731 = vmatpush1.msra.mxu0 0.0
  %1732 = vmatprep.subr.mxu0 0.0
  %1733 = vmatpush1.msra.mxu0 0.0
  %1734 = vmatprep.subr.mxu0 0.0
  %1735 = vmatpush1.msra.mxu0 0.0
  %1736 = vmatprep.subr.mxu0 0.0
  %1737 = vmatpush1.msra.mxu0 0.0
  %1738 = vmatprep.subr.mxu0 0.0
  %1739 = vmatpush1.msra.mxu0 0.0
  %1740 = vmatprep.subr.mxu0 0.0
  %1741 = vmatpush1.msra.mxu0 0.0
  %1742 = vmatprep.subr.mxu0 0.0
  %1743 = vmatpush1.msra.mxu0 0.0
  %1744 = vmatprep.subr.mxu0 0.0
  %1745 = vmatpush1.msra.mxu0 0.0
  %1746 = vmatprep.subr.mxu0 0.0
  %1747 = vmatpush1.msra.mxu0 0.0
  %1748 = vmatprep.subr.mxu0 0.0
  %1749 = vmatpush1.msra.mxu0 0.0
  %1750 = vmatprep.subr.mxu0 0.0
  %1751 = vmatpush1.msra.mxu0 0.0
  %1752 = vmatprep.mubr.f32.mxu0 0.0
  %1753 = vmatmul.mubr.f32.gmra.mrb[0].mxu0 %v1683
  %v1754 = vpop.f32.mrb[0].mxu0
  %v1755 = vadd.f32 %v40, %v1754
  %v1756 = vpop.f32.mrb[0].mxu0
  %1757 = vmatprep.mubr.f32.mxu0 0.0
  %1758 = vmatmul.mubr.f32.gmra.mrb[0].mxu0 %v1686
  %v1759 = vpop.f32.mrb[0].mxu0
  %v1760 = vadd.f32 %v40, %v1759
  %v1761 = vpop.f32.mrb[0].mxu0
  %1762 = vdwg.mxu0
  %v1763 = vmul.f32 %v1612, 1.6414918
  %v1764 = vmul.f32 %v1613, 1.6414918
  %v1765 = vmul.f32 %v1755, 1.3017278
  %v1766 = vmul.f32 %v1760, 1.3017278
  %v1767 = vsub.f32 %v1763, %v1765
  %v1768 = vsub.f32 %v1764, %v1766
  %v1769 = vmax.f32 %v1767, -1.0
  %v1770 = vmax.f32 %v1768, -1.0
  %v1771 = vmin.f32 %v1769, 1.0
  %v1772 = vmin.f32 %v1770, 1.0
  %v1773 = vmul.f32 %v1771, 0.25024965
  %v1774 = vmul.f32 %v1772, 0.25024965
  %v1775 = vmul.f32 %v1612, 0.72668964
  %v1776 = vmul.f32 %v1613, 0.72668964
  %v1777 = vadd.f32 %v1773, %v1775
  %v1778 = vadd.f32 %v1774, %v1776
  %s1779 = scalar_lea.vmem %s2, 96
  %v1780 = vld [vmem:[%s1779] sm:$0xff]
  %v1781 = vld [vmem:[%s1779 + $0x8] sm:$0xff]
  %v1782 = vmul.f32 %v1780, 0.21663672
  %v1783 = vmul.f32 %v1781, 0.21663672
  %v1784 = vadd.f32 %v1777, %v1782
  %v1785 = vadd.f32 %v1778, %v1783
  %1787 = vset.pattern.permute.xlu0 0
  %1788 = vperm.xlu0 %1787, %v1784
  %v1789 = vpop.permute.xlu0 %1788
  %1792 = vset.pattern.permute.xlu0 0
  %1793 = vperm.xlu0 %1792, %v1785
  %v1794 = vpop.permute.xlu0 %1793
  %v1796 = vmul.f32 %v1789, %v46
  %v1797 = vmul.f32 %v1794, %v46
  %1798 = vset.pattern.permute.xlu0 1
  %1799 = vperm.xlu0 %1798, %v1784
  %v1800 = vpop.permute.xlu0 %1799
  %1802 = vset.pattern.permute.xlu0 1
  %1803 = vperm.xlu0 %1802, %v1785
  %v1804 = vpop.permute.xlu0 %1803
  %v1806 = vmul.f32 %v1800, %v51
  %v1807 = vmul.f32 %v1804, %v51
  %v1808 = vadd.f32 %v1796, %v1806
  %v1809 = vadd.f32 %v1797, %v1807
  %1810 = vset.pattern.permute.xlu0 2
  %1811 = vperm.xlu0 %1810, %v1784
  %v1812 = vpop.permute.xlu0 %1811
  %1814 = vset.pattern.permute.xlu0 2
  %1815 = vperm.xlu0 %1814, %v1785
  %v1816 = vpop.permute.xlu0 %1815
  %v1818 = vmul.f32 %v1812, %v56
  %v1819 = vmul.f32 %v1816, %v56
  %v1820 = vadd.f32 %v1808, %v1818
  %v1821 = vadd.f32 %v1809, %v1819
  %1822 = vset.pattern.permute.xlu0 3
  %1823 = vperm.xlu0 %1822, %v1784
  %v1824 = vpop.permute.xlu0 %1823
  %1826 = vset.pattern.permute.xlu0 3
  %1827 = vperm.xlu0 %1826, %v1785
  %v1828 = vpop.permute.xlu0 %1827
  %v1830 = vmul.f32 %v1824, %v61
  %v1831 = vmul.f32 %v1828, %v61
  %v1832 = vadd.f32 %v1820, %v1830
  %v1833 = vadd.f32 %v1821, %v1831
  %s1834 = scalar_lea.vmem %s3, 80
  %v1835 = vld [vmem:[%s1834] sm:$0xff]
  %v1836 = vld [vmem:[%s1834 + $0x8] sm:$0xff]
  %v1837 = vadd.f32 %v1832, %v1835
  %v1838 = vadd.f32 %v1833, %v1836
  %v1839 = vmax.f32 %v1837, 0.0
  %v1840 = vmax.f32 %v1838, 0.0
  %s1841 = scalar_lea.vmem %s4, 80
  %v1842 = vld [vmem:[%s1841] sm:$0xff]
  %v1843 = vld [vmem:[%s1841 + $0x8] sm:$0xff]
  %v1844 = vadd.f32 %v1832, %v1842
  %v1845 = vadd.f32 %v1833, %v1843
  %v1846 = vmax.f32 %v1844, 0.0
  %v1847 = vmax.f32 %v1845, 0.0
  %v1848 = vsub.f32 %v1839, %v1846
  %v1849 = vsub.f32 %v1840, %v1847
  %v1850 = vmul.f32 %v128, %v1848
  %v1851 = vmul.f32 %v128, %v1849
  %v1852 = vadd.f32 %v1846, %v1850
  %v1853 = vadd.f32 %v1847, %v1851
  %v1855 = vsel %vm133, %v1852, 0
  %v1858 = vsel %vm133, %v1853, 0
  %1860 = vmatprep.subr.mxu0 0.0
  %1861 = vmatpush1.msra.mxu0 %v31
  %1862 = vmatprep.subr.mxu0 0.0
  %1863 = vmatpush1.msra.mxu0 %v32
  %1864 = vmatprep.subr.mxu0 0.0
  %1865 = vmatpush1.msra.mxu0 %v33
  %1866 = vmatprep.subr.mxu0 0.0
  %1867 = vmatpush1.msra.mxu0 %v34
  %1868 = vmatprep.subr.mxu0 0.0
  %1869 = vmatpush1.msra.mxu0 0.0
  %1870 = vmatprep.subr.mxu0 0.0
  %1871 = vmatpush1.msra.mxu0 0.0
  %1872 = vmatprep.subr.mxu0 0.0
  %1873 = vmatpush1.msra.mxu0 0.0
  %1874 = vmatprep.subr.mxu0 0.0
  %1875 = vmatpush1.msra.mxu0 0.0
  %1876 = vmatprep.subr.mxu0 0.0
  %1877 = vmatpush1.msra.mxu0 0.0
  %1878 = vmatprep.subr.mxu0 0.0
  %1879 = vmatpush1.msra.mxu0 0.0
  %1880 = vmatprep.subr.mxu0 0.0
  %1881 = vmatpush1.msra.mxu0 0.0
  %1882 = vmatprep.subr.mxu0 0.0
  %1883 = vmatpush1.msra.mxu0 0.0
  %1884 = vmatprep.subr.mxu0 0.0
  %1885 = vmatpush1.msra.mxu0 0.0
  %1886 = vmatprep.subr.mxu0 0.0
  %1887 = vmatpush1.msra.mxu0 0.0
  %1888 = vmatprep.subr.mxu0 0.0
  %1889 = vmatpush1.msra.mxu0 0.0
  %1890 = vmatprep.subr.mxu0 0.0
  %1891 = vmatpush1.msra.mxu0 0.0
  %1892 = vmatprep.subr.mxu0 0.0
  %1893 = vmatpush1.msra.mxu0 0.0
  %1894 = vmatprep.subr.mxu0 0.0
  %1895 = vmatpush1.msra.mxu0 0.0
  %1896 = vmatprep.subr.mxu0 0.0
  %1897 = vmatpush1.msra.mxu0 0.0
  %1898 = vmatprep.subr.mxu0 0.0
  %1899 = vmatpush1.msra.mxu0 0.0
  %1900 = vmatprep.subr.mxu0 0.0
  %1901 = vmatpush1.msra.mxu0 0.0
  %1902 = vmatprep.subr.mxu0 0.0
  %1903 = vmatpush1.msra.mxu0 0.0
  %1904 = vmatprep.subr.mxu0 0.0
  %1905 = vmatpush1.msra.mxu0 0.0
  %1906 = vmatprep.subr.mxu0 0.0
  %1907 = vmatpush1.msra.mxu0 0.0
  %1908 = vmatprep.subr.mxu0 0.0
  %1909 = vmatpush1.msra.mxu0 0.0
  %1910 = vmatprep.subr.mxu0 0.0
  %1911 = vmatpush1.msra.mxu0 0.0
  %1912 = vmatprep.subr.mxu0 0.0
  %1913 = vmatpush1.msra.mxu0 0.0
  %1914 = vmatprep.subr.mxu0 0.0
  %1915 = vmatpush1.msra.mxu0 0.0
  %1916 = vmatprep.subr.mxu0 0.0
  %1917 = vmatpush1.msra.mxu0 0.0
  %1918 = vmatprep.subr.mxu0 0.0
  %1919 = vmatpush1.msra.mxu0 0.0
  %1920 = vmatprep.subr.mxu0 0.0
  %1921 = vmatpush1.msra.mxu0 0.0
  %1922 = vmatprep.subr.mxu0 0.0
  %1923 = vmatpush1.msra.mxu0 0.0
  %1924 = vmatprep.mubr.f32.mxu0 0.0
  %1925 = vmatmul.mubr.f32.gmra.mrb[0].mxu0 %v1855
  %v1926 = vpop.f32.mrb[0].mxu0
  %v1927 = vadd.f32 %v40, %v1926
  %v1928 = vpop.f32.mrb[0].mxu0
  %1929 = vmatprep.mubr.f32.mxu0 0.0
  %1930 = vmatmul.mubr.f32.gmra.mrb[0].mxu0 %v1858
  %v1931 = vpop.f32.mrb[0].mxu0
  %v1932 = vadd.f32 %v40, %v1931
  %v1933 = vpop.f32.mrb[0].mxu0
  %1934 = vdwg.mxu0
  %v1935 = vmul.f32 %v1784, 1.4431047
  %v1936 = vmul.f32 %v1785, 1.4431047
  %v1937 = vmul.f32 %v1927, 1.0404572
  %v1938 = vmul.f32 %v1932, 1.0404572
  %v1939 = vsub.f32 %v1935, %v1937
  %v1940 = vsub.f32 %v1936, %v1938
  %v1941 = vmax.f32 %v1939, -1.0
  %v1942 = vmax.f32 %v1940, -1.0
  %v1943 = vmin.f32 %v1941, 1.0
  %v1944 = vmin.f32 %v1942, 1.0
  %v1945 = vmul.f32 %v1943, 0.29245034
  %v1946 = vmul.f32 %v1944, 0.29245034
  %v1947 = vmul.f32 %v1784, 0.6936531
  %v1948 = vmul.f32 %v1785, 0.6936531
  %v1949 = vadd.f32 %v1945, %v1947
  %v1950 = vadd.f32 %v1946, %v1948
  %s1951 = scalar_lea.vmem %s2, 80
  %v1952 = vld [vmem:[%s1951] sm:$0xff]
  %v1953 = vld [vmem:[%s1951 + $0x8] sm:$0xff]
  %v1954 = vmul.f32 %v1952, 0.19504847
  %v1955 = vmul.f32 %v1953, 0.19504847
  %v1956 = vadd.f32 %v1949, %v1954
  %v1957 = vadd.f32 %v1950, %v1955
  %1959 = vset.pattern.permute.xlu0 0
  %1960 = vperm.xlu0 %1959, %v1956
  %v1961 = vpop.permute.xlu0 %1960
  %1964 = vset.pattern.permute.xlu0 0
  %1965 = vperm.xlu0 %1964, %v1957
  %v1966 = vpop.permute.xlu0 %1965
  %v1968 = vmul.f32 %v1961, %v46
  %v1969 = vmul.f32 %v1966, %v46
  %1970 = vset.pattern.permute.xlu0 1
  %1971 = vperm.xlu0 %1970, %v1956
  %v1972 = vpop.permute.xlu0 %1971
  %1974 = vset.pattern.permute.xlu0 1
  %1975 = vperm.xlu0 %1974, %v1957
  %v1976 = vpop.permute.xlu0 %1975
  %v1978 = vmul.f32 %v1972, %v51
  %v1979 = vmul.f32 %v1976, %v51
  %v1980 = vadd.f32 %v1968, %v1978
  %v1981 = vadd.f32 %v1969, %v1979
  %1982 = vset.pattern.permute.xlu0 2
  %1983 = vperm.xlu0 %1982, %v1956
  %v1984 = vpop.permute.xlu0 %1983
  %1986 = vset.pattern.permute.xlu0 2
  %1987 = vperm.xlu0 %1986, %v1957
  %v1988 = vpop.permute.xlu0 %1987
  %v1990 = vmul.f32 %v1984, %v56
  %v1991 = vmul.f32 %v1988, %v56
  %v1992 = vadd.f32 %v1980, %v1990
  %v1993 = vadd.f32 %v1981, %v1991
  %1994 = vset.pattern.permute.xlu0 3
  %1995 = vperm.xlu0 %1994, %v1956
  %v1996 = vpop.permute.xlu0 %1995
  %1998 = vset.pattern.permute.xlu0 3
  %1999 = vperm.xlu0 %1998, %v1957
  %v2000 = vpop.permute.xlu0 %1999
  %v2002 = vmul.f32 %v1996, %v61
  %v2003 = vmul.f32 %v2000, %v61
  %v2004 = vadd.f32 %v1992, %v2002
  %v2005 = vadd.f32 %v1993, %v2003
  %s2006 = scalar_lea.vmem %s3, 64
  %v2007 = vld [vmem:[%s2006] sm:$0xff]
  %v2008 = vld [vmem:[%s2006 + $0x8] sm:$0xff]
  %v2009 = vadd.f32 %v2004, %v2007
  %v2010 = vadd.f32 %v2005, %v2008
  %v2011 = vmax.f32 %v2009, 0.0
  %v2012 = vmax.f32 %v2010, 0.0
  %s2013 = scalar_lea.vmem %s4, 64
  %v2014 = vld [vmem:[%s2013] sm:$0xff]
  %v2015 = vld [vmem:[%s2013 + $0x8] sm:$0xff]
  %v2016 = vadd.f32 %v2004, %v2014
  %v2017 = vadd.f32 %v2005, %v2015
  %v2018 = vmax.f32 %v2016, 0.0
  %v2019 = vmax.f32 %v2017, 0.0
  %v2020 = vsub.f32 %v2011, %v2018
  %v2021 = vsub.f32 %v2012, %v2019
  %v2022 = vmul.f32 %v128, %v2020
  %v2023 = vmul.f32 %v128, %v2021
  %v2024 = vadd.f32 %v2018, %v2022
  %v2025 = vadd.f32 %v2019, %v2023
  %v2027 = vsel %vm133, %v2024, 0
  %v2030 = vsel %vm133, %v2025, 0
  %2032 = vmatprep.subr.mxu0 0.0
  %2033 = vmatpush1.msra.mxu0 %v31
  %2034 = vmatprep.subr.mxu0 0.0
  %2035 = vmatpush1.msra.mxu0 %v32
  %2036 = vmatprep.subr.mxu0 0.0
  %2037 = vmatpush1.msra.mxu0 %v33
  %2038 = vmatprep.subr.mxu0 0.0
  %2039 = vmatpush1.msra.mxu0 %v34
  %2040 = vmatprep.subr.mxu0 0.0
  %2041 = vmatpush1.msra.mxu0 0.0
  %2042 = vmatprep.subr.mxu0 0.0
  %2043 = vmatpush1.msra.mxu0 0.0
  %2044 = vmatprep.subr.mxu0 0.0
  %2045 = vmatpush1.msra.mxu0 0.0
  %2046 = vmatprep.subr.mxu0 0.0
  %2047 = vmatpush1.msra.mxu0 0.0
  %2048 = vmatprep.subr.mxu0 0.0
  %2049 = vmatpush1.msra.mxu0 0.0
  %2050 = vmatprep.subr.mxu0 0.0
  %2051 = vmatpush1.msra.mxu0 0.0
  %2052 = vmatprep.subr.mxu0 0.0
  %2053 = vmatpush1.msra.mxu0 0.0
  %2054 = vmatprep.subr.mxu0 0.0
  %2055 = vmatpush1.msra.mxu0 0.0
  %2056 = vmatprep.subr.mxu0 0.0
  %2057 = vmatpush1.msra.mxu0 0.0
  %2058 = vmatprep.subr.mxu0 0.0
  %2059 = vmatpush1.msra.mxu0 0.0
  %2060 = vmatprep.subr.mxu0 0.0
  %2061 = vmatpush1.msra.mxu0 0.0
  %2062 = vmatprep.subr.mxu0 0.0
  %2063 = vmatpush1.msra.mxu0 0.0
  %2064 = vmatprep.subr.mxu0 0.0
  %2065 = vmatpush1.msra.mxu0 0.0
  %2066 = vmatprep.subr.mxu0 0.0
  %2067 = vmatpush1.msra.mxu0 0.0
  %2068 = vmatprep.subr.mxu0 0.0
  %2069 = vmatpush1.msra.mxu0 0.0
  %2070 = vmatprep.subr.mxu0 0.0
  %2071 = vmatpush1.msra.mxu0 0.0
  %2072 = vmatprep.subr.mxu0 0.0
  %2073 = vmatpush1.msra.mxu0 0.0
  %2074 = vmatprep.subr.mxu0 0.0
  %2075 = vmatpush1.msra.mxu0 0.0
  %2076 = vmatprep.subr.mxu0 0.0
  %2077 = vmatpush1.msra.mxu0 0.0
  %2078 = vmatprep.subr.mxu0 0.0
  %2079 = vmatpush1.msra.mxu0 0.0
  %2080 = vmatprep.subr.mxu0 0.0
  %2081 = vmatpush1.msra.mxu0 0.0
  %2082 = vmatprep.subr.mxu0 0.0
  %2083 = vmatpush1.msra.mxu0 0.0
  %2084 = vmatprep.subr.mxu0 0.0
  %2085 = vmatpush1.msra.mxu0 0.0
  %2086 = vmatprep.subr.mxu0 0.0
  %2087 = vmatpush1.msra.mxu0 0.0
  %2088 = vmatprep.subr.mxu0 0.0
  %2089 = vmatpush1.msra.mxu0 0.0
  %2090 = vmatprep.subr.mxu0 0.0
  %2091 = vmatpush1.msra.mxu0 0.0
  %2092 = vmatprep.subr.mxu0 0.0
  %2093 = vmatpush1.msra.mxu0 0.0
  %2094 = vmatprep.subr.mxu0 0.0
  %2095 = vmatpush1.msra.mxu0 0.0
  %2096 = vmatprep.mubr.f32.mxu0 0.0
  %2097 = vmatmul.mubr.f32.gmra.mrb[0].mxu0 %v2027
  %v2098 = vpop.f32.mrb[0].mxu0
  %v2099 = vadd.f32 %v40, %v2098
  %v2100 = vpop.f32.mrb[0].mxu0
  %2101 = vmatprep.mubr.f32.mxu0 0.0
  %2102 = vmatmul.mubr.f32.gmra.mrb[0].mxu0 %v2030
  %v2103 = vpop.f32.mrb[0].mxu0
  %v2104 = vadd.f32 %v40, %v2103
  %v2105 = vpop.f32.mrb[0].mxu0
  %2106 = vdwg.mxu0
  %v2107 = vmul.f32 %v1956, 1.2934644
  %v2108 = vmul.f32 %v1957, 1.2934644
  %v2109 = vmul.f32 %v2099, 0.82039636
  %v2110 = vmul.f32 %v2104, 0.82039636
  %v2111 = vsub.f32 %v2107, %v2109
  %v2112 = vsub.f32 %v2108, %v2110
  %v2113 = vmax.f32 %v2111, -1.0
  %v2114 = vmax.f32 %v2112, -1.0
  %v2115 = vmin.f32 %v2113, 1.0
  %v2116 = vmin.f32 %v2114, 1.0
  %v2117 = vmul.f32 %v2115, 0.3469179
  %v2118 = vmul.f32 %v2116, 0.3469179
  %v2119 = vmul.f32 %v1956, 0.64559793
  %v2120 = vmul.f32 %v1957, 0.64559793
  %v2121 = vadd.f32 %v2117, %v2119
  %v2122 = vadd.f32 %v2118, %v2120
  %s2123 = scalar_lea.vmem %s2, 64
  %v2124 = vld [vmem:[%s2123] sm:$0xff]
  %v2125 = vld [vmem:[%s2123 + $0x8] sm:$0xff]
  %v2126 = vmul.f32 %v2124, 0.1706911
  %v2127 = vmul.f32 %v2125, 0.1706911
  %v2128 = vadd.f32 %v2121, %v2126
  %v2129 = vadd.f32 %v2122, %v2127
  %2131 = vset.pattern.permute.xlu0 0
  %2132 = vperm.xlu0 %2131, %v2128
  %v2133 = vpop.permute.xlu0 %2132
  %2136 = vset.pattern.permute.xlu0 0
  %2137 = vperm.xlu0 %2136, %v2129
  %v2138 = vpop.permute.xlu0 %2137
  %v2140 = vmul.f32 %v2133, %v46
  %v2141 = vmul.f32 %v2138, %v46
  %2142 = vset.pattern.permute.xlu0 1
  %2143 = vperm.xlu0 %2142, %v2128
  %v2144 = vpop.permute.xlu0 %2143
  %2146 = vset.pattern.permute.xlu0 1
  %2147 = vperm.xlu0 %2146, %v2129
  %v2148 = vpop.permute.xlu0 %2147
  %v2150 = vmul.f32 %v2144, %v51
  %v2151 = vmul.f32 %v2148, %v51
  %v2152 = vadd.f32 %v2140, %v2150
  %v2153 = vadd.f32 %v2141, %v2151
  %2154 = vset.pattern.permute.xlu0 2
  %2155 = vperm.xlu0 %2154, %v2128
  %v2156 = vpop.permute.xlu0 %2155
  %2158 = vset.pattern.permute.xlu0 2
  %2159 = vperm.xlu0 %2158, %v2129
  %v2160 = vpop.permute.xlu0 %2159
  %v2162 = vmul.f32 %v2156, %v56
  %v2163 = vmul.f32 %v2160, %v56
  %v2164 = vadd.f32 %v2152, %v2162
  %v2165 = vadd.f32 %v2153, %v2163
  %2166 = vset.pattern.permute.xlu0 3
  %2167 = vperm.xlu0 %2166, %v2128
  %v2168 = vpop.permute.xlu0 %2167
  %2170 = vset.pattern.permute.xlu0 3
  %2171 = vperm.xlu0 %2170, %v2129
  %v2172 = vpop.permute.xlu0 %2171
  %v2174 = vmul.f32 %v2168, %v61
  %v2175 = vmul.f32 %v2172, %v61
  %v2176 = vadd.f32 %v2164, %v2174
  %v2177 = vadd.f32 %v2165, %v2175
  %s2178 = scalar_lea.vmem %s3, 48
  %v2179 = vld [vmem:[%s2178] sm:$0xff]
  %v2180 = vld [vmem:[%s2178 + $0x8] sm:$0xff]
  %v2181 = vadd.f32 %v2176, %v2179
  %v2182 = vadd.f32 %v2177, %v2180
  %v2183 = vmax.f32 %v2181, 0.0
  %v2184 = vmax.f32 %v2182, 0.0
  %s2185 = scalar_lea.vmem %s4, 48
  %v2186 = vld [vmem:[%s2185] sm:$0xff]
  %v2187 = vld [vmem:[%s2185 + $0x8] sm:$0xff]
  %v2188 = vadd.f32 %v2176, %v2186
  %v2189 = vadd.f32 %v2177, %v2187
  %v2190 = vmax.f32 %v2188, 0.0
  %v2191 = vmax.f32 %v2189, 0.0
  %v2192 = vsub.f32 %v2183, %v2190
  %v2193 = vsub.f32 %v2184, %v2191
  %v2194 = vmul.f32 %v128, %v2192
  %v2195 = vmul.f32 %v128, %v2193
  %v2196 = vadd.f32 %v2190, %v2194
  %v2197 = vadd.f32 %v2191, %v2195
  %v2199 = vsel %vm133, %v2196, 0
  %v2202 = vsel %vm133, %v2197, 0
  %2204 = vmatprep.subr.mxu0 0.0
  %2205 = vmatpush1.msra.mxu0 %v31
  %2206 = vmatprep.subr.mxu0 0.0
  %2207 = vmatpush1.msra.mxu0 %v32
  %2208 = vmatprep.subr.mxu0 0.0
  %2209 = vmatpush1.msra.mxu0 %v33
  %2210 = vmatprep.subr.mxu0 0.0
  %2211 = vmatpush1.msra.mxu0 %v34
  %2212 = vmatprep.subr.mxu0 0.0
  %2213 = vmatpush1.msra.mxu0 0.0
  %2214 = vmatprep.subr.mxu0 0.0
  %2215 = vmatpush1.msra.mxu0 0.0
  %2216 = vmatprep.subr.mxu0 0.0
  %2217 = vmatpush1.msra.mxu0 0.0
  %2218 = vmatprep.subr.mxu0 0.0
  %2219 = vmatpush1.msra.mxu0 0.0
  %2220 = vmatprep.subr.mxu0 0.0
  %2221 = vmatpush1.msra.mxu0 0.0
  %2222 = vmatprep.subr.mxu0 0.0
  %2223 = vmatpush1.msra.mxu0 0.0
  %2224 = vmatprep.subr.mxu0 0.0
  %2225 = vmatpush1.msra.mxu0 0.0
  %2226 = vmatprep.subr.mxu0 0.0
  %2227 = vmatpush1.msra.mxu0 0.0
  %2228 = vmatprep.subr.mxu0 0.0
  %2229 = vmatpush1.msra.mxu0 0.0
  %2230 = vmatprep.subr.mxu0 0.0
  %2231 = vmatpush1.msra.mxu0 0.0
  %2232 = vmatprep.subr.mxu0 0.0
  %2233 = vmatpush1.msra.mxu0 0.0
  %2234 = vmatprep.subr.mxu0 0.0
  %2235 = vmatpush1.msra.mxu0 0.0
  %2236 = vmatprep.subr.mxu0 0.0
  %2237 = vmatpush1.msra.mxu0 0.0
  %2238 = vmatprep.subr.mxu0 0.0
  %2239 = vmatpush1.msra.mxu0 0.0
  %2240 = vmatprep.subr.mxu0 0.0
  %2241 = vmatpush1.msra.mxu0 0.0
  %2242 = vmatprep.subr.mxu0 0.0
  %2243 = vmatpush1.msra.mxu0 0.0
  %2244 = vmatprep.subr.mxu0 0.0
  %2245 = vmatpush1.msra.mxu0 0.0
  %2246 = vmatprep.subr.mxu0 0.0
  %2247 = vmatpush1.msra.mxu0 0.0
  %2248 = vmatprep.subr.mxu0 0.0
  %2249 = vmatpush1.msra.mxu0 0.0
  %2250 = vmatprep.subr.mxu0 0.0
  %2251 = vmatpush1.msra.mxu0 0.0
  %2252 = vmatprep.subr.mxu0 0.0
  %2253 = vmatpush1.msra.mxu0 0.0
  %2254 = vmatprep.subr.mxu0 0.0
  %2255 = vmatpush1.msra.mxu0 0.0
  %2256 = vmatprep.subr.mxu0 0.0
  %2257 = vmatpush1.msra.mxu0 0.0
  %2258 = vmatprep.subr.mxu0 0.0
  %2259 = vmatpush1.msra.mxu0 0.0
  %2260 = vmatprep.subr.mxu0 0.0
  %2261 = vmatpush1.msra.mxu0 0.0
  %2262 = vmatprep.subr.mxu0 0.0
  %2263 = vmatpush1.msra.mxu0 0.0
  %2264 = vmatprep.subr.mxu0 0.0
  %2265 = vmatpush1.msra.mxu0 0.0
  %2266 = vmatprep.subr.mxu0 0.0
  %2267 = vmatpush1.msra.mxu0 0.0
  %2268 = vmatprep.mubr.f32.mxu0 0.0
  %2269 = vmatmul.mubr.f32.gmra.mrb[0].mxu0 %v2199
  %v2270 = vpop.f32.mrb[0].mxu0
  %v2271 = vadd.f32 %v40, %v2270
  %v2272 = vpop.f32.mrb[0].mxu0
  %2273 = vmatprep.mubr.f32.mxu0 0.0
  %2274 = vmatmul.mubr.f32.gmra.mrb[0].mxu0 %v2202
  %v2275 = vpop.f32.mrb[0].mxu0
  %v2276 = vadd.f32 %v40, %v2275
  %v2277 = vpop.f32.mrb[0].mxu0
  %2278 = vdwg.mxu0
  %v2279 = vmul.f32 %v2128, 1.1819758
  %v2280 = vmul.f32 %v2129, 1.1819758
  %v2281 = vmul.f32 %v2271, 0.6301325
  %v2282 = vmul.f32 %v2276, 0.6301325
  %v2283 = vsub.f32 %v2279, %v2281
  %v2284 = vsub.f32 %v2280, %v2282
  %v2285 = vmax.f32 %v2283, -1.0
  %v2286 = vmax.f32 %v2284, -1.0
  %v2287 = vmin.f32 %v2285, 1.0
  %v2288 = vmin.f32 %v2286, 1.0
  %v2289 = vmul.f32 %v2287, 0.42186713
  %v2290 = vmul.f32 %v2288, 0.42186713
  %v2291 = vmul.f32 %v2128, 0.5747306
  %v2292 = vmul.f32 %v2129, 0.5747306
  %v2293 = vadd.f32 %v2289, %v2291
  %v2294 = vadd.f32 %v2290, %v2292
  %s2295 = scalar_lea.vmem %s2, 48
  %v2296 = vld [vmem:[%s2295] sm:$0xff]
  %v2297 = vld [vmem:[%s2295 + $0x8] sm:$0xff]
  %v2298 = vmul.f32 %v2296, 0.1426979
  %v2299 = vmul.f32 %v2297, 0.1426979
  %v2300 = vadd.f32 %v2293, %v2298
  %v2301 = vadd.f32 %v2294, %v2299
  %2303 = vset.pattern.permute.xlu0 0
  %2304 = vperm.xlu0 %2303, %v2300
  %v2305 = vpop.permute.xlu0 %2304
  %2308 = vset.pattern.permute.xlu0 0
  %2309 = vperm.xlu0 %2308, %v2301
  %v2310 = vpop.permute.xlu0 %2309
  %v2312 = vmul.f32 %v2305, %v46
  %v2313 = vmul.f32 %v2310, %v46
  %2314 = vset.pattern.permute.xlu0 1
  %2315 = vperm.xlu0 %2314, %v2300
  %v2316 = vpop.permute.xlu0 %2315
  %2318 = vset.pattern.permute.xlu0 1
  %2319 = vperm.xlu0 %2318, %v2301
  %v2320 = vpop.permute.xlu0 %2319
  %v2322 = vmul.f32 %v2316, %v51
  %v2323 = vmul.f32 %v2320, %v51
  %v2324 = vadd.f32 %v2312, %v2322
  %v2325 = vadd.f32 %v2313, %v2323
  %2326 = vset.pattern.permute.xlu0 2
  %2327 = vperm.xlu0 %2326, %v2300
  %v2328 = vpop.permute.xlu0 %2327
  %2330 = vset.pattern.permute.xlu0 2
  %2331 = vperm.xlu0 %2330, %v2301
  %v2332 = vpop.permute.xlu0 %2331
  %v2334 = vmul.f32 %v2328, %v56
  %v2335 = vmul.f32 %v2332, %v56
  %v2336 = vadd.f32 %v2324, %v2334
  %v2337 = vadd.f32 %v2325, %v2335
  %2338 = vset.pattern.permute.xlu0 3
  %2339 = vperm.xlu0 %2338, %v2300
  %v2340 = vpop.permute.xlu0 %2339
  %2342 = vset.pattern.permute.xlu0 3
  %2343 = vperm.xlu0 %2342, %v2301
  %v2344 = vpop.permute.xlu0 %2343
  %v2346 = vmul.f32 %v2340, %v61
  %v2347 = vmul.f32 %v2344, %v61
  %v2348 = vadd.f32 %v2336, %v2346
  %v2349 = vadd.f32 %v2337, %v2347
  %s2350 = scalar_lea.vmem %s3, 32
  %v2351 = vld [vmem:[%s2350] sm:$0xff]
  %v2352 = vld [vmem:[%s2350 + $0x8] sm:$0xff]
  %v2353 = vadd.f32 %v2348, %v2351
  %v2354 = vadd.f32 %v2349, %v2352
  %v2355 = vmax.f32 %v2353, 0.0
  %v2356 = vmax.f32 %v2354, 0.0
  %s2357 = scalar_lea.vmem %s4, 32
  %v2358 = vld [vmem:[%s2357] sm:$0xff]
  %v2359 = vld [vmem:[%s2357 + $0x8] sm:$0xff]
  %v2360 = vadd.f32 %v2348, %v2358
  %v2361 = vadd.f32 %v2349, %v2359
  %v2362 = vmax.f32 %v2360, 0.0
  %v2363 = vmax.f32 %v2361, 0.0
  %v2364 = vsub.f32 %v2355, %v2362
  %v2365 = vsub.f32 %v2356, %v2363
  %v2366 = vmul.f32 %v128, %v2364
  %v2367 = vmul.f32 %v128, %v2365
  %v2368 = vadd.f32 %v2362, %v2366
  %v2369 = vadd.f32 %v2363, %v2367
  %v2371 = vsel %vm133, %v2368, 0
  %v2374 = vsel %vm133, %v2369, 0
  %2376 = vmatprep.subr.mxu0 0.0
  %2377 = vmatpush1.msra.mxu0 %v31
  %2378 = vmatprep.subr.mxu0 0.0
  %2379 = vmatpush1.msra.mxu0 %v32
  %2380 = vmatprep.subr.mxu0 0.0
  %2381 = vmatpush1.msra.mxu0 %v33
  %2382 = vmatprep.subr.mxu0 0.0
  %2383 = vmatpush1.msra.mxu0 %v34
  %2384 = vmatprep.subr.mxu0 0.0
  %2385 = vmatpush1.msra.mxu0 0.0
  %2386 = vmatprep.subr.mxu0 0.0
  %2387 = vmatpush1.msra.mxu0 0.0
  %2388 = vmatprep.subr.mxu0 0.0
  %2389 = vmatpush1.msra.mxu0 0.0
  %2390 = vmatprep.subr.mxu0 0.0
  %2391 = vmatpush1.msra.mxu0 0.0
  %2392 = vmatprep.subr.mxu0 0.0
  %2393 = vmatpush1.msra.mxu0 0.0
  %2394 = vmatprep.subr.mxu0 0.0
  %2395 = vmatpush1.msra.mxu0 0.0
  %2396 = vmatprep.subr.mxu0 0.0
  %2397 = vmatpush1.msra.mxu0 0.0
  %2398 = vmatprep.subr.mxu0 0.0
  %2399 = vmatpush1.msra.mxu0 0.0
  %2400 = vmatprep.subr.mxu0 0.0
  %2401 = vmatpush1.msra.mxu0 0.0
  %2402 = vmatprep.subr.mxu0 0.0
  %2403 = vmatpush1.msra.mxu0 0.0
  %2404 = vmatprep.subr.mxu0 0.0
  %2405 = vmatpush1.msra.mxu0 0.0
  %2406 = vmatprep.subr.mxu0 0.0
  %2407 = vmatpush1.msra.mxu0 0.0
  %2408 = vmatprep.subr.mxu0 0.0
  %2409 = vmatpush1.msra.mxu0 0.0
  %2410 = vmatprep.subr.mxu0 0.0
  %2411 = vmatpush1.msra.mxu0 0.0
  %2412 = vmatprep.subr.mxu0 0.0
  %2413 = vmatpush1.msra.mxu0 0.0
  %2414 = vmatprep.subr.mxu0 0.0
  %2415 = vmatpush1.msra.mxu0 0.0
  %2416 = vmatprep.subr.mxu0 0.0
  %2417 = vmatpush1.msra.mxu0 0.0
  %2418 = vmatprep.subr.mxu0 0.0
  %2419 = vmatpush1.msra.mxu0 0.0
  %2420 = vmatprep.subr.mxu0 0.0
  %2421 = vmatpush1.msra.mxu0 0.0
  %2422 = vmatprep.subr.mxu0 0.0
  %2423 = vmatpush1.msra.mxu0 0.0
  %2424 = vmatprep.subr.mxu0 0.0
  %2425 = vmatpush1.msra.mxu0 0.0
  %2426 = vmatprep.subr.mxu0 0.0
  %2427 = vmatpush1.msra.mxu0 0.0
  %2428 = vmatprep.subr.mxu0 0.0
  %2429 = vmatpush1.msra.mxu0 0.0
  %2430 = vmatprep.subr.mxu0 0.0
  %2431 = vmatpush1.msra.mxu0 0.0
  %2432 = vmatprep.subr.mxu0 0.0
  %2433 = vmatpush1.msra.mxu0 0.0
  %2434 = vmatprep.subr.mxu0 0.0
  %2435 = vmatpush1.msra.mxu0 0.0
  %2436 = vmatprep.subr.mxu0 0.0
  %2437 = vmatpush1.msra.mxu0 0.0
  %2438 = vmatprep.subr.mxu0 0.0
  %2439 = vmatpush1.msra.mxu0 0.0
  %2440 = vmatprep.mubr.f32.mxu0 0.0
  %2441 = vmatmul.mubr.f32.gmra.mrb[0].mxu0 %v2371
  %v2442 = vpop.f32.mrb[0].mxu0
  %v2443 = vadd.f32 %v40, %v2442
  %v2444 = vpop.f32.mrb[0].mxu0
  %2445 = vmatprep.mubr.f32.mxu0 0.0
  %2446 = vmatmul.mubr.f32.gmra.mrb[0].mxu0 %v2374
  %v2447 = vpop.f32.mrb[0].mxu0
  %v2448 = vadd.f32 %v40, %v2447
  %v2449 = vpop.f32.mrb[0].mxu0
  %2450 = vdwg.mxu0
  %v2451 = vmul.f32 %v2300, 1.1011848
  %v2452 = vmul.f32 %v2301, 1.1011848
  %v2453 = vmul.f32 %v2443, 0.46109438
  %v2454 = vmul.f32 %v2448, 0.46109438
  %v2455 = vsub.f32 %v2451, %v2453
  %v2456 = vsub.f32 %v2452, %v2454
  %v2457 = vmax.f32 %v2455, -1.0
  %v2458 = vmax.f32 %v2456, -1.0
  %v2459 = vmin.f32 %v2457, 1.0
  %v2460 = vmin.f32 %v2458, 1.0
  %v2461 = vmul.f32 %v2459, 0.53335077
  %v2462 = vmul.f32 %v2460, 0.53335077
  %v2463 = vmul.f32 %v2300, 0.46549442
  %v2464 = vmul.f32 %v2301, 0.46549442
  %v2465 = vadd.f32 %v2461, %v2463
  %v2466 = vadd.f32 %v2462, %v2464
  %s2467 = scalar_lea.vmem %s2, 32
  %v2468 = vld [vmem:[%s2467] sm:$0xff]
  %v2469 = vld [vmem:[%s2467 + $0x8] sm:$0xff]
  %v2470 = vmul.f32 %v2468, 0.10946957
  %v2471 = vmul.f32 %v2469, 0.10946957
  %v2472 = vadd.f32 %v2465, %v2470
  %v2473 = vadd.f32 %v2466, %v2471
  %2475 = vset.pattern.permute.xlu0 0
  %2476 = vperm.xlu0 %2475, %v2472
  %v2477 = vpop.permute.xlu0 %2476
  %2480 = vset.pattern.permute.xlu0 0
  %2481 = vperm.xlu0 %2480, %v2473
  %v2482 = vpop.permute.xlu0 %2481
  %v2484 = vmul.f32 %v2477, %v46
  %v2485 = vmul.f32 %v2482, %v46
  %2486 = vset.pattern.permute.xlu0 1
  %2487 = vperm.xlu0 %2486, %v2472
  %v2488 = vpop.permute.xlu0 %2487
  %2490 = vset.pattern.permute.xlu0 1
  %2491 = vperm.xlu0 %2490, %v2473
  %v2492 = vpop.permute.xlu0 %2491
  %v2494 = vmul.f32 %v2488, %v51
  %v2495 = vmul.f32 %v2492, %v51
  %v2496 = vadd.f32 %v2484, %v2494
  %v2497 = vadd.f32 %v2485, %v2495
  %2498 = vset.pattern.permute.xlu0 2
  %2499 = vperm.xlu0 %2498, %v2472
  %v2500 = vpop.permute.xlu0 %2499
  %2502 = vset.pattern.permute.xlu0 2
  %2503 = vperm.xlu0 %2502, %v2473
  %v2504 = vpop.permute.xlu0 %2503
  %v2506 = vmul.f32 %v2500, %v56
  %v2507 = vmul.f32 %v2504, %v56
  %v2508 = vadd.f32 %v2496, %v2506
  %v2509 = vadd.f32 %v2497, %v2507
  %2510 = vset.pattern.permute.xlu0 3
  %2511 = vperm.xlu0 %2510, %v2472
  %v2512 = vpop.permute.xlu0 %2511
  %2514 = vset.pattern.permute.xlu0 3
  %2515 = vperm.xlu0 %2514, %v2473
  %v2516 = vpop.permute.xlu0 %2515
  %v2518 = vmul.f32 %v2512, %v61
  %v2519 = vmul.f32 %v2516, %v61
  %v2520 = vadd.f32 %v2508, %v2518
  %v2521 = vadd.f32 %v2509, %v2519
  %s2522 = scalar_lea.vmem %s3, 16
  %v2523 = vld [vmem:[%s2522] sm:$0xff]
  %v2524 = vld [vmem:[%s2522 + $0x8] sm:$0xff]
  %v2525 = vadd.f32 %v2520, %v2523
  %v2526 = vadd.f32 %v2521, %v2524
  %v2527 = vmax.f32 %v2525, 0.0
  %v2528 = vmax.f32 %v2526, 0.0
  %s2529 = scalar_lea.vmem %s4, 16
  %v2530 = vld [vmem:[%s2529] sm:$0xff]
  %v2531 = vld [vmem:[%s2529 + $0x8] sm:$0xff]
  %v2532 = vadd.f32 %v2520, %v2530
  %v2533 = vadd.f32 %v2521, %v2531
  %v2534 = vmax.f32 %v2532, 0.0
  %v2535 = vmax.f32 %v2533, 0.0
  %v2536 = vsub.f32 %v2527, %v2534
  %v2537 = vsub.f32 %v2528, %v2535
  %v2538 = vmul.f32 %v128, %v2536
  %v2539 = vmul.f32 %v128, %v2537
  %v2540 = vadd.f32 %v2534, %v2538
  %v2541 = vadd.f32 %v2535, %v2539
  %v2543 = vsel %vm133, %v2540, 0
  %v2546 = vsel %vm133, %v2541, 0
  %2548 = vmatprep.subr.mxu0 0.0
  %2549 = vmatpush1.msra.mxu0 %v31
  %2550 = vmatprep.subr.mxu0 0.0
  %2551 = vmatpush1.msra.mxu0 %v32
  %2552 = vmatprep.subr.mxu0 0.0
  %2553 = vmatpush1.msra.mxu0 %v33
  %2554 = vmatprep.subr.mxu0 0.0
  %2555 = vmatpush1.msra.mxu0 %v34
  %2556 = vmatprep.subr.mxu0 0.0
  %2557 = vmatpush1.msra.mxu0 0.0
  %2558 = vmatprep.subr.mxu0 0.0
  %2559 = vmatpush1.msra.mxu0 0.0
  %2560 = vmatprep.subr.mxu0 0.0
  %2561 = vmatpush1.msra.mxu0 0.0
  %2562 = vmatprep.subr.mxu0 0.0
  %2563 = vmatpush1.msra.mxu0 0.0
  %2564 = vmatprep.subr.mxu0 0.0
  %2565 = vmatpush1.msra.mxu0 0.0
  %2566 = vmatprep.subr.mxu0 0.0
  %2567 = vmatpush1.msra.mxu0 0.0
  %2568 = vmatprep.subr.mxu0 0.0
  %2569 = vmatpush1.msra.mxu0 0.0
  %2570 = vmatprep.subr.mxu0 0.0
  %2571 = vmatpush1.msra.mxu0 0.0
  %2572 = vmatprep.subr.mxu0 0.0
  %2573 = vmatpush1.msra.mxu0 0.0
  %2574 = vmatprep.subr.mxu0 0.0
  %2575 = vmatpush1.msra.mxu0 0.0
  %2576 = vmatprep.subr.mxu0 0.0
  %2577 = vmatpush1.msra.mxu0 0.0
  %2578 = vmatprep.subr.mxu0 0.0
  %2579 = vmatpush1.msra.mxu0 0.0
  %2580 = vmatprep.subr.mxu0 0.0
  %2581 = vmatpush1.msra.mxu0 0.0
  %2582 = vmatprep.subr.mxu0 0.0
  %2583 = vmatpush1.msra.mxu0 0.0
  %2584 = vmatprep.subr.mxu0 0.0
  %2585 = vmatpush1.msra.mxu0 0.0
  %2586 = vmatprep.subr.mxu0 0.0
  %2587 = vmatpush1.msra.mxu0 0.0
  %2588 = vmatprep.subr.mxu0 0.0
  %2589 = vmatpush1.msra.mxu0 0.0
  %2590 = vmatprep.subr.mxu0 0.0
  %2591 = vmatpush1.msra.mxu0 0.0
  %2592 = vmatprep.subr.mxu0 0.0
  %2593 = vmatpush1.msra.mxu0 0.0
  %2594 = vmatprep.subr.mxu0 0.0
  %2595 = vmatpush1.msra.mxu0 0.0
  %2596 = vmatprep.subr.mxu0 0.0
  %2597 = vmatpush1.msra.mxu0 0.0
  %2598 = vmatprep.subr.mxu0 0.0
  %2599 = vmatpush1.msra.mxu0 0.0
  %2600 = vmatprep.subr.mxu0 0.0
  %2601 = vmatpush1.msra.mxu0 0.0
  %2602 = vmatprep.subr.mxu0 0.0
  %2603 = vmatpush1.msra.mxu0 0.0
  %2604 = vmatprep.subr.mxu0 0.0
  %2605 = vmatpush1.msra.mxu0 0.0
  %2606 = vmatprep.subr.mxu0 0.0
  %2607 = vmatpush1.msra.mxu0 0.0
  %2608 = vmatprep.subr.mxu0 0.0
  %2609 = vmatpush1.msra.mxu0 0.0
  %2610 = vmatprep.subr.mxu0 0.0
  %2611 = vmatpush1.msra.mxu0 0.0
  %2612 = vmatprep.mubr.f32.mxu0 0.0
  %2613 = vmatmul.mubr.f32.gmra.mrb[0].mxu0 %v2543
  %v2614 = vpop.f32.mrb[0].mxu0
  %v2615 = vadd.f32 %v40, %v2614
  %v2616 = vpop.f32.mrb[0].mxu0
  %2617 = vmatprep.mubr.f32.mxu0 0.0
  %2618 = vmatmul.mubr.f32.gmra.mrb[0].mxu0 %v2546
  %v2619 = vpop.f32.mrb[0].mxu0
  %v2620 = vadd.f32 %v40, %v2619
  %v2621 = vpop.f32.mrb[0].mxu0
  %2622 = vdwg.mxu0
  %v2623 = vmul.f32 %v2472, 1.0459461
  %v2624 = vmul.f32 %v2473, 1.0459461
  %v2625 = vmul.f32 %v2615, 0.30659962
  %v2626 = vmul.f32 %v2620, 0.30659962
  %v2627 = vsub.f32 %v2623, %v2625
  %v2628 = vsub.f32 %v2624, %v2626
  %v2629 = vmax.f32 %v2627, -1.0
  %v2630 = vmax.f32 %v2628, -1.0
  %v2631 = vmin.f32 %v2629, 1.0
  %v2632 = vmin.f32 %v2630, 1.0
  %v2633 = vmul.f32 %v2631, 0.71509993
  %v2634 = vmul.f32 %v2632, 0.71509993
  %v2635 = vmul.f32 %v2472, 0.2846946
  %v2636 = vmul.f32 %v2473, 0.2846946
  %v2637 = vadd.f32 %v2633, %v2635
  %v2638 = vadd.f32 %v2634, %v2636
  %s2639 = scalar_lea.vmem %s2, 16
  %v2640 = vld [vmem:[%s2639] sm:$0xff]
  %v2641 = vld [vmem:[%s2639 + $0x8] sm:$0xff]
  %v2642 = vmul.f32 %v2640, 0.067633204
  %v2643 = vmul.f32 %v2641, 0.067633204
  %v2644 = vadd.f32 %v2637, %v2642
  %v2645 = vadd.f32 %v2638, %v2643
  %2647 = vset.pattern.permute.xlu0 0
  %2648 = vperm.xlu0 %2647, %v2644
  %v2649 = vpop.permute.xlu0 %2648
  %2652 = vset.pattern.permute.xlu0 0
  %2653 = vperm.xlu0 %2652, %v2645
  %v2654 = vpop.permute.xlu0 %2653
  %v2656 = vmul.f32 %v2649, %v46
  %v2657 = vmul.f32 %v2654, %v46
  %2658 = vset.pattern.permute.xlu0 1
  %2659 = vperm.xlu0 %2658, %v2644
  %v2660 = vpop.permute.xlu0 %2659
  %2662 = vset.pattern.permute.xlu0 1
  %2663 = vperm.xlu0 %2662, %v2645
  %v2664 = vpop.permute.xlu0 %2663
  %v2666 = vmul.f32 %v2660, %v51
  %v2667 = vmul.f32 %v2664, %v51
  %v2668 = vadd.f32 %v2656, %v2666
  %v2669 = vadd.f32 %v2657, %v2667
  %2670 = vset.pattern.permute.xlu0 2
  %2671 = vperm.xlu0 %2670, %v2644
  %v2672 = vpop.permute.xlu0 %2671
  %2674 = vset.pattern.permute.xlu0 2
  %2675 = vperm.xlu0 %2674, %v2645
  %v2676 = vpop.permute.xlu0 %2675
  %v2678 = vmul.f32 %v2672, %v56
  %v2679 = vmul.f32 %v2676, %v56
  %v2680 = vadd.f32 %v2668, %v2678
  %v2681 = vadd.f32 %v2669, %v2679
  %2682 = vset.pattern.permute.xlu0 3
  %2683 = vperm.xlu0 %2682, %v2644
  %v2684 = vpop.permute.xlu0 %2683
  %2686 = vset.pattern.permute.xlu0 3
  %2687 = vperm.xlu0 %2686, %v2645
  %v2688 = vpop.permute.xlu0 %2687
  %v2690 = vmul.f32 %v2684, %v61
  %v2691 = vmul.f32 %v2688, %v61
  %v2692 = vadd.f32 %v2680, %v2690
  %v2693 = vadd.f32 %v2681, %v2691
  %v2694 = vld [vmem:[%s3] sm:$0xff]
  %v2695 = vld [vmem:[%s3 + $0x8] sm:$0xff]
  %v2696 = vadd.f32 %v2692, %v2694
  %v2697 = vadd.f32 %v2693, %v2695
  %v2698 = vmax.f32 %v2696, 0.0
  %v2699 = vmax.f32 %v2697, 0.0
  %v2700 = vld [vmem:[%s4] sm:$0xff]
  %v2701 = vld [vmem:[%s4 + $0x8] sm:$0xff]
  %v2702 = vadd.f32 %v2692, %v2700
  %v2703 = vadd.f32 %v2693, %v2701
  %v2704 = vmax.f32 %v2702, 0.0
  %v2705 = vmax.f32 %v2703, 0.0
  %v2706 = vsub.f32 %v2698, %v2704
  %v2707 = vsub.f32 %v2699, %v2705
  %v2708 = vmul.f32 %v128, %v2706
  %v2709 = vmul.f32 %v128, %v2707
  %v2710 = vadd.f32 %v2704, %v2708
  %v2711 = vadd.f32 %v2705, %v2709
  %v2713 = vsel %vm133, %v2710, 0
  %v2716 = vsel %vm133, %v2711, 0
  %2718 = vmatprep.subr.mxu0 0.0
  %2719 = vmatpush1.msra.mxu0 %v31
  %2720 = vmatprep.subr.mxu0 0.0
  %2721 = vmatpush1.msra.mxu0 %v32
  %2722 = vmatprep.subr.mxu0 0.0
  %2723 = vmatpush1.msra.mxu0 %v33
  %2724 = vmatprep.subr.mxu0 0.0
  %2725 = vmatpush1.msra.mxu0 %v34
  %2726 = vmatprep.subr.mxu0 0.0
  %2727 = vmatpush1.msra.mxu0 0.0
  %2728 = vmatprep.subr.mxu0 0.0
  %2729 = vmatpush1.msra.mxu0 0.0
  %2730 = vmatprep.subr.mxu0 0.0
  %2731 = vmatpush1.msra.mxu0 0.0
  %2732 = vmatprep.subr.mxu0 0.0
  %2733 = vmatpush1.msra.mxu0 0.0
  %2734 = vmatprep.subr.mxu0 0.0
  %2735 = vmatpush1.msra.mxu0 0.0
  %2736 = vmatprep.subr.mxu0 0.0
  %2737 = vmatpush1.msra.mxu0 0.0
  %2738 = vmatprep.subr.mxu0 0.0
  %2739 = vmatpush1.msra.mxu0 0.0
  %2740 = vmatprep.subr.mxu0 0.0
  %2741 = vmatpush1.msra.mxu0 0.0
  %2742 = vmatprep.subr.mxu0 0.0
  %2743 = vmatpush1.msra.mxu0 0.0
  %2744 = vmatprep.subr.mxu0 0.0
  %2745 = vmatpush1.msra.mxu0 0.0
  %2746 = vmatprep.subr.mxu0 0.0
  %2747 = vmatpush1.msra.mxu0 0.0
  %2748 = vmatprep.subr.mxu0 0.0
  %2749 = vmatpush1.msra.mxu0 0.0
  %2750 = vmatprep.subr.mxu0 0.0
  %2751 = vmatpush1.msra.mxu0 0.0
  %2752 = vmatprep.subr.mxu0 0.0
  %2753 = vmatpush1.msra.mxu0 0.0
  %2754 = vmatprep.subr.mxu0 0.0
  %2755 = vmatpush1.msra.mxu0 0.0
  %2756 = vmatprep.subr.mxu0 0.0
  %2757 = vmatpush1.msra.mxu0 0.0
  %2758 = vmatprep.subr.mxu0 0.0
  %2759 = vmatpush1.msra.mxu0 0.0
  %2760 = vmatprep.subr.mxu0 0.0
  %2761 = vmatpush1.msra.mxu0 0.0
  %2762 = vmatprep.subr.mxu0 0.0
  %2763 = vmatpush1.msra.mxu0 0.0
  %2764 = vmatprep.subr.mxu0 0.0
  %2765 = vmatpush1.msra.mxu0 0.0
  %2766 = vmatprep.subr.mxu0 0.0
  %2767 = vmatpush1.msra.mxu0 0.0
  %2768 = vmatprep.subr.mxu0 0.0
  %2769 = vmatpush1.msra.mxu0 0.0
  %2770 = vmatprep.subr.mxu0 0.0
  %2771 = vmatpush1.msra.mxu0 0.0
  %2772 = vmatprep.subr.mxu0 0.0
  %2773 = vmatpush1.msra.mxu0 0.0
  %2774 = vmatprep.subr.mxu0 0.0
  %2775 = vmatpush1.msra.mxu0 0.0
  %2776 = vmatprep.subr.mxu0 0.0
  %2777 = vmatpush1.msra.mxu0 0.0
  %2778 = vmatprep.subr.mxu0 0.0
  %2779 = vmatpush1.msra.mxu0 0.0
  %2780 = vmatprep.subr.mxu0 0.0
  %2781 = vmatpush1.msra.mxu0 0.0
  %2782 = vmatprep.mubr.f32.mxu0 0.0
  %2783 = vmatmul.mubr.f32.gmra.mrb[0].mxu0 %v2713
  %v2784 = vpop.f32.mrb[0].mxu0
  %v2785 = vadd.f32 %v40, %v2784
  %v2786 = vpop.f32.mrb[0].mxu0
  %2787 = vmatprep.mubr.f32.mxu0 0.0
  %2788 = vmatmul.mubr.f32.gmra.mrb[0].mxu0 %v2716
  %v2789 = vpop.f32.mrb[0].mxu0
  %v2790 = vadd.f32 %v40, %v2789
  %v2791 = vpop.f32.mrb[0].mxu0
  %2792 = vdwg.mxu0
  %v2793 = vmul.f32 %v2644, 1.0128752
  %v2794 = vmul.f32 %v2645, 1.0128752
  %v2795 = vmul.f32 %v2785, 0.16098468
  %v2796 = vmul.f32 %v2790, 0.16098468
  %v2797 = vsub.f32 %v2793, %v2795
  %v2798 = vsub.f32 %v2794, %v2796
  %v2799 = vmax.f32 %v2797, -1.0
  %v2800 = vmax.f32 %v2798, -1.0
  %v2801 = vmin.f32 %v2799, 1.0
  %v2802 = vmin.f32 %v2800, 1.0
  %v2803 = vmul.f32 %v2644, 0.0
  %v2804 = vmul.f32 %v2645, 0.0
  %v2805 = vadd.f32 %v2801, %v2803
  %v2806 = vadd.f32 %v2802, %v2804
  %vm2807 = vcmask 31744
  %2808 = vst.msk [vmem:[%s8] sm:$0xff] %vm2807, %v2805
  %2809 = vst.msk [vmem:[%s8 + $0x8] sm:$0xff] %vm2807, %v2806
  // Predicated region
  $region34: #{_sample.1} parent=0 // pred_check
    _
  $region35: #{_sample.1} parent=0 // pred_check_branch
    %2811 = sbr.rel (0) target = $region37
  $region36: #{_sample.1} parent=0 // pred_region
    _
  $region37: #{_sample.1} parent=0 // pred_fallthru
    _
  // Predicated region
  $region38: #{_sample.1} parent=0 // pred_check
    _
  $region39: #{_sample.1} parent=0 // pred_check_branch
    %2813 = sbr.rel (0) target = $region41
  $region40: #{_sample.1} parent=0 // pred_region
    _
  $region41: #{_sample.1} parent=0 // pred_fallthru
    _

</llo_original>
